<compile_context>
chip_gen: v5e
topology: v5e:2x2
jax: 0.10.0
libtpu: 0.0.40
codegen_flags: <defaults>
</compile_context>

<pallas_src>
import math

import numpy as np

import jax
import jax.numpy as jnp
from jax.experimental import pallas as pl
from jax.experimental.pallas import tpu as pltpu

EPS = 1e-5  # PyTorch BatchNorm2d default eps


# --------------------------- in-kernel helpers -------------------------------

def _bn_lanes(x, amean, gamma_t, beta_t):
    """Training-mode BatchNorm2d in the lane-packed (rows, W*C) layout.

    One pass: column sums / sums-of-squares over rows (XLU reduce), then one
    small matmul against `amean` (amean[(w,c),(w',c')] = [c==c'] / count) folds
    the W lane-groups and broadcasts the per-channel mean / E[x^2] back to
    every (w, c) lane slot. Biased variance, matching torch train-mode BN.
    """
    s1 = jnp.sum(x, axis=0, keepdims=True)
    s2 = jnp.sum(x * x, axis=0, keepdims=True)
    mean = jnp.dot(s1, amean, preferred_element_type=jnp.float32)
    ex2 = jnp.dot(s2, amean, preferred_element_type=jnp.float32)
    var = jnp.maximum(ex2 - mean * mean, 0.0)
    inv = jax.lax.rsqrt(var + EPS)
    return (x - mean) * (inv * gamma_t) + beta_t


# ------------------------------ Pallas kernels --------------------------------

def _upsample_kernel(x_ref, amean_ref, g_ref, b_ref, wt_ref, bt_ref, e_ref, o_ref):
    # x: (B*H0, W0*Cin).  BN (batch stats) then ConvTranspose2d(k=2,s=2) as two
    # block-diagonal matmuls (one per output-row parity di); the pixel shuffle
    # is folded into the row-interleave matrices E_di, so the kernel writes the
    # (B*2H0, 2W0*Cout) lane-packed layout the block kernels consume directly.
    xn = _bn_lanes(x_ref[...], amean_ref[...], g_ref[...], b_ref[...])
    y0 = jnp.dot(xn, wt_ref[0], preferred_element_type=jnp.float32) + bt_ref[0]
    y1 = jnp.dot(xn, wt_ref[1], preferred_element_type=jnp.float32) + bt_ref[1]
    out = (jnp.dot(e_ref[0], y0, preferred_element_type=jnp.float32)
           + jnp.dot(e_ref[1], y1, preferred_element_type=jnp.float32))
    o_ref[...] = out.astype(o_ref.dtype)


def _block_kernel(x_ref, amean_ref, rs_ref,
                  ng_ref, nb_ref,
                  u1_ref, db1_ref, bn1g_ref, bn1b_ref,
                  wf_ref, bf_ref, wg_ref, bg_ref,
                  bn2g_ref, bn2b_ref,
                  u2_ref, db2_ref, ls_ref,
                  o_ref):
    # Whole MetaNeXtBlock fused; all tensors are (rows, W*C) lane-packed.
    x = x_ref[...]                                            # shortcut
    amean = amean_ref[...]
    xn = _bn_lanes(x, amean, ng_ref[...], nb_ref[...])        # block norm (BN)

    # --- StarMlp.dwconv: depthwise 7x7 + bias, as sum_di S_di @ (xn @ U_di) ---
    d1 = db1_ref[...] + jnp.zeros_like(x)
    for di in range(7):
        d1 = d1 + jnp.dot(
            rs_ref[di],
            jnp.dot(xn, u1_ref[di], preferred_element_type=jnp.float32),
            preferred_element_type=jnp.float32)
    d1 = _bn_lanes(d1, amean, bn1g_ref[...], bn1b_ref[...])   # dwconv BN

    # --- f1/f2 merged 1x1 convs (block-diag, K=W*C), relu6 gate, g 1x1 + BN ---
    h12 = jnp.dot(d1, wf_ref[...], preferred_element_type=jnp.float32) + bf_ref[...]
    half = wf_ref.shape[1] // 2
    h = jnp.clip(h12[:, :half], 0.0, 6.0) * h12[:, half:]
    gch = jnp.dot(h, wg_ref[...], preferred_element_type=jnp.float32) + bg_ref[...]
    gch = _bn_lanes(gch, amean, bn2g_ref[...], bn2b_ref[...])

    # --- StarMlp.dwconv2: depthwise 7x7 + bias (no BN) ---
    d2 = db2_ref[...] + jnp.zeros_like(x)
    for di in range(7):
        d2 = d2 + jnp.dot(
            rs_ref[di],
            jnp.dot(gch, u2_ref[di], preferred_element_type=jnp.float32),
            preferred_element_type=jnp.float32)

    # --- StarMlp internal skip + layer scale + outer residual ---
    o_ref[...] = (x + ls_ref[...] * (xn + d2)).astype(o_ref.dtype)


# ------------------------------ forward wrapper --------------------------------

def metanext_up_stage0_forward(x_nchw, params):
    B, Cin, H0, W0 = x_nchw.shape
    H, W = 2 * H0, 2 * W0
    up = params['upsample']
    C = up['wt_blk'].shape[2] // (2 * W0)   # out_chs (static under jit)

    # NCHW -> NHWC -> lane-packed (B*H0, W0*Cin); only boundary glue in XLA.
    x = jnp.transpose(x_nchw, (0, 2, 3, 1)).reshape(B * H0, W0 * Cin)

    cparams = pltpu.CompilerParams(vmem_limit_bytes=32 * 1024 * 1024)
    vmem = pl.BlockSpec(memory_space=pltpu.MemorySpace.VMEM)

    # ---- fused upsample: BN(in_chs) + ConvTranspose2d(2,2) + pixel shuffle ----
    x = pl.pallas_call(
        _upsample_kernel,
        out_shape=jax.ShapeDtypeStruct((B * H, W * C), jnp.float32),
        in_specs=[vmem] * 7,
        out_specs=vmem,
        compiler_params=cparams,
    )(x, up['amean'], up['gamma_t'], up['beta_t'],
      up['wt_blk'], up['bt_blk'], up['e'])

    # ---- fused MetaNeXt blocks: one pallas_call each ----
    for bp in params['blocks']:
        x = pl.pallas_call(
            _block_kernel,
            out_shape=jax.ShapeDtypeStruct((B * H, W * C), jnp.float32),
            in_specs=[vmem] * 18,
            out_specs=vmem,
            compiler_params=cparams,
        )(x, params['amean_blk'], params['rowshift'],
          bp['norm_gamma_t'], bp['norm_beta_t'],
          bp['u1'], bp['db1_t'], bp['bn1_gamma_t'], bp['bn1_beta_t'],
          bp['wf'], bp['bf_t'], bp['wg'], bp['bg_t'],
          bp['bn2_gamma_t'], bp['bn2_beta_t'],
          bp['u2'], bp['db2_t'], bp['ls_t'])

    # lane-packed -> NHWC -> NCHW (pure reshape + one boundary transpose).
    return jnp.transpose(x.reshape(B, H, W, C), (0, 3, 1, 2))


# ------------------------- parameter init + packing ---------------------------

def init_params(key, B, H0, W0, in_chs, out_chs, depth):
    """Returns (packed_params_for_kernels, raw_torch_layout_params).

    Packing is done host-side (numpy) once. The packed constants bake in the
    spatial extents / batch boundaries, so they are tied to (B, H0, W0);
    repack for other shapes. Raw weights use the torch layouts
    (ConvTranspose2d (Cin,Cout,2,2); depthwise Conv2d (C,1,7,7) squeezed;
    1x1 Conv2d (Cout,Cin)) so checkpoint loading would follow the same path.
    """
    H, W = 2 * H0, 2 * W0
    C, Hd = out_chs, 2 * out_chs             # StarMlp is built with mlp_ratio=2
    keys = iter(jax.random.split(key, 2 + 10 * depth))

    def rnd(shape, scale):
        return np.asarray(jax.random.normal(next(keys), shape, jnp.float32)) * scale

    def tile_c(v, n):      # per-channel vector -> (1, n*len(v)) lane layout
        return np.tile(np.asarray(v, np.float32), n).reshape(1, -1)

    def blockdiag(wm, n):  # (cin, cout) -> (n*cin, n*cout) block-diagonal
        return np.kron(np.eye(n, dtype=np.float32), np.asarray(wm, np.float32))

    def dw_col_mats(w7):   # (C,7,7) -> (7, W*C, W*C): taps + horizontal halo
        U = np.zeros((7, W * C, W * C), np.float32)
        for di in range(7):
            for w_out in range(W):
                for dj in range(7):
                    w_in = w_out + dj - 3
                    if 0 <= w_in < W:
                        for c in range(C):
                            U[di, w_in * C + c, w_out * C + c] = w7[c, di, dj]
        return U

    # ---- shared packed constants ----
    amean_up = np.kron(np.ones((W0, W0), np.float32),
                       np.eye(in_chs, dtype=np.float32)) / float(B * H0 * W0)
    amean_blk = np.kron(np.ones((W, W), np.float32),
                        np.eye(C, dtype=np.float32)) / float(B * H * W)
    rowshift = np.zeros((7, B * H, B * H), np.float32)   # vertical halo + batch
    for di in range(7):
        for b in range(B):
            for h in range(H):
                hin = h + di - 3
                if 0 <= hin < H:
                    rowshift[di, b * H + h, b * H + hin] = 1.0
    e_mats = np.zeros((2, B * H, B * H0), np.float32)    # pixel-shuffle rows
    for di in range(2):
        for b in range(B):
            for i in range(H0):
                e_mats[di, b * H + 2 * i + di, b * H0 + i] = 1.0

    # ---- upsample: BatchNorm2d(in_chs) + ConvTranspose2d(k=2, s=2) ----
    wt = rnd((in_chs, out_chs, 2, 2), 1.0 / math.sqrt(in_chs * 4))  # torch layout
    bt = rnd((out_chs,), 0.05)
    up_g = np.ones((in_chs,), np.float32)
    up_b = np.zeros((in_chs,), np.float32)
    wt_blk = np.zeros((2, W0 * in_chs, W0 * 2 * out_chs), np.float32)
    bt_blk = np.zeros((2, 1, W0 * 2 * out_chs), np.float32)
    for di in range(2):
        blk = np.transpose(wt[:, :, di, :], (0, 2, 1)).reshape(in_chs, 2 * out_chs)
        wt_blk[di] = blockdiag(blk, W0)
        bt_blk[di] = tile_c(np.tile(bt, 2), W0)

    packed_up = dict(
        amean=jnp.asarray(amean_up),
        gamma_t=jnp.asarray(tile_c(up_g, W0)),
        beta_t=jnp.asarray(tile_c(up_b, W0)),
        wt_blk=jnp.asarray(wt_blk),
        bt_blk=jnp.asarray(bt_blk),
        e=jnp.asarray(e_mats),
    )
    raw_up = dict(bn_gamma=jnp.asarray(up_g), bn_beta=jnp.asarray(up_b),
                  wt=jnp.asarray(wt), bt=jnp.asarray(bt))

    packed_blocks, raw_blocks = [], []
    for _ in range(depth):
        dw1_w = rnd((C, 7, 7), 1.0 / 7.0); dw1_b = rnd((C,), 0.05)
        f1_w = rnd((Hd, C), 1.0 / math.sqrt(C)); f1_b = rnd((Hd,), 0.05)
        f2_w = rnd((Hd, C), 1.0 / math.sqrt(C)); f2_b = rnd((Hd,), 0.05)
        g_w = rnd((C, Hd), 1.0 / math.sqrt(Hd)); g_b = rnd((C,), 0.05)
        dw2_w = rnd((C, 7, 7), 1.0 / 7.0); dw2_b = rnd((C,), 0.05)
        ones_c = np.ones((C,), np.float32)
        zeros_c = np.zeros((C,), np.float32)
        ls = np.ones((C,), np.float32)            # ls_init_value = 1.0

        packed_blocks.append(dict(
            norm_gamma_t=jnp.asarray(tile_c(ones_c, W)),
            norm_beta_t=jnp.asarray(tile_c(zeros_c, W)),
            u1=jnp.asarray(dw_col_mats(dw1_w)),
            db1_t=jnp.asarray(tile_c(dw1_b, W)),
            bn1_gamma_t=jnp.asarray(tile_c(ones_c, W)),
            bn1_beta_t=jnp.asarray(tile_c(zeros_c, W)),
            wf=jnp.asarray(np.concatenate(
                [blockdiag(f1_w.T, W), blockdiag(f2_w.T, W)], axis=1)),
            bf_t=jnp.asarray(np.concatenate(
                [tile_c(f1_b, W), tile_c(f2_b, W)], axis=1)),
            wg=jnp.asarray(blockdiag(g_w.T, W)),
            bg_t=jnp.asarray(tile_c(g_b, W)),
            bn2_gamma_t=jnp.asarray(tile_c(ones_c, W)),
            bn2_beta_t=jnp.asarray(tile_c(zeros_c, W)),
            u2=jnp.asarray(dw_col_mats(dw2_w)),
            db2_t=jnp.asarray(tile_c(dw2_b, W)),
            ls_t=jnp.asarray(tile_c(ls, W)),
        ))
        raw_blocks.append(dict(
            norm_gamma=jnp.asarray(ones_c), norm_beta=jnp.asarray(zeros_c),
            dw1_w=jnp.asarray(dw1_w), dw1_b=jnp.asarray(dw1_b),
            bn1_gamma=jnp.asarray(ones_c), bn1_beta=jnp.asarray(zeros_c),
            f1_w=jnp.asarray(f1_w), f1_b=jnp.asarray(f1_b),
            f2_w=jnp.asarray(f2_w), f2_b=jnp.asarray(f2_b),
            g_w=jnp.asarray(g_w), g_b=jnp.asarray(g_b),
            bn2_gamma=jnp.asarray(ones_c), bn2_beta=jnp.asarray(zeros_c),
            dw2_w=jnp.asarray(dw2_w), dw2_b=jnp.asarray(dw2_b),
            ls=jnp.asarray(ls),
        ))

    packed = dict(upsample=packed_up, blocks=packed_blocks,
                  amean_blk=jnp.asarray(amean_blk),
                  rowshift=jnp.asarray(rowshift))
    raw = dict(upsample=raw_up, blocks=raw_blocks)
    return packed, raw


# --------------------------- pure-JAX reference --------------------------------

def _ref_bn(x, gamma, beta):
    mean = jnp.mean(x, axis=(0, 1, 2), keepdims=True)
    var = jnp.mean(jnp.square(x - mean), axis=(0, 1, 2), keepdims=True)
    return (x - mean) * jax.lax.rsqrt(var + EPS) * gamma + beta


def _ref_dwconv7(x, w, b):
    B, H, W, C = x.shape
    xp = jnp.pad(x, ((0, 0), (3, 3), (3, 3), (0, 0)))
    out = jnp.zeros_like(x) + b
    for di in range(7):
        for dj in range(7):
            out = out + xp[:, di:di + H, dj:dj + W, :] * w[:, di, dj]
    return out


def ref_forward(x_nchw, raw):
    x = jnp.transpose(x_nchw, (0, 2, 3, 1))
    B, H0, W0, _ = x.shape
    ru = raw['upsample']
    Cout = ru['wt'].shape[1]
    xn = _ref_bn(x, ru['bn_gamma'], ru['bn_beta'])
    y = jnp.einsum('bijc,cokl->bikjlo', xn, ru['wt'], precision='highest') + ru['bt']
    x = y.reshape(B, 2 * H0, 2 * W0, Cout)
    for rb in raw['blocks']:
        shortcut = x
        xn = _ref_bn(x, rb['norm_gamma'], rb['norm_beta'])
        d1 = _ref_dwconv7(xn, rb['dw1_w'], rb['dw1_b'])
        d1 = _ref_bn(d1, rb['bn1_gamma'], rb['bn1_beta'])
        h1 = jnp.einsum('bhwc,mc->bhwm', d1, rb['f1_w'], precision='highest') + rb['f1_b']
        h2 = jnp.einsum('bhwc,mc->bhwm', d1, rb['f2_w'], precision='highest') + rb['f2_b']
        h = jnp.clip(h1, 0.0, 6.0) * h2
        g = jnp.einsum('bhwm,cm->bhwc', h, rb['g_w'], precision='highest') + rb['g_b']
        g = _ref_bn(g, rb['bn2_gamma'], rb['bn2_beta'])
        d2 = _ref_dwconv7(g, rb['dw2_w'], rb['dw2_b'])
        x = shortcut + rb['ls'] * (xn + d2)
    return jnp.transpose(x, (0, 3, 1, 2))


# ----------------------------------- main --------------------------------------

if __name__ == "__main__":
    B, in_chs, H0, W0 = 2, 8, 8, 8
    out_chs, depth = 8, 2

    key = jax.random.PRNGKey(0)
    kx, kp = jax.random.split(key)
    x = jax.random.normal(kx, (B, in_chs, H0, W0), jnp.float32)   # NCHW input
    params, raw = init_params(kp, B, H0, W0, in_chs, out_chs, depth)

    fwd = jax.jit(metanext_up_stage0_forward)
    out = jax.block_until_ready(fwd(x, params))

    assert out.shape == (B, out_chs, 2 * H0, 2 * W0), out.shape
    assert bool(jnp.all(jnp.isfinite(out)))

    # Cross-check the fused/repacked kernels against a straightforward JAX ref.
    ref = ref_forward(x, raw)
    err = float(jnp.max(jnp.abs(out - ref)))
    assert err < 1e-1, f"mismatch vs pure-JAX reference: max abs err {err}"

    print("KERNEL_OK")
</pallas_src>

<mosaic_0001>
module attributes {stable_mosaic.version = 11 : i64} {
  func.func @_upsample_kernel(%arg0: memref<16x64xf32, #tpu.memory_space<vmem>>, %arg1: memref<64x64xf32, #tpu.memory_space<vmem>>, %arg2: memref<1x64xf32, #tpu.memory_space<vmem>>, %arg3: memref<1x64xf32, #tpu.memory_space<vmem>>, %arg4: memref<2x64x128xf32, #tpu.memory_space<vmem>>, %arg5: memref<2x1x128xf32, #tpu.memory_space<vmem>>, %arg6: memref<2x32x16xf32, #tpu.memory_space<vmem>>, %arg7: memref<32x128xf32, #tpu.memory_space<vmem>>) attributes {dimension_semantics = [], scalar_prefetch = 0 : i64, scratch_operands = 0 : i64, tpu.core_type = #tpu.core_type<tc>} {
    %c0 = arith.constant 0 : index
    %c0_0 = arith.constant 0 : index
    %0 = vector.load %arg0[%c0, %c0_0] : memref<16x64xf32, #tpu.memory_space<vmem>>, vector<16x64xf32>
    %c0_1 = arith.constant 0 : index
    %c0_2 = arith.constant 0 : index
    %1 = vector.load %arg1[%c0_1, %c0_2] : memref<64x64xf32, #tpu.memory_space<vmem>>, vector<64x64xf32>
    %c0_3 = arith.constant 0 : index
    %c0_4 = arith.constant 0 : index
    %2 = vector.load %arg2[%c0_3, %c0_4] : memref<1x64xf32, #tpu.memory_space<vmem>>, vector<1x64xf32>
    %c0_5 = arith.constant 0 : index
    %c0_6 = arith.constant 0 : index
    %3 = vector.load %arg3[%c0_5, %c0_6] : memref<1x64xf32, #tpu.memory_space<vmem>>, vector<1x64xf32>
    %cst = arith.constant dense<0.000000e+00> : vector<64xf32>
    %4 = vector.multi_reduction <add>, %0, %cst [0] : vector<16x64xf32> to vector<64xf32>
    %5 = vector.shape_cast %4 : vector<64xf32> to vector<1x64xf32>
    %6 = arith.mulf %0, %0 : vector<16x64xf32>
    %cst_7 = arith.constant dense<0.000000e+00> : vector<64xf32>
    %7 = vector.multi_reduction <add>, %6, %cst_7 [0] : vector<16x64xf32> to vector<64xf32>
    %8 = vector.shape_cast %7 : vector<64xf32> to vector<1x64xf32>
    %cst_8 = arith.constant dense<0.000000e+00> : vector<1x64xf32>
    %9 = tpu.matmul %5, %1, %cst_8 {dimension_numbers = #tpu.dot_dimension_numbers<[1], [0], [0], [1], [0, 0, 1, 1], [], []>} : vector<1x64xf32>, vector<64x64xf32>, vector<1x64xf32> -> vector<1x64xf32>
    %cst_9 = arith.constant dense<0.000000e+00> : vector<1x64xf32>
    %10 = tpu.matmul %8, %1, %cst_9 {dimension_numbers = #tpu.dot_dimension_numbers<[1], [0], [0], [1], [0, 0, 1, 1], [], []>} : vector<1x64xf32>, vector<64x64xf32>, vector<1x64xf32> -> vector<1x64xf32>
    %11 = arith.mulf %9, %9 : vector<1x64xf32>
    %12 = arith.subf %10, %11 : vector<1x64xf32>
    %cst_10 = arith.constant 0.000000e+00 : f32
    %13 = vector.broadcast %cst_10 : f32 to vector<1x64xf32>
    %14 = arith.maximumf %12, %13 : vector<1x64xf32>
    %cst_11 = arith.constant 9.99999974E-6 : f32
    %15 = vector.broadcast %cst_11 : f32 to vector<1x64xf32>
    %16 = arith.addf %14, %15 : vector<1x64xf32>
    %17 = math.rsqrt %16 : vector<1x64xf32>
    %18 = vector.broadcast %9 : vector<1x64xf32> to vector<16x64xf32>
    %19 = arith.subf %0, %18 : vector<16x64xf32>
    %20 = arith.mulf %17, %2 : vector<1x64xf32>
    %21 = vector.broadcast %20 : vector<1x64xf32> to vector<16x64xf32>
    %22 = arith.mulf %19, %21 : vector<16x64xf32>
    %23 = vector.broadcast %3 : vector<1x64xf32> to vector<16x64xf32>
    %24 = arith.addf %22, %23 : vector<16x64xf32>
    %c0_12 = arith.constant 0 : index
    %c0_13 = arith.constant 0 : index
    %c0_14 = arith.constant 0 : index
    %25 = vector.load %arg4[%c0_12, %c0_13, %c0_14] : memref<2x64x128xf32, #tpu.memory_space<vmem>>, vector<1x64x128xf32>
    %26 = vector.shape_cast %25 : vector<1x64x128xf32> to vector<64x128xf32>
    %cst_15 = arith.constant dense<0.000000e+00> : vector<16x128xf32>
    %27 = tpu.matmul %24, %26, %cst_15 {dimension_numbers = #tpu.dot_dimension_numbers<[1], [0], [0], [1], [0, 0, 1, 1], [], []>} : vector<16x64xf32>, vector<64x128xf32>, vector<16x128xf32> -> vector<16x128xf32>
    %c0_16 = arith.constant 0 : index
    %c0_17 = arith.constant 0 : index
    %c0_18 = arith.constant 0 : index
    %28 = vector.load %arg5[%c0_16, %c0_17, %c0_18] : memref<2x1x128xf32, #tpu.memory_space<vmem>>, vector<1x1x128xf32>
    %29 = vector.shape_cast %28 : vector<1x1x128xf32> to vector<1x128xf32>
    %30 = vector.broadcast %29 : vector<1x128xf32> to vector<16x128xf32>
    %31 = arith.addf %27, %30 : vector<16x128xf32>
    %c1 = arith.constant 1 : index
    %c0_19 = arith.constant 0 : index
    %c0_20 = arith.constant 0 : index
    %32 = vector.load %arg4[%c1, %c0_19, %c0_20] : memref<2x64x128xf32, #tpu.memory_space<vmem>>, vector<1x64x128xf32>
    %33 = vector.shape_cast %32 : vector<1x64x128xf32> to vector<64x128xf32>
    %cst_21 = arith.constant dense<0.000000e+00> : vector<16x128xf32>
    %34 = tpu.matmul %24, %33, %cst_21 {dimension_numbers = #tpu.dot_dimension_numbers<[1], [0], [0], [1], [0, 0, 1, 1], [], []>} : vector<16x64xf32>, vector<64x128xf32>, vector<16x128xf32> -> vector<16x128xf32>
    %c1_22 = arith.constant 1 : index
    %c0_23 = arith.constant 0 : index
    %c0_24 = arith.constant 0 : index
    %35 = vector.load %arg5[%c1_22, %c0_23, %c0_24] : memref<2x1x128xf32, #tpu.memory_space<vmem>>, vector<1x1x128xf32>
    %36 = vector.shape_cast %35 : vector<1x1x128xf32> to vector<1x128xf32>
    %37 = vector.broadcast %36 : vector<1x128xf32> to vector<16x128xf32>
    %38 = arith.addf %34, %37 : vector<16x128xf32>
    %c0_25 = arith.constant 0 : index
    %c0_26 = arith.constant 0 : index
    %c0_27 = arith.constant 0 : index
    %39 = vector.load %arg6[%c0_25, %c0_26, %c0_27] : memref<2x32x16xf32, #tpu.memory_space<vmem>>, vector<1x32x16xf32>
    %40 = vector.shape_cast %39 : vector<1x32x16xf32> to vector<32x16xf32>
    %cst_28 = arith.constant dense<0.000000e+00> : vector<32x128xf32>
    %41 = tpu.matmul %40, %31, %cst_28 {dimension_numbers = #tpu.dot_dimension_numbers<[1], [0], [0], [1], [0, 0, 1, 1], [], []>} : vector<32x16xf32>, vector<16x128xf32>, vector<32x128xf32> -> vector<32x128xf32>
    %c1_29 = arith.constant 1 : index
    %c0_30 = arith.constant 0 : index
    %c0_31 = arith.constant 0 : index
    %42 = vector.load %arg6[%c1_29, %c0_30, %c0_31] : memref<2x32x16xf32, #tpu.memory_space<vmem>>, vector<1x32x16xf32>
    %43 = vector.shape_cast %42 : vector<1x32x16xf32> to vector<32x16xf32>
    %cst_32 = arith.constant dense<0.000000e+00> : vector<32x128xf32>
    %44 = tpu.matmul %43, %38, %cst_32 {dimension_numbers = #tpu.dot_dimension_numbers<[1], [0], [0], [1], [0, 0, 1, 1], [], []>} : vector<32x16xf32>, vector<16x128xf32>, vector<32x128xf32> -> vector<32x128xf32>
    %45 = arith.addf %41, %44 : vector<32x128xf32>
    %c0_33 = arith.constant 0 : index
    %c0_34 = arith.constant 0 : index
    %46 = vector.load %arg7[%c0_33, %c0_34] : memref<32x128xf32, #tpu.memory_space<vmem>>, vector<32x128xf32>
    tpu.vector_store %arg7[%c0_33, %c0_34], %45 {strides = array<i32>} : memref<32x128xf32, #tpu.memory_space<vmem>>, vector<32x128xf32>,
    return
  }
}

module attributes {stable_mosaic.version = 11 : i64} {
  func.func @_block_kernel(%arg0: memref<32x128xf32, #tpu.memory_space<vmem>>, %arg1: memref<128x128xf32, #tpu.memory_space<vmem>>, %arg2: memref<7x32x32xf32, #tpu.memory_space<vmem>>, %arg3: memref<1x128xf32, #tpu.memory_space<vmem>>, %arg4: memref<1x128xf32, #tpu.memory_space<vmem>>, %arg5: memref<7x128x128xf32, #tpu.memory_space<vmem>>, %arg6: memref<1x128xf32, #tpu.memory_space<vmem>>, %arg7: memref<1x128xf32, #tpu.memory_space<vmem>>, %arg8: memref<1x128xf32, #tpu.memory_space<vmem>>, %arg9: memref<128x512xf32, #tpu.memory_space<vmem>>, %arg10: memref<1x512xf32, #tpu.memory_space<vmem>>, %arg11: memref<256x128xf32, #tpu.memory_space<vmem>>, %arg12: memref<1x128xf32, #tpu.memory_space<vmem>>, %arg13: memref<1x128xf32, #tpu.memory_space<vmem>>, %arg14: memref<1x128xf32, #tpu.memory_space<vmem>>, %arg15: memref<7x128x128xf32, #tpu.memory_space<vmem>>, %arg16: memref<1x128xf32, #tpu.memory_space<vmem>>, %arg17: memref<1x128xf32, #tpu.memory_space<vmem>>, %arg18: memref<32x128xf32, #tpu.memory_space<vmem>>) attributes {dimension_semantics = [], scalar_prefetch = 0 : i64, scratch_operands = 0 : i64, tpu.core_type = #tpu.core_type<tc>} {
    %c0 = arith.constant 0 : index
    %c0_0 = arith.constant 0 : index
    %0 = vector.load %arg0[%c0, %c0_0] : memref<32x128xf32, #tpu.memory_space<vmem>>, vector<32x128xf32>
    %c0_1 = arith.constant 0 : index
    %c0_2 = arith.constant 0 : index
    %1 = vector.load %arg1[%c0_1, %c0_2] : memref<128x128xf32, #tpu.memory_space<vmem>>, vector<128x128xf32>
    %c0_3 = arith.constant 0 : index
    %c0_4 = arith.constant 0 : index
    %2 = vector.load %arg3[%c0_3, %c0_4] : memref<1x128xf32, #tpu.memory_space<vmem>>, vector<1x128xf32>
    %c0_5 = arith.constant 0 : index
    %c0_6 = arith.constant 0 : index
    %3 = vector.load %arg4[%c0_5, %c0_6] : memref<1x128xf32, #tpu.memory_space<vmem>>, vector<1x128xf32>
    %cst = arith.constant dense<0.000000e+00> : vector<128xf32>
    %4 = vector.multi_reduction <add>, %0, %cst [0] : vector<32x128xf32> to vector<128xf32>
    %5 = vector.shape_cast %4 : vector<128xf32> to vector<1x128xf32>
    %6 = arith.mulf %0, %0 : vector<32x128xf32>
    %cst_7 = arith.constant dense<0.000000e+00> : vector<128xf32>
    %7 = vector.multi_reduction <add>, %6, %cst_7 [0] : vector<32x128xf32> to vector<128xf32>
    %8 = vector.shape_cast %7 : vector<128xf32> to vector<1x128xf32>
    %cst_8 = arith.constant dense<0.000000e+00> : vector<1x128xf32>
    %9 = tpu.matmul %5, %1, %cst_8 {dimension_numbers = #tpu.dot_dimension_numbers<[1], [0], [0], [1], [0, 0, 1, 1], [], []>} : vector<1x128xf32>, vector<128x128xf32>, vector<1x128xf32> -> vector<1x128xf32>
    %cst_9 = arith.constant dense<0.000000e+00> : vector<1x128xf32>
    %10 = tpu.matmul %8, %1, %cst_9 {dimension_numbers = #tpu.dot_dimension_numbers<[1], [0], [0], [1], [0, 0, 1, 1], [], []>} : vector<1x128xf32>, vector<128x128xf32>, vector<1x128xf32> -> vector<1x128xf32>
    %11 = arith.mulf %9, %9 : vector<1x128xf32>
    %12 = arith.subf %10, %11 : vector<1x128xf32>
    %cst_10 = arith.constant 0.000000e+00 : f32
    %13 = vector.broadcast %cst_10 : f32 to vector<1x128xf32>
    %14 = arith.maximumf %12, %13 : vector<1x128xf32>
    %cst_11 = arith.constant 9.99999974E-6 : f32
    %15 = vector.broadcast %cst_11 : f32 to vector<1x128xf32>
    %16 = arith.addf %14, %15 : vector<1x128xf32>
    %17 = math.rsqrt %16 : vector<1x128xf32>
    %18 = vector.broadcast %9 : vector<1x128xf32> to vector<32x128xf32>
    %19 = arith.subf %0, %18 : vector<32x128xf32>
    %20 = arith.mulf %17, %2 : vector<1x128xf32>
    %21 = vector.broadcast %20 : vector<1x128xf32> to vector<32x128xf32>
    %22 = arith.mulf %19, %21 : vector<32x128xf32>
    %23 = vector.broadcast %3 : vector<1x128xf32> to vector<32x128xf32>
    %24 = arith.addf %22, %23 : vector<32x128xf32>
    %c0_12 = arith.constant 0 : index
    %c0_13 = arith.constant 0 : index
    %25 = vector.load %arg6[%c0_12, %c0_13] : memref<1x128xf32, #tpu.memory_space<vmem>>, vector<1x128xf32>
    %cst_14 = arith.constant 0.000000e+00 : f32
    %26 = vector.broadcast %cst_14 : f32 to vector<32x128xf32>
    %27 = vector.broadcast %25 : vector<1x128xf32> to vector<32x128xf32>
    %28 = arith.addf %27, %26 : vector<32x128xf32>
    %c0_15 = arith.constant 0 : index
    %c0_16 = arith.constant 0 : index
    %c0_17 = arith.constant 0 : index
    %29 = vector.load %arg2[%c0_15, %c0_16, %c0_17] : memref<7x32x32xf32, #tpu.memory_space<vmem>>, vector<1x32x32xf32>
    %30 = vector.shape_cast %29 : vector<1x32x32xf32> to vector<32x32xf32>
    %c0_18 = arith.constant 0 : index
    %c0_19 = arith.constant 0 : index
    %c0_20 = arith.constant 0 : index
    %31 = vector.load %arg5[%c0_18, %c0_19, %c0_20] : memref<7x128x128xf32, #tpu.memory_space<vmem>>, vector<1x128x128xf32>
    %32 = vector.shape_cast %31 : vector<1x128x128xf32> to vector<128x128xf32>
    %cst_21 = arith.constant dense<0.000000e+00> : vector<32x128xf32>
    %33 = tpu.matmul %24, %32, %cst_21 {dimension_numbers = #tpu.dot_dimension_numbers<[1], [0], [0], [1], [0, 0, 1, 1], [], []>} : vector<32x128xf32>, vector<128x128xf32>, vector<32x128xf32> -> vector<32x128xf32>
    %cst_22 = arith.constant dense<0.000000e+00> : vector<32x128xf32>
    %34 = tpu.matmul %30, %33, %cst_22 {dimension_numbers = #tpu.dot_dimension_numbers<[1], [0], [0], [1], [0, 0, 1, 1], [], []>} : vector<32x32xf32>, vector<32x128xf32>, vector<32x128xf32> -> vector<32x128xf32>
    %35 = arith.addf %28, %34 : vector<32x128xf32>
    %c1 = arith.constant 1 : index
    %c0_23 = arith.constant 0 : index
    %c0_24 = arith.constant 0 : index
    %36 = vector.load %arg2[%c1, %c0_23, %c0_24] : memref<7x32x32xf32, #tpu.memory_space<vmem>>, vector<1x32x32xf32>
    %37 = vector.shape_cast %36 : vector<1x32x32xf32> to vector<32x32xf32>
    %c1_25 = arith.constant 1 : index
    %c0_26 = arith.constant 0 : index
    %c0_27 = arith.constant 0 : index
    %38 = vector.load %arg5[%c1_25, %c0_26, %c0_27] : memref<7x128x128xf32, #tpu.memory_space<vmem>>, vector<1x128x128xf32>
    %39 = vector.shape_cast %38 : vector<1x128x128xf32> to vector<128x128xf32>
    %cst_28 = arith.constant dense<0.000000e+00> : vector<32x128xf32>
    %40 = tpu.matmul %24, %39, %cst_28 {dimension_numbers = #tpu.dot_dimension_numbers<[1], [0], [0], [1], [0, 0, 1, 1], [], []>} : vector<32x128xf32>, vector<128x128xf32>, vector<32x128xf32> -> vector<32x128xf32>
    %cst_29 = arith.constant dense<0.000000e+00> : vector<32x128xf32>
    %41 = tpu.matmul %37, %40, %cst_29 {dimension_numbers = #tpu.dot_dimension_numbers<[1], [0], [0], [1], [0, 0, 1, 1], [], []>} : vector<32x32xf32>, vector<32x128xf32>, vector<32x128xf32> -> vector<32x128xf32>
    %42 = arith.addf %35, %41 : vector<32x128xf32>
    %c2 = arith.constant 2 : index
    %c0_30 = arith.constant 0 : index
    %c0_31 = arith.constant 0 : index
    %43 = vector.load %arg2[%c2, %c0_30, %c0_31] : memref<7x32x32xf32, #tpu.memory_space<vmem>>, vector<1x32x32xf32>
    %44 = vector.shape_cast %43 : vector<1x32x32xf32> to vector<32x32xf32>
    %c2_32 = arith.constant 2 : index
    %c0_33 = arith.constant 0 : index
    %c0_34 = arith.constant 0 : index
    %45 = vector.load %arg5[%c2_32, %c0_33, %c0_34] : memref<7x128x128xf32, #tpu.memory_space<vmem>>, vector<1x128x128xf32>
    %46 = vector.shape_cast %45 : vector<1x128x128xf32> to vector<128x128xf32>
    %cst_35 = arith.constant dense<0.000000e+00> : vector<32x128xf32>
    %47 = tpu.matmul %24, %46, %cst_35 {dimension_numbers = #tpu.dot_dimension_numbers<[1], [0], [0], [1], [0, 0, 1, 1], [], []>} : vector<32x128xf32>, vector<128x128xf32>, vector<32x128xf32> -> vector<32x128xf32>
    %cst_36 = arith.constant dense<0.000000e+00> : vector<32x128xf32>
    %48 = tpu.matmul %44, %47, %cst_36 {dimension_numbers = #tpu.dot_dimension_numbers<[1], [0], [0], [1], [0, 0, 1, 1], [], []>} : vector<32x32xf32>, vector<32x128xf32>, vector<32x128xf32> -> vector<32x128xf32>
    %49 = arith.addf %42, %48 : vector<32x128xf32>
    %c3 = arith.constant 3 : index
    %c0_37 = arith.constant 0 : index
    %c0_38 = arith.constant 0 : index
    %50 = vector.load %arg2[%c3, %c0_37, %c0_38] : memref<7x32x32xf32, #tpu.memory_space<vmem>>, vector<1x32x32xf32>
    %51 = vector.shape_cast %50 : vector<1x32x32xf32> to vector<32x32xf32>
    %c3_39 = arith.constant 3 : index
    %c0_40 = arith.constant 0 : index
    %c0_41 = arith.constant 0 : index
    %52 = vector.load %arg5[%c3_39, %c0_40, %c0_41] : memref<7x128x128xf32, #tpu.memory_space<vmem>>, vector<1x128x128xf32>
    %53 = vector.shape_cast %52 : vector<1x128x128xf32> to vector<128x128xf32>
    %cst_42 = arith.constant dense<0.000000e+00> : vector<32x128xf32>
    %54 = tpu.matmul %24, %53, %cst_42 {dimension_numbers = #tpu.dot_dimension_numbers<[1], [0], [0], [1], [0, 0, 1, 1], [], []>} : vector<32x128xf32>, vector<128x128xf32>, vector<32x128xf32> -> vector<32x128xf32>
    %cst_43 = arith.constant dense<0.000000e+00> : vector<32x128xf32>
    %55 = tpu.matmul %51, %54, %cst_43 {dimension_numbers = #tpu.dot_dimension_numbers<[1], [0], [0], [1], [0, 0, 1, 1], [], []>} : vector<32x32xf32>, vector<32x128xf32>, vector<32x128xf32> -> vector<32x128xf32>
    %56 = arith.addf %49, %55 : vector<32x128xf32>
    %c4 = arith.constant 4 : index
    %c0_44 = arith.constant 0 : index
    %c0_45 = arith.constant 0 : index
    %57 = vector.load %arg2[%c4, %c0_44, %c0_45] : memref<7x32x32xf32, #tpu.memory_space<vmem>>, vector<1x32x32xf32>
    %58 = vector.shape_cast %57 : vector<1x32x32xf32> to vector<32x32xf32>
    %c4_46 = arith.constant 4 : index
    %c0_47 = arith.constant 0 : index
    %c0_48 = arith.constant 0 : index
    %59 = vector.load %arg5[%c4_46, %c0_47, %c0_48] : memref<7x128x128xf32, #tpu.memory_space<vmem>>, vector<1x128x128xf32>
    %60 = vector.shape_cast %59 : vector<1x128x128xf32> to vector<128x128xf32>
    %cst_49 = arith.constant dense<0.000000e+00> : vector<32x128xf32>
    %61 = tpu.matmul %24, %60, %cst_49 {dimension_numbers = #tpu.dot_dimension_numbers<[1], [0], [0], [1], [0, 0, 1, 1], [], []>} : vector<32x128xf32>, vector<128x128xf32>, vector<32x128xf32> -> vector<32x128xf32>
    %cst_50 = arith.constant dense<0.000000e+00> : vector<32x128xf32>
    %62 = tpu.matmul %58, %61, %cst_50 {dimension_numbers = #tpu.dot_dimension_numbers<[1], [0], [0], [1], [0, 0, 1, 1], [], []>} : vector<32x32xf32>, vector<32x128xf32>, vector<32x128xf32> -> vector<32x128xf32>
    %63 = arith.addf %56, %62 : vector<32x128xf32>
    %c5 = arith.constant 5 : index
    %c0_51 = arith.constant 0 : index
    %c0_52 = arith.constant 0 : index
    %64 = vector.load %arg2[%c5, %c0_51, %c0_52] : memref<7x32x32xf32, #tpu.memory_space<vmem>>, vector<1x32x32xf32>
    %65 = vector.shape_cast %64 : vector<1x32x32xf32> to vector<32x32xf32>
    %c5_53 = arith.constant 5 : index
    %c0_54 = arith.constant 0 : index
    %c0_55 = arith.constant 0 : index
    %66 = vector.load %arg5[%c5_53, %c0_54, %c0_55] : memref<7x128x128xf32, #tpu.memory_space<vmem>>, vector<1x128x128xf32>
    %67 = vector.shape_cast %66 : vector<1x128x128xf32> to vector<128x128xf32>
    %cst_56 = arith.constant dense<0.000000e+00> : vector<32x128xf32>
    %68 = tpu.matmul %24, %67, %cst_56 {dimension_numbers = #tpu.dot_dimension_numbers<[1], [0], [0], [1], [0, 0, 1, 1], [], []>} : vector<32x128xf32>, vector<128x128xf32>, vector<32x128xf32> -> vector<32x128xf32>
    %cst_57 = arith.constant dense<0.000000e+00> : vector<32x128xf32>
    %69 = tpu.matmul %65, %68, %cst_57 {dimension_numbers = #tpu.dot_dimension_numbers<[1], [0], [0], [1], [0, 0, 1, 1], [], []>} : vector<32x32xf32>, vector<32x128xf32>, vector<32x128xf32> -> vector<32x128xf32>
    %70 = arith.addf %63, %69 : vector<32x128xf32>
    %c6 = arith.constant 6 : index
    %c0_58 = arith.constant 0 : index
    %c0_59 = arith.constant 0 : index
    %71 = vector.load %arg2[%c6, %c0_58, %c0_59] : memref<7x32x32xf32, #tpu.memory_space<vmem>>, vector<1x32x32xf32>
    %72 = vector.shape_cast %71 : vector<1x32x32xf32> to vector<32x32xf32>
    %c6_60 = arith.constant 6 : index
    %c0_61 = arith.constant 0 : index
    %c0_62 = arith.constant 0 : index
    %73 = vector.load %arg5[%c6_60, %c0_61, %c0_62] : memref<7x128x128xf32, #tpu.memory_space<vmem>>, vector<1x128x128xf32>
    %74 = vector.shape_cast %73 : vector<1x128x128xf32> to vector<128x128xf32>
    %cst_63 = arith.constant dense<0.000000e+00> : vector<32x128xf32>
    %75 = tpu.matmul %24, %74, %cst_63 {dimension_numbers = #tpu.dot_dimension_numbers<[1], [0], [0], [1], [0, 0, 1, 1], [], []>} : vector<32x128xf32>, vector<128x128xf32>, vector<32x128xf32> -> vector<32x128xf32>
    %cst_64 = arith.constant dense<0.000000e+00> : vector<32x128xf32>
    %76 = tpu.matmul %72, %75, %cst_64 {dimension_numbers = #tpu.dot_dimension_numbers<[1], [0], [0], [1], [0, 0, 1, 1], [], []>} : vector<32x32xf32>, vector<32x128xf32>, vector<32x128xf32> -> vector<32x128xf32>
    %77 = arith.addf %70, %76 : vector<32x128xf32>
    %c0_65 = arith.constant 0 : index
    %c0_66 = arith.constant 0 : index
    %78 = vector.load %arg7[%c0_65, %c0_66] : memref<1x128xf32, #tpu.memory_space<vmem>>, vector<1x128xf32>
    %c0_67 = arith.constant 0 : index
    %c0_68 = arith.constant 0 : index
    %79 = vector.load %arg8[%c0_67, %c0_68] : memref<1x128xf32, #tpu.memory_space<vmem>>, vector<1x128xf32>
    %cst_69 = arith.constant dense<0.000000e+00> : vector<128xf32>
    %80 = vector.multi_reduction <add>, %77, %cst_69 [0] : vector<32x128xf32> to vector<128xf32>
    %81 = vector.shape_cast %80 : vector<128xf32> to vector<1x128xf32>
    %82 = arith.mulf %77, %77 : vector<32x128xf32>
    %cst_70 = arith.constant dense<0.000000e+00> : vector<128xf32>
    %83 = vector.multi_reduction <add>, %82, %cst_70 [0] : vector<32x128xf32> to vector<128xf32>
    %84 = vector.shape_cast %83 : vector<128xf32> to vector<1x128xf32>
    %cst_71 = arith.constant dense<0.000000e+00> : vector<1x128xf32>
    %85 = tpu.matmul %81, %1, %cst_71 {dimension_numbers = #tpu.dot_dimension_numbers<[1], [0], [0], [1], [0, 0, 1, 1], [], []>} : vector<1x128xf32>, vector<128x128xf32>, vector<1x128xf32> -> vector<1x128xf32>
    %cst_72 = arith.constant dense<0.000000e+00> : vector<1x128xf32>
    %86 = tpu.matmul %84, %1, %cst_72 {dimension_numbers = #tpu.dot_dimension_numbers<[1], [0], [0], [1], [0, 0, 1, 1], [], []>} : vector<1x128xf32>, vector<128x128xf32>, vector<1x128xf32> -> vector<1x128xf32>
    %87 = arith.mulf %85, %85 : vector<1x128xf32>
    %88 = arith.subf %86, %87 : vector<1x128xf32>
    %cst_73 = arith.constant 0.000000e+00 : f32
    %89 = vector.broadcast %cst_73 : f32 to vector<1x128xf32>
    %90 = arith.maximumf %88, %89 : vector<1x128xf32>
    %cst_74 = arith.constant 9.99999974E-6 : f32
    %91 = vector.broadcast %cst_74 : f32 to vector<1x128xf32>
    %92 = arith.addf %90, %91 : vector<1x128xf32>
    %93 = math.rsqrt %92 : vector<1x128xf32>
    %94 = vector.broadcast %85 : vector<1x128xf32> to vector<32x128xf32>
    %95 = arith.subf %77, %94 : vector<32x128xf32>
    %96 = arith.mulf %93, %78 : vector<1x128xf32>
    %97 = vector.broadcast %96 : vector<1x128xf32> to vector<32x128xf32>
    %98 = arith.mulf %95, %97 : vector<32x128xf32>
    %99 = vector.broadcast %79 : vector<1x128xf32> to vector<32x128xf32>
    %100 = arith.addf %98, %99 : vector<32x128xf32>
    %c0_75 = arith.constant 0 : index
    %c0_76 = arith.constant 0 : index
    %101 = vector.load %arg9[%c0_75, %c0_76] : memref<128x512xf32, #tpu.memory_space<vmem>>, vector<128x512xf32>
    %cst_77 = arith.constant dense<0.000000e+00> : vector<32x512xf32>
    %102 = tpu.matmul %100, %101, %cst_77 {dimension_numbers = #tpu.dot_dimension_numbers<[1], [0], [0], [1], [0, 0, 1, 1], [], []>} : vector<32x128xf32>, vector<128x512xf32>, vector<32x512xf32> -> vector<32x512xf32>
    %c0_78 = arith.constant 0 : index
    %c0_79 = arith.constant 0 : index
    %103 = vector.load %arg10[%c0_78, %c0_79] : memref<1x512xf32, #tpu.memory_space<vmem>>, vector<1x512xf32>
    %104 = vector.broadcast %103 : vector<1x512xf32> to vector<32x512xf32>
    %105 = arith.addf %102, %104 : vector<32x512xf32>
    %106 = vector.extract_strided_slice %105 {offsets = [0, 0], sizes = [32, 256], strides = [1, 1]} : vector<32x512xf32> to vector<32x256xf32>
    %cst_80 = arith.constant 0.000000e+00 : f32
    %cst_81 = arith.constant 6.000000e+00 : f32
    %107 = vector.broadcast %cst_80 : f32 to vector<32x256xf32>
    %108 = arith.maximumf %107, %106 : vector<32x256xf32>
    %109 = vector.broadcast %cst_81 : f32 to vector<32x256xf32>
    %110 = arith.minimumf %109, %108 : vector<32x256xf32>
    %111 = vector.extract_strided_slice %105 {offsets = [0, 256], sizes = [32, 256], strides = [1, 1]} : vector<32x512xf32> to vector<32x256xf32>
    %112 = arith.mulf %110, %111 : vector<32x256xf32>
    %c0_82 = arith.constant 0 : index
    %c0_83 = arith.constant 0 : index
    %113 = vector.load %arg11[%c0_82, %c0_83] : memref<256x128xf32, #tpu.memory_space<vmem>>, vector<256x128xf32>
    %cst_84 = arith.constant dense<0.000000e+00> : vector<32x128xf32>
    %114 = tpu.matmul %112, %113, %cst_84 {dimension_numbers = #tpu.dot_dimension_numbers<[1], [0], [0], [1], [0, 0, 1, 1], [], []>} : vector<32x256xf32>, vector<256x128xf32>, vector<32x128xf32> -> vector<32x128xf32>
    %c0_85 = arith.constant 0 : index
    %c0_86 = arith.constant 0 : index
    %115 = vector.load %arg12[%c0_85, %c0_86] : memref<1x128xf32, #tpu.memory_space<vmem>>, vector<1x128xf32>
    %116 = vector.broadcast %115 : vector<1x128xf32> to vector<32x128xf32>
    %117 = arith.addf %114, %116 : vector<32x128xf32>
    %c0_87 = arith.constant 0 : index
    %c0_88 = arith.constant 0 : index
    %118 = vector.load %arg13[%c0_87, %c0_88] : memref<1x128xf32, #tpu.memory_space<vmem>>, vector<1x128xf32>
    %c0_89 = arith.constant 0 : index
    %c0_90 = arith.constant 0 : index
    %119 = vector.load %arg14[%c0_89, %c0_90] : memref<1x128xf32, #tpu.memory_space<vmem>>, vector<1x128xf32>
    %cst_91 = arith.constant dense<0.000000e+00> : vector<128xf32>
    %120 = vector.multi_reduction <add>, %117, %cst_91 [0] : vector<32x128xf32> to vector<128xf32>
    %121 = vector.shape_cast %120 : vector<128xf32> to vector<1x128xf32>
    %122 = arith.mulf %117, %117 : vector<32x128xf32>
    %cst_92 = arith.constant dense<0.000000e+00> : vector<128xf32>
    %123 = vector.multi_reduction <add>, %122, %cst_92 [0] : vector<32x128xf32> to vector<128xf32>
    %124 = vector.shape_cast %123 : vector<128xf32> to vector<1x128xf32>
    %cst_93 = arith.constant dense<0.000000e+00> : vector<1x128xf32>
    %125 = tpu.matmul %121, %1, %cst_93 {dimension_numbers = #tpu.dot_dimension_numbers<[1], [0], [0], [1], [0, 0, 1, 1], [], []>} : vector<1x128xf32>, vector<128x128xf32>, vector<1x128xf32> -> vector<1x128xf32>
    %cst_94 = arith.constant dense<0.000000e+00> : vector<1x128xf32>
    %126 = tpu.matmul %124, %1, %cst_94 {dimension_numbers = #tpu.dot_dimension_numbers<[1], [0], [0], [1], [0, 0, 1, 1], [], []>} : vector<1x128xf32>, vector<128x128xf32>, vector<1x128xf32> -> vector<1x128xf32>
    %127 = arith.mulf %125, %125 : vector<1x128xf32>
    %128 = arith.subf %126, %127 : vector<1x128xf32>
    %cst_95 = arith.constant 0.000000e+00 : f32
    %129 = vector.broadcast %cst_95 : f32 to vector<1x128xf32>
    %130 = arith.maximumf %128, %129 : vector<1x128xf32>
    %cst_96 = arith.constant 9.99999974E-6 : f32
    %131 = vector.broadcast %cst_96 : f32 to vector<1x128xf32>
    %132 = arith.addf %130, %131 : vector<1x128xf32>
    %133 = math.rsqrt %132 : vector<1x128xf32>
    %134 = vector.broadcast %125 : vector<1x128xf32> to vector<32x128xf32>
    %135 = arith.subf %117, %134 : vector<32x128xf32>
    %136 = arith.mulf %133, %118 : vector<1x128xf32>
    %137 = vector.broadcast %136 : vector<1x128xf32> to vector<32x128xf32>
    %138 = arith.mulf %135, %137 : vector<32x128xf32>
    %139 = vector.broadcast %119 : vector<1x128xf32> to vector<32x128xf32>
    %140 = arith.addf %138, %139 : vector<32x128xf32>
    %c0_97 = arith.constant 0 : index
    %c0_98 = arith.constant 0 : index
    %141 = vector.load %arg16[%c0_97, %c0_98] : memref<1x128xf32, #tpu.memory_space<vmem>>, vector<1x128xf32>
    %cst_99 = arith.constant 0.000000e+00 : f32
    %142 = vector.broadcast %cst_99 : f32 to vector<32x128xf32>
    %143 = vector.broadcast %141 : vector<1x128xf32> to vector<32x128xf32>
    %144 = arith.addf %143, %142 : vector<32x128xf32>
    %c0_100 = arith.constant 0 : index
    %c0_101 = arith.constant 0 : index
    %c0_102 = arith.constant 0 : index
    %145 = vector.load %arg2[%c0_100, %c0_101, %c0_102] : memref<7x32x32xf32, #tpu.memory_space<vmem>>, vector<1x32x32xf32>
    %146 = vector.shape_cast %145 : vector<1x32x32xf32> to vector<32x32xf32>
    %c0_103 = arith.constant 0 : index
    %c0_104 = arith.constant 0 : index
    %c0_105 = arith.constant 0 : index
    %147 = vector.load %arg15[%c0_103, %c0_104, %c0_105] : memref<7x128x128xf32, #tpu.memory_space<vmem>>, vector<1x128x128xf32>
    %148 = vector.shape_cast %147 : vector<1x128x128xf32> to vector<128x128xf32>
    %cst_106 = arith.constant dense<0.000000e+00> : vector<32x128xf32>
    %149 = tpu.matmul %140, %148, %cst_106 {dimension_numbers = #tpu.dot_dimension_numbers<[1], [0], [0], [1], [0, 0, 1, 1], [], []>} : vector<32x128xf32>, vector<128x128xf32>, vector<32x128xf32> -> vector<32x128xf32>
    %cst_107 = arith.constant dense<0.000000e+00> : vector<32x128xf32>
    %150 = tpu.matmul %146, %149, %cst_107 {dimension_numbers = #tpu.dot_dimension_numbers<[1], [0], [0], [1], [0, 0, 1, 1], [], []>} : vector<32x32xf32>, vector<32x128xf32>, vector<32x128xf32> -> vector<32x128xf32>
    %151 = arith.addf %144, %150 : vector<32x128xf32>
    %c1_108 = arith.constant 1 : index
    %c0_109 = arith.constant 0 : index
    %c0_110 = arith.constant 0 : index
    %152 = vector.load %arg2[%c1_108, %c0_109, %c0_110] : memref<7x32x32xf32, #tpu.memory_space<vmem>>, vector<1x32x32xf32>
    %153 = vector.shape_cast %152 : vector<1x32x32xf32> to vector<32x32xf32>
    %c1_111 = arith.constant 1 : index
    %c0_112 = arith.constant 0 : index
    %c0_113 = arith.constant 0 : index
    %154 = vector.load %arg15[%c1_111, %c0_112, %c0_113] : memref<7x128x128xf32, #tpu.memory_space<vmem>>, vector<1x128x128xf32>
    %155 = vector.shape_cast %154 : vector<1x128x128xf32> to vector<128x128xf32>
    %cst_114 = arith.constant dense<0.000000e+00> : vector<32x128xf32>
    %156 = tpu.matmul %140, %155, %cst_114 {dimension_numbers = #tpu.dot_dimension_numbers<[1], [0], [0], [1], [0, 0, 1, 1], [], []>} : vector<32x128xf32>, vector<128x128xf32>, vector<32x128xf32> -> vector<32x128xf32>
    %cst_115 = arith.constant dense<0.000000e+00> : vector<32x128xf32>
    %157 = tpu.matmul %153, %156, %cst_115 {dimension_numbers = #tpu.dot_dimension_numbers<[1], [0], [0], [1], [0, 0, 1, 1], [], []>} : vector<32x32xf32>, vector<32x128xf32>, vector<32x128xf32> -> vector<32x128xf32>
    %158 = arith.addf %151, %157 : vector<32x128xf32>
    %c2_116 = arith.constant 2 : index
    %c0_117 = arith.constant 0 : index
    %c0_118 = arith.constant 0 : index
    %159 = vector.load %arg2[%c2_116, %c0_117, %c0_118] : memref<7x32x32xf32, #tpu.memory_space<vmem>>, vector<1x32x32xf32>
    %160 = vector.shape_cast %159 : vector<1x32x32xf32> to vector<32x32xf32>
    %c2_119 = arith.constant 2 : index
    %c0_120 = arith.constant 0 : index
    %c0_121 = arith.constant 0 : index
    %161 = vector.load %arg15[%c2_119, %c0_120, %c0_121] : memref<7x128x128xf32, #tpu.memory_space<vmem>>, vector<1x128x128xf32>
    %162 = vector.shape_cast %161 : vector<1x128x128xf32> to vector<128x128xf32>
    %cst_122 = arith.constant dense<0.000000e+00> : vector<32x128xf32>
    %163 = tpu.matmul %140, %162, %cst_122 {dimension_numbers = #tpu.dot_dimension_numbers<[1], [0], [0], [1], [0, 0, 1, 1], [], []>} : vector<32x128xf32>, vector<128x128xf32>, vector<32x128xf32> -> vector<32x128xf32>
    %cst_123 = arith.constant dense<0.000000e+00> : vector<32x128xf32>
    %164 = tpu.matmul %160, %163, %cst_123 {dimension_numbers = #tpu.dot_dimension_numbers<[1], [0], [0], [1], [0, 0, 1, 1], [], []>} : vector<32x32xf32>, vector<32x128xf32>, vector<32x128xf32> -> vector<32x128xf32>
    %165 = arith.addf %158, %164 : vector<32x128xf32>
    %c3_124 = arith.constant 3 : index
    %c0_125 = arith.constant 0 : index
    %c0_126 = arith.constant 0 : index
    %166 = vector.load %arg2[%c3_124, %c0_125, %c0_126] : memref<7x32x32xf32, #tpu.memory_space<vmem>>, vector<1x32x32xf32>
    %167 = vector.shape_cast %166 : vector<1x32x32xf32> to vector<32x32xf32>
    %c3_127 = arith.constant 3 : index
    %c0_128 = arith.constant 0 : index
    %c0_129 = arith.constant 0 : index
    %168 = vector.load %arg15[%c3_127, %c0_128, %c0_129] : memref<7x128x128xf32, #tpu.memory_space<vmem>>, vector<1x128x128xf32>
    %169 = vector.shape_cast %168 : vector<1x128x128xf32> to vector<128x128xf32>
    %cst_130 = arith.constant dense<0.000000e+00> : vector<32x128xf32>
    %170 = tpu.matmul %140, %169, %cst_130 {dimension_numbers = #tpu.dot_dimension_numbers<[1], [0], [0], [1], [0, 0, 1, 1], [], []>} : vector<32x128xf32>, vector<128x128xf32>, vector<32x128xf32> -> vector<32x128xf32>
    %cst_131 = arith.constant dense<0.000000e+00> : vector<32x128xf32>
    %171 = tpu.matmul %167, %170, %cst_131 {dimension_numbers = #tpu.dot_dimension_numbers<[1], [0], [0], [1], [0, 0, 1, 1], [], []>} : vector<32x32xf32>, vector<32x128xf32>, vector<32x128xf32> -> vector<32x128xf32>
    %172 = arith.addf %165, %171 : vector<32x128xf32>
    %c4_132 = arith.constant 4 : index
    %c0_133 = arith.constant 0 : index
    %c0_134 = arith.constant 0 : index
    %173 = vector.load %arg2[%c4_132, %c0_133, %c0_134] : memref<7x32x32xf32, #tpu.memory_space<vmem>>, vector<1x32x32xf32>
    %174 = vector.shape_cast %173 : vector<1x32x32xf32> to vector<32x32xf32>
    %c4_135 = arith.constant 4 : index
    %c0_136 = arith.constant 0 : index
    %c0_137 = arith.constant 0 : index
    %175 = vector.load %arg15[%c4_135, %c0_136, %c0_137] : memref<7x128x128xf32, #tpu.memory_space<vmem>>, vector<1x128x128xf32>
    %176 = vector.shape_cast %175 : vector<1x128x128xf32> to vector<128x128xf32>
    %cst_138 = arith.constant dense<0.000000e+00> : vector<32x128xf32>
    %177 = tpu.matmul %140, %176, %cst_138 {dimension_numbers = #tpu.dot_dimension_numbers<[1], [0], [0], [1], [0, 0, 1, 1], [], []>} : vector<32x128xf32>, vector<128x128xf32>, vector<32x128xf32> -> vector<32x128xf32>
    %cst_139 = arith.constant dense<0.000000e+00> : vector<32x128xf32>
    %178 = tpu.matmul %174, %177, %cst_139 {dimension_numbers = #tpu.dot_dimension_numbers<[1], [0], [0], [1], [0, 0, 1, 1], [], []>} : vector<32x32xf32>, vector<32x128xf32>, vector<32x128xf32> -> vector<32x128xf32>
    %179 = arith.addf %172, %178 : vector<32x128xf32>
    %c5_140 = arith.constant 5 : index
    %c0_141 = arith.constant 0 : index
    %c0_142 = arith.constant 0 : index
    %180 = vector.load %arg2[%c5_140, %c0_141, %c0_142] : memref<7x32x32xf32, #tpu.memory_space<vmem>>, vector<1x32x32xf32>
    %181 = vector.shape_cast %180 : vector<1x32x32xf32> to vector<32x32xf32>
    %c5_143 = arith.constant 5 : index
    %c0_144 = arith.constant 0 : index
    %c0_145 = arith.constant 0 : index
    %182 = vector.load %arg15[%c5_143, %c0_144, %c0_145] : memref<7x128x128xf32, #tpu.memory_space<vmem>>, vector<1x128x128xf32>
    %183 = vector.shape_cast %182 : vector<1x128x128xf32> to vector<128x128xf32>
    %cst_146 = arith.constant dense<0.000000e+00> : vector<32x128xf32>
    %184 = tpu.matmul %140, %183, %cst_146 {dimension_numbers = #tpu.dot_dimension_numbers<[1], [0], [0], [1], [0, 0, 1, 1], [], []>} : vector<32x128xf32>, vector<128x128xf32>, vector<32x128xf32> -> vector<32x128xf32>
    %cst_147 = arith.constant dense<0.000000e+00> : vector<32x128xf32>
    %185 = tpu.matmul %181, %184, %cst_147 {dimension_numbers = #tpu.dot_dimension_numbers<[1], [0], [0], [1], [0, 0, 1, 1], [], []>} : vector<32x32xf32>, vector<32x128xf32>, vector<32x128xf32> -> vector<32x128xf32>
    %186 = arith.addf %179, %185 : vector<32x128xf32>
    %c6_148 = arith.constant 6 : index
    %c0_149 = arith.constant 0 : index
    %c0_150 = arith.constant 0 : index
    %187 = vector.load %arg2[%c6_148, %c0_149, %c0_150] : memref<7x32x32xf32, #tpu.memory_space<vmem>>, vector<1x32x32xf32>
    %188 = vector.shape_cast %187 : vector<1x32x32xf32> to vector<32x32xf32>
    %c6_151 = arith.constant 6 : index
    %c0_152 = arith.constant 0 : index
    %c0_153 = arith.constant 0 : index
    %189 = vector.load %arg15[%c6_151, %c0_152, %c0_153] : memref<7x128x128xf32, #tpu.memory_space<vmem>>, vector<1x128x128xf32>
    %190 = vector.shape_cast %189 : vector<1x128x128xf32> to vector<128x128xf32>
    %cst_154 = arith.constant dense<0.000000e+00> : vector<32x128xf32>
    %191 = tpu.matmul %140, %190, %cst_154 {dimension_numbers = #tpu.dot_dimension_numbers<[1], [0], [0], [1], [0, 0, 1, 1], [], []>} : vector<32x128xf32>, vector<128x128xf32>, vector<32x128xf32> -> vector<32x128xf32>
    %cst_155 = arith.constant dense<0.000000e+00> : vector<32x128xf32>
    %192 = tpu.matmul %188, %191, %cst_155 {dimension_numbers = #tpu.dot_dimension_numbers<[1], [0], [0], [1], [0, 0, 1, 1], [], []>} : vector<32x32xf32>, vector<32x128xf32>, vector<32x128xf32> -> vector<32x128xf32>
    %193 = arith.addf %186, %192 : vector<32x128xf32>
    %c0_156 = arith.constant 0 : index
    %c0_157 = arith.constant 0 : index
    %194 = vector.load %arg17[%c0_156, %c0_157] : memref<1x128xf32, #tpu.memory_space<vmem>>, vector<1x128xf32>
    %195 = arith.addf %24, %193 : vector<32x128xf32>
    %196 = vector.broadcast %194 : vector<1x128xf32> to vector<32x128xf32>
    %197 = arith.mulf %196, %195 : vector<32x128xf32>
    %198 = arith.addf %0, %197 : vector<32x128xf32>
    %c0_158 = arith.constant 0 : index
    %c0_159 = arith.constant 0 : index
    %199 = vector.load %arg18[%c0_158, %c0_159] : memref<32x128xf32, #tpu.memory_space<vmem>>, vector<32x128xf32>
    tpu.vector_store %arg18[%c0_158, %c0_159], %198 {strides = array<i32>} : memref<32x128xf32, #tpu.memory_space<vmem>>, vector<32x128xf32>,
    return
  }
}

module attributes {stable_mosaic.version = 11 : i64} {
  func.func @_block_kernel(%arg0: memref<32x128xf32, #tpu.memory_space<vmem>>, %arg1: memref<128x128xf32, #tpu.memory_space<vmem>>, %arg2: memref<7x32x32xf32, #tpu.memory_space<vmem>>, %arg3: memref<1x128xf32, #tpu.memory_space<vmem>>, %arg4: memref<1x128xf32, #tpu.memory_space<vmem>>, %arg5: memref<7x128x128xf32, #tpu.memory_space<vmem>>, %arg6: memref<1x128xf32, #tpu.memory_space<vmem>>, %arg7: memref<1x128xf32, #tpu.memory_space<vmem>>, %arg8: memref<1x128xf32, #tpu.memory_space<vmem>>, %arg9: memref<128x512xf32, #tpu.memory_space<vmem>>, %arg10: memref<1x512xf32, #tpu.memory_space<vmem>>, %arg11: memref<256x128xf32, #tpu.memory_space<vmem>>, %arg12: memref<1x128xf32, #tpu.memory_space<vmem>>, %arg13: memref<1x128xf32, #tpu.memory_space<vmem>>, %arg14: memref<1x128xf32, #tpu.memory_space<vmem>>, %arg15: memref<7x128x128xf32, #tpu.memory_space<vmem>>, %arg16: memref<1x128xf32, #tpu.memory_space<vmem>>, %arg17: memref<1x128xf32, #tpu.memory_space<vmem>>, %arg18: memref<32x128xf32, #tpu.memory_space<vmem>>) attributes {dimension_semantics = [], scalar_prefetch = 0 : i64, scratch_operands = 0 : i64, tpu.core_type = #tpu.core_type<tc>} {
    %c0 = arith.constant 0 : index
    %c0_0 = arith.constant 0 : index
    %0 = vector.load %arg0[%c0, %c0_0] : memref<32x128xf32, #tpu.memory_space<vmem>>, vector<32x128xf32>
    %c0_1 = arith.constant 0 : index
    %c0_2 = arith.constant 0 : index
    %1 = vector.load %arg1[%c0_1, %c0_2] : memref<128x128xf32, #tpu.memory_space<vmem>>, vector<128x128xf32>
    %c0_3 = arith.constant 0 : index
    %c0_4 = arith.constant 0 : index
    %2 = vector.load %arg3[%c0_3, %c0_4] : memref<1x128xf32, #tpu.memory_space<vmem>>, vector<1x128xf32>
    %c0_5 = arith.constant 0 : index
    %c0_6 = arith.constant 0 : index
    %3 = vector.load %arg4[%c0_5, %c0_6] : memref<1x128xf32, #tpu.memory_space<vmem>>, vector<1x128xf32>
    %cst = arith.constant dense<0.000000e+00> : vector<128xf32>
    %4 = vector.multi_reduction <add>, %0, %cst [0] : vector<32x128xf32> to vector<128xf32>
    %5 = vector.shape_cast %4 : vector<128xf32> to vector<1x128xf32>
    %6 = arith.mulf %0, %0 : vector<32x128xf32>
    %cst_7 = arith.constant dense<0.000000e+00> : vector<128xf32>
    %7 = vector.multi_reduction <add>, %6, %cst_7 [0] : vector<32x128xf32> to vector<128xf32>
    %8 = vector.shape_cast %7 : vector<128xf32> to vector<1x128xf32>
    %cst_8 = arith.constant dense<0.000000e+00> : vector<1x128xf32>
    %9 = tpu.matmul %5, %1, %cst_8 {dimension_numbers = #tpu.dot_dimension_numbers<[1], [0], [0], [1], [0, 0, 1, 1], [], []>} : vector<1x128xf32>, vector<128x128xf32>, vector<1x128xf32> -> vector<1x128xf32>
    %cst_9 = arith.constant dense<0.000000e+00> : vector<1x128xf32>
    %10 = tpu.matmul %8, %1, %cst_9 {dimension_numbers = #tpu.dot_dimension_numbers<[1], [0], [0], [1], [0, 0, 1, 1], [], []>} : vector<1x128xf32>, vector<128x128xf32>, vector<1x128xf32> -> vector<1x128xf32>
    %11 = arith.mulf %9, %9 : vector<1x128xf32>
    %12 = arith.subf %10, %11 : vector<1x128xf32>
    %cst_10 = arith.constant 0.000000e+00 : f32
    %13 = vector.broadcast %cst_10 : f32 to vector<1x128xf32>
    %14 = arith.maximumf %12, %13 : vector<1x128xf32>
    %cst_11 = arith.constant 9.99999974E-6 : f32
    %15 = vector.broadcast %cst_11 : f32 to vector<1x128xf32>
    %16 = arith.addf %14, %15 : vector<1x128xf32>
    %17 = math.rsqrt %16 : vector<1x128xf32>
    %18 = vector.broadcast %9 : vector<1x128xf32> to vector<32x128xf32>
    %19 = arith.subf %0, %18 : vector<32x128xf32>
    %20 = arith.mulf %17, %2 : vector<1x128xf32>
    %21 = vector.broadcast %20 : vector<1x128xf32> to vector<32x128xf32>
    %22 = arith.mulf %19, %21 : vector<32x128xf32>
    %23 = vector.broadcast %3 : vector<1x128xf32> to vector<32x128xf32>
    %24 = arith.addf %22, %23 : vector<32x128xf32>
    %c0_12 = arith.constant 0 : index
    %c0_13 = arith.constant 0 : index
    %25 = vector.load %arg6[%c0_12, %c0_13] : memref<1x128xf32, #tpu.memory_space<vmem>>, vector<1x128xf32>
    %cst_14 = arith.constant 0.000000e+00 : f32
    %26 = vector.broadcast %cst_14 : f32 to vector<32x128xf32>
    %27 = vector.broadcast %25 : vector<1x128xf32> to vector<32x128xf32>
    %28 = arith.addf %27, %26 : vector<32x128xf32>
    %c0_15 = arith.constant 0 : index
    %c0_16 = arith.constant 0 : index
    %c0_17 = arith.constant 0 : index
    %29 = vector.load %arg2[%c0_15, %c0_16, %c0_17] : memref<7x32x32xf32, #tpu.memory_space<vmem>>, vector<1x32x32xf32>
    %30 = vector.shape_cast %29 : vector<1x32x32xf32> to vector<32x32xf32>
    %c0_18 = arith.constant 0 : index
    %c0_19 = arith.constant 0 : index
    %c0_20 = arith.constant 0 : index
    %31 = vector.load %arg5[%c0_18, %c0_19, %c0_20] : memref<7x128x128xf32, #tpu.memory_space<vmem>>, vector<1x128x128xf32>
    %32 = vector.shape_cast %31 : vector<1x128x128xf32> to vector<128x128xf32>
    %cst_21 = arith.constant dense<0.000000e+00> : vector<32x128xf32>
    %33 = tpu.matmul %24, %32, %cst_21 {dimension_numbers = #tpu.dot_dimension_numbers<[1], [0], [0], [1], [0, 0, 1, 1], [], []>} : vector<32x128xf32>, vector<128x128xf32>, vector<32x128xf32> -> vector<32x128xf32>
    %cst_22 = arith.constant dense<0.000000e+00> : vector<32x128xf32>
    %34 = tpu.matmul %30, %33, %cst_22 {dimension_numbers = #tpu.dot_dimension_numbers<[1], [0], [0], [1], [0, 0, 1, 1], [], []>} : vector<32x32xf32>, vector<32x128xf32>, vector<32x128xf32> -> vector<32x128xf32>
    %35 = arith.addf %28, %34 : vector<32x128xf32>
    %c1 = arith.constant 1 : index
    %c0_23 = arith.constant 0 : index
    %c0_24 = arith.constant 0 : index
    %36 = vector.load %arg2[%c1, %c0_23, %c0_24] : memref<7x32x32xf32, #tpu.memory_space<vmem>>, vector<1x32x32xf32>
    %37 = vector.shape_cast %36 : vector<1x32x32xf32> to vector<32x32xf32>
    %c1_25 = arith.constant 1 : index
    %c0_26 = arith.constant 0 : index
    %c0_27 = arith.constant 0 : index
    %38 = vector.load %arg5[%c1_25, %c0_26, %c0_27] : memref<7x128x128xf32, #tpu.memory_space<vmem>>, vector<1x128x128xf32>
    %39 = vector.shape_cast %38 : vector<1x128x128xf32> to vector<128x128xf32>
    %cst_28 = arith.constant dense<0.000000e+00> : vector<32x128xf32>
    %40 = tpu.matmul %24, %39, %cst_28 {dimension_numbers = #tpu.dot_dimension_numbers<[1], [0], [0], [1], [0, 0, 1, 1], [], []>} : vector<32x128xf32>, vector<128x128xf32>, vector<32x128xf32> -> vector<32x128xf32>
    %cst_29 = arith.constant dense<0.000000e+00> : vector<32x128xf32>
    %41 = tpu.matmul %37, %40, %cst_29 {dimension_numbers = #tpu.dot_dimension_numbers<[1], [0], [0], [1], [0, 0, 1, 1], [], []>} : vector<32x32xf32>, vector<32x128xf32>, vector<32x128xf32> -> vector<32x128xf32>
    %42 = arith.addf %35, %41 : vector<32x128xf32>
    %c2 = arith.constant 2 : index
    %c0_30 = arith.constant 0 : index
    %c0_31 = arith.constant 0 : index
    %43 = vector.load %arg2[%c2, %c0_30, %c0_31] : memref<7x32x32xf32, #tpu.memory_space<vmem>>, vector<1x32x32xf32>
    %44 = vector.shape_cast %43 : vector<1x32x32xf32> to vector<32x32xf32>
    %c2_32 = arith.constant 2 : index
    %c0_33 = arith.constant 0 : index
    %c0_34 = arith.constant 0 : index
    %45 = vector.load %arg5[%c2_32, %c0_33, %c0_34] : memref<7x128x128xf32, #tpu.memory_space<vmem>>, vector<1x128x128xf32>
    %46 = vector.shape_cast %45 : vector<1x128x128xf32> to vector<128x128xf32>
    %cst_35 = arith.constant dense<0.000000e+00> : vector<32x128xf32>
    %47 = tpu.matmul %24, %46, %cst_35 {dimension_numbers = #tpu.dot_dimension_numbers<[1], [0], [0], [1], [0, 0, 1, 1], [], []>} : vector<32x128xf32>, vector<128x128xf32>, vector<32x128xf32> -> vector<32x128xf32>
    %cst_36 = arith.constant dense<0.000000e+00> : vector<32x128xf32>
    %48 = tpu.matmul %44, %47, %cst_36 {dimension_numbers = #tpu.dot_dimension_numbers<[1], [0], [0], [1], [0, 0, 1, 1], [], []>} : vector<32x32xf32>, vector<32x128xf32>, vector<32x128xf32> -> vector<32x128xf32>
    %49 = arith.addf %42, %48 : vector<32x128xf32>
    %c3 = arith.constant 3 : index
    %c0_37 = arith.constant 0 : index
    %c0_38 = arith.constant 0 : index
    %50 = vector.load %arg2[%c3, %c0_37, %c0_38] : memref<7x32x32xf32, #tpu.memory_space<vmem>>, vector<1x32x32xf32>
    %51 = vector.shape_cast %50 : vector<1x32x32xf32> to vector<32x32xf32>
    %c3_39 = arith.constant 3 : index
    %c0_40 = arith.constant 0 : index
    %c0_41 = arith.constant 0 : index
    %52 = vector.load %arg5[%c3_39, %c0_40, %c0_41] : memref<7x128x128xf32, #tpu.memory_space<vmem>>, vector<1x128x128xf32>
    %53 = vector.shape_cast %52 : vector<1x128x128xf32> to vector<128x128xf32>
    %cst_42 = arith.constant dense<0.000000e+00> : vector<32x128xf32>
    %54 = tpu.matmul %24, %53, %cst_42 {dimension_numbers = #tpu.dot_dimension_numbers<[1], [0], [0], [1], [0, 0, 1, 1], [], []>} : vector<32x128xf32>, vector<128x128xf32>, vector<32x128xf32> -> vector<32x128xf32>
    %cst_43 = arith.constant dense<0.000000e+00> : vector<32x128xf32>
    %55 = tpu.matmul %51, %54, %cst_43 {dimension_numbers = #tpu.dot_dimension_numbers<[1], [0], [0], [1], [0, 0, 1, 1], [], []>} : vector<32x32xf32>, vector<32x128xf32>, vector<32x128xf32> -> vector<32x128xf32>
    %56 = arith.addf %49, %55 : vector<32x128xf32>
    %c4 = arith.constant 4 : index
    %c0_44 = arith.constant 0 : index
    %c0_45 = arith.constant 0 : index
    %57 = vector.load %arg2[%c4, %c0_44, %c0_45] : memref<7x32x32xf32, #tpu.memory_space<vmem>>, vector<1x32x32xf32>
    %58 = vector.shape_cast %57 : vector<1x32x32xf32> to vector<32x32xf32>
    %c4_46 = arith.constant 4 : index
    %c0_47 = arith.constant 0 : index
    %c0_48 = arith.constant 0 : index
    %59 = vector.load %arg5[%c4_46, %c0_47, %c0_48] : memref<7x128x128xf32, #tpu.memory_space<vmem>>, vector<1x128x128xf32>
    %60 = vector.shape_cast %59 : vector<1x128x128xf32> to vector<128x128xf32>
    %cst_49 = arith.constant dense<0.000000e+00> : vector<32x128xf32>
    %61 = tpu.matmul %24, %60, %cst_49 {dimension_numbers = #tpu.dot_dimension_numbers<[1], [0], [0], [1], [0, 0, 1, 1], [], []>} : vector<32x128xf32>, vector<128x128xf32>, vector<32x128xf32> -> vector<32x128xf32>
    %cst_50 = arith.constant dense<0.000000e+00> : vector<32x128xf32>
    %62 = tpu.matmul %58, %61, %cst_50 {dimension_numbers = #tpu.dot_dimension_numbers<[1], [0], [0], [1], [0, 0, 1, 1], [], []>} : vector<32x32xf32>, vector<32x128xf32>, vector<32x128xf32> -> vector<32x128xf32>
    %63 = arith.addf %56, %62 : vector<32x128xf32>
    %c5 = arith.constant 5 : index
    %c0_51 = arith.constant 0 : index
    %c0_52 = arith.constant 0 : index
    %64 = vector.load %arg2[%c5, %c0_51, %c0_52] : memref<7x32x32xf32, #tpu.memory_space<vmem>>, vector<1x32x32xf32>
    %65 = vector.shape_cast %64 : vector<1x32x32xf32> to vector<32x32xf32>
    %c5_53 = arith.constant 5 : index
    %c0_54 = arith.constant 0 : index
    %c0_55 = arith.constant 0 : index
    %66 = vector.load %arg5[%c5_53, %c0_54, %c0_55] : memref<7x128x128xf32, #tpu.memory_space<vmem>>, vector<1x128x128xf32>
    %67 = vector.shape_cast %66 : vector<1x128x128xf32> to vector<128x128xf32>
    %cst_56 = arith.constant dense<0.000000e+00> : vector<32x128xf32>
    %68 = tpu.matmul %24, %67, %cst_56 {dimension_numbers = #tpu.dot_dimension_numbers<[1], [0], [0], [1], [0, 0, 1, 1], [], []>} : vector<32x128xf32>, vector<128x128xf32>, vector<32x128xf32> -> vector<32x128xf32>
    %cst_57 = arith.constant dense<0.000000e+00> : vector<32x128xf32>
    %69 = tpu.matmul %65, %68, %cst_57 {dimension_numbers = #tpu.dot_dimension_numbers<[1], [0], [0], [1], [0, 0, 1, 1], [], []>} : vector<32x32xf32>, vector<32x128xf32>, vector<32x128xf32> -> vector<32x128xf32>
    %70 = arith.addf %63, %69 : vector<32x128xf32>
    %c6 = arith.constant 6 : index
    %c0_58 = arith.constant 0 : index
    %c0_59 = arith.constant 0 : index
    %71 = vector.load %arg2[%c6, %c0_58, %c0_59] : memref<7x32x32xf32, #tpu.memory_space<vmem>>, vector<1x32x32xf32>
    %72 = vector.shape_cast %71 : vector<1x32x32xf32> to vector<32x32xf32>
    %c6_60 = arith.constant 6 : index
    %c0_61 = arith.constant 0 : index
    %c0_62 = arith.constant 0 : index
    %73 = vector.load %arg5[%c6_60, %c0_61, %c0_62] : memref<7x128x128xf32, #tpu.memory_space<vmem>>, vector<1x128x128xf32>
    %74 = vector.shape_cast %73 : vector<1x128x128xf32> to vector<128x128xf32>
    %cst_63 = arith.constant dense<0.000000e+00> : vector<32x128xf32>
    %75 = tpu.matmul %24, %74, %cst_63 {dimension_numbers = #tpu.dot_dimension_numbers<[1], [0], [0], [1], [0, 0, 1, 1], [], []>} : vector<32x128xf32>, vector<128x128xf32>, vector<32x128xf32> -> vector<32x128xf32>
    %cst_64 = arith.constant dense<0.000000e+00> : vector<32x128xf32>
    %76 = tpu.matmul %72, %75, %cst_64 {dimension_numbers = #tpu.dot_dimension_numbers<[1], [0], [0], [1], [0, 0, 1, 1], [], []>} : vector<32x32xf32>, vector<32x128xf32>, vector<32x128xf32> -> vector<32x128xf32>
    %77 = arith.addf %70, %76 : vector<32x128xf32>
    %c0_65 = arith.constant 0 : index
    %c0_66 = arith.constant 0 : index
    %78 = vector.load %arg7[%c0_65, %c0_66] : memref<1x128xf32, #tpu.memory_space<vmem>>, vector<1x128xf32>
    %c0_67 = arith.constant 0 : index
    %c0_68 = arith.constant 0 : index
    %79 = vector.load %arg8[%c0_67, %c0_68] : memref<1x128xf32, #tpu.memory_space<vmem>>, vector<1x128xf32>
    %cst_69 = arith.constant dense<0.000000e+00> : vector<128xf32>
    %80 = vector.multi_reduction <add>, %77, %cst_69 [0] : vector<32x128xf32> to vector<128xf32>
    %81 = vector.shape_cast %80 : vector<128xf32> to vector<1x128xf32>
    %82 = arith.mulf %77, %77 : vector<32x128xf32>
    %cst_70 = arith.constant dense<0.000000e+00> : vector<128xf32>
    %83 = vector.multi_reduction <add>, %82, %cst_70 [0] : vector<32x128xf32> to vector<128xf32>
    %84 = vector.shape_cast %83 : vector<128xf32> to vector<1x128xf32>
    %cst_71 = arith.constant dense<0.000000e+00> : vector<1x128xf32>
    %85 = tpu.matmul %81, %1, %cst_71 {dimension_numbers = #tpu.dot_dimension_numbers<[1], [0], [0], [1], [0, 0, 1, 1], [], []>} : vector<1x128xf32>, vector<128x128xf32>, vector<1x128xf32> -> vector<1x128xf32>
    %cst_72 = arith.constant dense<0.000000e+00> : vector<1x128xf32>
    %86 = tpu.matmul %84, %1, %cst_72 {dimension_numbers = #tpu.dot_dimension_numbers<[1], [0], [0], [1], [0, 0, 1, 1], [], []>} : vector<1x128xf32>, vector<128x128xf32>, vector<1x128xf32> -> vector<1x128xf32>
    %87 = arith.mulf %85, %85 : vector<1x128xf32>
    %88 = arith.subf %86, %87 : vector<1x128xf32>
    %cst_73 = arith.constant 0.000000e+00 : f32
    %89 = vector.broadcast %cst_73 : f32 to vector<1x128xf32>
    %90 = arith.maximumf %88, %89 : vector<1x128xf32>
    %cst_74 = arith.constant 9.99999974E-6 : f32
    %91 = vector.broadcast %cst_74 : f32 to vector<1x128xf32>
    %92 = arith.addf %90, %91 : vector<1x128xf32>
    %93 = math.rsqrt %92 : vector<1x128xf32>
    %94 = vector.broadcast %85 : vector<1x128xf32> to vector<32x128xf32>
    %95 = arith.subf %77, %94 : vector<32x128xf32>
    %96 = arith.mulf %93, %78 : vector<1x128xf32>
    %97 = vector.broadcast %96 : vector<1x128xf32> to vector<32x128xf32>
    %98 = arith.mulf %95, %97 : vector<32x128xf32>
    %99 = vector.broadcast %79 : vector<1x128xf32> to vector<32x128xf32>
    %100 = arith.addf %98, %99 : vector<32x128xf32>
    %c0_75 = arith.constant 0 : index
    %c0_76 = arith.constant 0 : index
    %101 = vector.load %arg9[%c0_75, %c0_76] : memref<128x512xf32, #tpu.memory_space<vmem>>, vector<128x512xf32>
    %cst_77 = arith.constant dense<0.000000e+00> : vector<32x512xf32>
    %102 = tpu.matmul %100, %101, %cst_77 {dimension_numbers = #tpu.dot_dimension_numbers<[1], [0], [0], [1], [0, 0, 1, 1], [], []>} : vector<32x128xf32>, vector<128x512xf32>, vector<32x512xf32> -> vector<32x512xf32>
    %c0_78 = arith.constant 0 : index
    %c0_79 = arith.constant 0 : index
    %103 = vector.load %arg10[%c0_78, %c0_79] : memref<1x512xf32, #tpu.memory_space<vmem>>, vector<1x512xf32>
    %104 = vector.broadcast %103 : vector<1x512xf32> to vector<32x512xf32>
    %105 = arith.addf %102, %104 : vector<32x512xf32>
    %106 = vector.extract_strided_slice %105 {offsets = [0, 0], sizes = [32, 256], strides = [1, 1]} : vector<32x512xf32> to vector<32x256xf32>
    %cst_80 = arith.constant 0.000000e+00 : f32
    %cst_81 = arith.constant 6.000000e+00 : f32
    %107 = vector.broadcast %cst_80 : f32 to vector<32x256xf32>
    %108 = arith.maximumf %107, %106 : vector<32x256xf32>
    %109 = vector.broadcast %cst_81 : f32 to vector<32x256xf32>
    %110 = arith.minimumf %109, %108 : vector<32x256xf32>
    %111 = vector.extract_strided_slice %105 {offsets = [0, 256], sizes = [32, 256], strides = [1, 1]} : vector<32x512xf32> to vector<32x256xf32>
    %112 = arith.mulf %110, %111 : vector<32x256xf32>
    %c0_82 = arith.constant 0 : index
    %c0_83 = arith.constant 0 : index
    %113 = vector.load %arg11[%c0_82, %c0_83] : memref<256x128xf32, #tpu.memory_space<vmem>>, vector<256x128xf32>
    %cst_84 = arith.constant dense<0.000000e+00> : vector<32x128xf32>
    %114 = tpu.matmul %112, %113, %cst_84 {dimension_numbers = #tpu.dot_dimension_numbers<[1], [0], [0], [1], [0, 0, 1, 1], [], []>} : vector<32x256xf32>, vector<256x128xf32>, vector<32x128xf32> -> vector<32x128xf32>
    %c0_85 = arith.constant 0 : index
    %c0_86 = arith.constant 0 : index
    %115 = vector.load %arg12[%c0_85, %c0_86] : memref<1x128xf32, #tpu.memory_space<vmem>>, vector<1x128xf32>
    %116 = vector.broadcast %115 : vector<1x128xf32> to vector<32x128xf32>
    %117 = arith.addf %114, %116 : vector<32x128xf32>
    %c0_87 = arith.constant 0 : index
    %c0_88 = arith.constant 0 : index
    %118 = vector.load %arg13[%c0_87, %c0_88] : memref<1x128xf32, #tpu.memory_space<vmem>>, vector<1x128xf32>
    %c0_89 = arith.constant 0 : index
    %c0_90 = arith.constant 0 : index
    %119 = vector.load %arg14[%c0_89, %c0_90] : memref<1x128xf32, #tpu.memory_space<vmem>>, vector<1x128xf32>
    %cst_91 = arith.constant dense<0.000000e+00> : vector<128xf32>
    %120 = vector.multi_reduction <add>, %117, %cst_91 [0] : vector<32x128xf32> to vector<128xf32>
    %121 = vector.shape_cast %120 : vector<128xf32> to vector<1x128xf32>
    %122 = arith.mulf %117, %117 : vector<32x128xf32>
    %cst_92 = arith.constant dense<0.000000e+00> : vector<128xf32>
    %123 = vector.multi_reduction <add>, %122, %cst_92 [0] : vector<32x128xf32> to vector<128xf32>
    %124 = vector.shape_cast %123 : vector<128xf32> to vector<1x128xf32>
    %cst_93 = arith.constant dense<0.000000e+00> : vector<1x128xf32>
    %125 = tpu.matmul %121, %1, %cst_93 {dimension_numbers = #tpu.dot_dimension_numbers<[1], [0], [0], [1], [0, 0, 1, 1], [], []>} : vector<1x128xf32>, vector<128x128xf32>, vector<1x128xf32> -> vector<1x128xf32>
    %cst_94 = arith.constant dense<0.000000e+00> : vector<1x128xf32>
    %126 = tpu.matmul %124, %1, %cst_94 {dimension_numbers = #tpu.dot_dimension_numbers<[1], [0], [0], [1], [0, 0, 1, 1], [], []>} : vector<1x128xf32>, vector<128x128xf32>, vector<1x128xf32> -> vector<1x128xf32>
    %127 = arith.mulf %125, %125 : vector<1x128xf32>
    %128 = arith.subf %126, %127 : vector<1x128xf32>
    %cst_95 = arith.constant 0.000000e+00 : f32
    %129 = vector.broadcast %cst_95 : f32 to vector<1x128xf32>
    %130 = arith.maximumf %128, %129 : vector<1x128xf32>
    %cst_96 = arith.constant 9.99999974E-6 : f32
    %131 = vector.broadcast %cst_96 : f32 to vector<1x128xf32>
    %132 = arith.addf %130, %131 : vector<1x128xf32>
    %133 = math.rsqrt %132 : vector<1x128xf32>
    %134 = vector.broadcast %125 : vector<1x128xf32> to vector<32x128xf32>
    %135 = arith.subf %117, %134 : vector<32x128xf32>
    %136 = arith.mulf %133, %118 : vector<1x128xf32>
    %137 = vector.broadcast %136 : vector<1x128xf32> to vector<32x128xf32>
    %138 = arith.mulf %135, %137 : vector<32x128xf32>
    %139 = vector.broadcast %119 : vector<1x128xf32> to vector<32x128xf32>
    %140 = arith.addf %138, %139 : vector<32x128xf32>
    %c0_97 = arith.constant 0 : index
    %c0_98 = arith.constant 0 : index
    %141 = vector.load %arg16[%c0_97, %c0_98] : memref<1x128xf32, #tpu.memory_space<vmem>>, vector<1x128xf32>
    %cst_99 = arith.constant 0.000000e+00 : f32
    %142 = vector.broadcast %cst_99 : f32 to vector<32x128xf32>
    %143 = vector.broadcast %141 : vector<1x128xf32> to vector<32x128xf32>
    %144 = arith.addf %143, %142 : vector<32x128xf32>
    %c0_100 = arith.constant 0 : index
    %c0_101 = arith.constant 0 : index
    %c0_102 = arith.constant 0 : index
    %145 = vector.load %arg2[%c0_100, %c0_101, %c0_102] : memref<7x32x32xf32, #tpu.memory_space<vmem>>, vector<1x32x32xf32>
    %146 = vector.shape_cast %145 : vector<1x32x32xf32> to vector<32x32xf32>
    %c0_103 = arith.constant 0 : index
    %c0_104 = arith.constant 0 : index
    %c0_105 = arith.constant 0 : index
    %147 = vector.load %arg15[%c0_103, %c0_104, %c0_105] : memref<7x128x128xf32, #tpu.memory_space<vmem>>, vector<1x128x128xf32>
    %148 = vector.shape_cast %147 : vector<1x128x128xf32> to vector<128x128xf32>
    %cst_106 = arith.constant dense<0.000000e+00> : vector<32x128xf32>
    %149 = tpu.matmul %140, %148, %cst_106 {dimension_numbers = #tpu.dot_dimension_numbers<[1], [0], [0], [1], [0, 0, 1, 1], [], []>} : vector<32x128xf32>, vector<128x128xf32>, vector<32x128xf32> -> vector<32x128xf32>
    %cst_107 = arith.constant dense<0.000000e+00> : vector<32x128xf32>
    %150 = tpu.matmul %146, %149, %cst_107 {dimension_numbers = #tpu.dot_dimension_numbers<[1], [0], [0], [1], [0, 0, 1, 1], [], []>} : vector<32x32xf32>, vector<32x128xf32>, vector<32x128xf32> -> vector<32x128xf32>
    %151 = arith.addf %144, %150 : vector<32x128xf32>
    %c1_108 = arith.constant 1 : index
    %c0_109 = arith.constant 0 : index
    %c0_110 = arith.constant 0 : index
    %152 = vector.load %arg2[%c1_108, %c0_109, %c0_110] : memref<7x32x32xf32, #tpu.memory_space<vmem>>, vector<1x32x32xf32>
    %153 = vector.shape_cast %152 : vector<1x32x32xf32> to vector<32x32xf32>
    %c1_111 = arith.constant 1 : index
    %c0_112 = arith.constant 0 : index
    %c0_113 = arith.constant 0 : index
    %154 = vector.load %arg15[%c1_111, %c0_112, %c0_113] : memref<7x128x128xf32, #tpu.memory_space<vmem>>, vector<1x128x128xf32>
    %155 = vector.shape_cast %154 : vector<1x128x128xf32> to vector<128x128xf32>
    %cst_114 = arith.constant dense<0.000000e+00> : vector<32x128xf32>
    %156 = tpu.matmul %140, %155, %cst_114 {dimension_numbers = #tpu.dot_dimension_numbers<[1], [0], [0], [1], [0, 0, 1, 1], [], []>} : vector<32x128xf32>, vector<128x128xf32>, vector<32x128xf32> -> vector<32x128xf32>
    %cst_115 = arith.constant dense<0.000000e+00> : vector<32x128xf32>
    %157 = tpu.matmul %153, %156, %cst_115 {dimension_numbers = #tpu.dot_dimension_numbers<[1], [0], [0], [1], [0, 0, 1, 1], [], []>} : vector<32x32xf32>, vector<32x128xf32>, vector<32x128xf32> -> vector<32x128xf32>
    %158 = arith.addf %151, %157 : vector<32x128xf32>
    %c2_116 = arith.constant 2 : index
    %c0_117 = arith.constant 0 : index
    %c0_118 = arith.constant 0 : index
    %159 = vector.load %arg2[%c2_116, %c0_117, %c0_118] : memref<7x32x32xf32, #tpu.memory_space<vmem>>, vector<1x32x32xf32>
    %160 = vector.shape_cast %159 : vector<1x32x32xf32> to vector<32x32xf32>
    %c2_119 = arith.constant 2 : index
    %c0_120 = arith.constant 0 : index
    %c0_121 = arith.constant 0 : index
    %161 = vector.load %arg15[%c2_119, %c0_120, %c0_121] : memref<7x128x128xf32, #tpu.memory_space<vmem>>, vector<1x128x128xf32>
    %162 = vector.shape_cast %161 : vector<1x128x128xf32> to vector<128x128xf32>
    %cst_122 = arith.constant dense<0.000000e+00> : vector<32x128xf32>
    %163 = tpu.matmul %140, %162, %cst_122 {dimension_numbers = #tpu.dot_dimension_numbers<[1], [0], [0], [1], [0, 0, 1, 1], [], []>} : vector<32x128xf32>, vector<128x128xf32>, vector<32x128xf32> -> vector<32x128xf32>
    %cst_123 = arith.constant dense<0.000000e+00> : vector<32x128xf32>
    %164 = tpu.matmul %160, %163, %cst_123 {dimension_numbers = #tpu.dot_dimension_numbers<[1], [0], [0], [1], [0, 0, 1, 1], [], []>} : vector<32x32xf32>, vector<32x128xf32>, vector<32x128xf32> -> vector<32x128xf32>
    %165 = arith.addf %158, %164 : vector<32x128xf32>
    %c3_124 = arith.constant 3 : index
    %c0_125 = arith.constant 0 : index
    %c0_126 = arith.constant 0 : index
    %166 = vector.load %arg2[%c3_124, %c0_125, %c0_126] : memref<7x32x32xf32, #tpu.memory_space<vmem>>, vector<1x32x32xf32>
    %167 = vector.shape_cast %166 : vector<1x32x32xf32> to vector<32x32xf32>
    %c3_127 = arith.constant 3 : index
    %c0_128 = arith.constant 0 : index
    %c0_129 = arith.constant 0 : index
    %168 = vector.load %arg15[%c3_127, %c0_128, %c0_129] : memref<7x128x128xf32, #tpu.memory_space<vmem>>, vector<1x128x128xf32>
    %169 = vector.shape_cast %168 : vector<1x128x128xf32> to vector<128x128xf32>
    %cst_130 = arith.constant dense<0.000000e+00> : vector<32x128xf32>
    %170 = tpu.matmul %140, %169, %cst_130 {dimension_numbers = #tpu.dot_dimension_numbers<[1], [0], [0], [1], [0, 0, 1, 1], [], []>} : vector<32x128xf32>, vector<128x128xf32>, vector<32x128xf32> -> vector<32x128xf32>
    %cst_131 = arith.constant dense<0.000000e+00> : vector<32x128xf32>
    %171 = tpu.matmul %167, %170, %cst_131 {dimension_numbers = #tpu.dot_dimension_numbers<[1], [0], [0], [1], [0, 0, 1, 1], [], []>} : vector<32x32xf32>, vector<32x128xf32>, vector<32x128xf32> -> vector<32x128xf32>
    %172 = arith.addf %165, %171 : vector<32x128xf32>
    %c4_132 = arith.constant 4 : index
    %c0_133 = arith.constant 0 : index
    %c0_134 = arith.constant 0 : index
    %173 = vector.load %arg2[%c4_132, %c0_133, %c0_134] : memref<7x32x32xf32, #tpu.memory_space<vmem>>, vector<1x32x32xf32>
    %174 = vector.shape_cast %173 : vector<1x32x32xf32> to vector<32x32xf32>
    %c4_135 = arith.constant 4 : index
    %c0_136 = arith.constant 0 : index
    %c0_137 = arith.constant 0 : index
    %175 = vector.load %arg15[%c4_135, %c0_136, %c0_137] : memref<7x128x128xf32, #tpu.memory_space<vmem>>, vector<1x128x128xf32>
    %176 = vector.shape_cast %175 : vector<1x128x128xf32> to vector<128x128xf32>
    %cst_138 = arith.constant dense<0.000000e+00> : vector<32x128xf32>
    %177 = tpu.matmul %140, %176, %cst_138 {dimension_numbers = #tpu.dot_dimension_numbers<[1], [0], [0], [1], [0, 0, 1, 1], [], []>} : vector<32x128xf32>, vector<128x128xf32>, vector<32x128xf32> -> vector<32x128xf32>
    %cst_139 = arith.constant dense<0.000000e+00> : vector<32x128xf32>
    %178 = tpu.matmul %174, %177, %cst_139 {dimension_numbers = #tpu.dot_dimension_numbers<[1], [0], [0], [1], [0, 0, 1, 1], [], []>} : vector<32x32xf32>, vector<32x128xf32>, vector<32x128xf32> -> vector<32x128xf32>
    %179 = arith.addf %172, %178 : vector<32x128xf32>
    %c5_140 = arith.constant 5 : index
    %c0_141 = arith.constant 0 : index
    %c0_142 = arith.constant 0 : index
    %180 = vector.load %arg2[%c5_140, %c0_141, %c0_142] : memref<7x32x32xf32, #tpu.memory_space<vmem>>, vector<1x32x32xf32>
    %181 = vector.shape_cast %180 : vector<1x32x32xf32> to vector<32x32xf32>
    %c5_143 = arith.constant 5 : index
    %c0_144 = arith.constant 0 : index
    %c0_145 = arith.constant 0 : index
    %182 = vector.load %arg15[%c5_143, %c0_144, %c0_145] : memref<7x128x128xf32, #tpu.memory_space<vmem>>, vector<1x128x128xf32>
    %183 = vector.shape_cast %182 : vector<1x128x128xf32> to vector<128x128xf32>
    %cst_146 = arith.constant dense<0.000000e+00> : vector<32x128xf32>
    %184 = tpu.matmul %140, %183, %cst_146 {dimension_numbers = #tpu.dot_dimension_numbers<[1], [0], [0], [1], [0, 0, 1, 1], [], []>} : vector<32x128xf32>, vector<128x128xf32>, vector<32x128xf32> -> vector<32x128xf32>
    %cst_147 = arith.constant dense<0.000000e+00> : vector<32x128xf32>
    %185 = tpu.matmul %181, %184, %cst_147 {dimension_numbers = #tpu.dot_dimension_numbers<[1], [0], [0], [1], [0, 0, 1, 1], [], []>} : vector<32x32xf32>, vector<32x128xf32>, vector<32x128xf32> -> vector<32x128xf32>
    %186 = arith.addf %179, %185 : vector<32x128xf32>
    %c6_148 = arith.constant 6 : index
    %c0_149 = arith.constant 0 : index
    %c0_150 = arith.constant 0 : index
    %187 = vector.load %arg2[%c6_148, %c0_149, %c0_150] : memref<7x32x32xf32, #tpu.memory_space<vmem>>, vector<1x32x32xf32>
    %188 = vector.shape_cast %187 : vector<1x32x32xf32> to vector<32x32xf32>
    %c6_151 = arith.constant 6 : index
    %c0_152 = arith.constant 0 : index
    %c0_153 = arith.constant 0 : index
    %189 = vector.load %arg15[%c6_151, %c0_152, %c0_153] : memref<7x128x128xf32, #tpu.memory_space<vmem>>, vector<1x128x128xf32>
    %190 = vector.shape_cast %189 : vector<1x128x128xf32> to vector<128x128xf32>
    %cst_154 = arith.constant dense<0.000000e+00> : vector<32x128xf32>
    %191 = tpu.matmul %140, %190, %cst_154 {dimension_numbers = #tpu.dot_dimension_numbers<[1], [0], [0], [1], [0, 0, 1, 1], [], []>} : vector<32x128xf32>, vector<128x128xf32>, vector<32x128xf32> -> vector<32x128xf32>
    %cst_155 = arith.constant dense<0.000000e+00> : vector<32x128xf32>
    %192 = tpu.matmul %188, %191, %cst_155 {dimension_numbers = #tpu.dot_dimension_numbers<[1], [0], [0], [1], [0, 0, 1, 1], [], []>} : vector<32x32xf32>, vector<32x128xf32>, vector<32x128xf32> -> vector<32x128xf32>
    %193 = arith.addf %186, %192 : vector<32x128xf32>
    %c0_156 = arith.constant 0 : index
    %c0_157 = arith.constant 0 : index
    %194 = vector.load %arg17[%c0_156, %c0_157] : memref<1x128xf32, #tpu.memory_space<vmem>>, vector<1x128xf32>
    %195 = arith.addf %24, %193 : vector<32x128xf32>
    %196 = vector.broadcast %194 : vector<1x128xf32> to vector<32x128xf32>
    %197 = arith.mulf %196, %195 : vector<32x128xf32>
    %198 = arith.addf %0, %197 : vector<32x128xf32>
    %c0_158 = arith.constant 0 : index
    %c0_159 = arith.constant 0 : index
    %199 = vector.load %arg18[%c0_158, %c0_159] : memref<32x128xf32, #tpu.memory_space<vmem>>, vector<32x128xf32>
    tpu.vector_store %arg18[%c0_158, %c0_159], %198 {strides = array<i32>} : memref<32x128xf32, #tpu.memory_space<vmem>>, vector<32x128xf32>,
    return
  }
}

</mosaic_0001>

<llo_original>
// kernel: metanext_up_stage0_forward.3
$region0: #{metanext_up_stage0_forward.3}
  #allocation0 [shape = 'u32[]', space=smem, size = 0x4, offset = 0x4, fixed_abs, tag = 'smem constant byte address 0x4 - core index']
  #allocation1 [shape = 'u32[72,128]{1,0:T(1,128)}', space=vmem, size = 0x9000, scoped, tag = 'internal scratch']
  %s0 = inlined_call_operand.vmem [shape: f32[16,64], index: 0, kind: input, shape index: {}]
  %s1 = inlined_call_operand.hbm [shape: f32[64,64], index: 1, kind: input, shape index: {}]
  %s2 = inlined_call_operand.vmem [shape: f32[1,64], index: 2, kind: input, shape index: {}]
  %s3 = inlined_call_operand.vmem [shape: f32[1,64], index: 3, kind: input, shape index: {}]
  %s4 = inlined_call_operand.hbm [shape: f32[2,64,128], index: 4, kind: input, shape index: {}]
  %s5 = inlined_call_operand.vmem [shape: f32[2,1,128], index: 5, kind: input, shape index: {}]
  %s6 = inlined_call_operand.vmem [shape: f32[2,32,16], index: 6, kind: input, shape index: {}]
  %s7 = inlined_call_operand.vmem [shape: f32[32,128], index: 7, kind: output, shape index: {}]
  %s8 = sld [smem:[#allocation0]]
  $region46: #{metanext_up_stage0_forward.3} parent=0
    _
  %s10 = ssub.s32 1, %s8
  %s11 = scalar_select 0, %s10, %s8
  $region1: #{metanext_up_stage0_forward.3} parent=0
    #allocation2 [shape = 'u8[32768]{0}', space=vmem, size = 0x8000, scoped, tag = 'input window, operand 1, single buffered']
    #allocation3 [shape = 's32[1]{0}', space=sflag, size = 0x4, scoped, tag = 'scoped memory for metanext_up_stage0_forward.3']
    #allocation4 [shape = 'u8[65536]{0}', space=vmem, size = 0x10000, scoped, tag = 'input window, operand 4, single buffered']
    #allocation5 [shape = 's32[1]{0}', space=sflag, size = 0x4, scoped, tag = 'scoped memory for metanext_up_stage0_forward.3']
    %12 = vsyncpa [#allocation3], 0
    %13 = vsyncpa [#allocation5], 0
    // Predicated region
    $region2: #{metanext_up_stage0_forward.3} parent=1 // pred_check
      _
    $region3: #{metanext_up_stage0_forward.3} parent=1 // pred_check_branch
      %15 = sbr.rel (0) target = $region5
    $region4: #{metanext_up_stage0_forward.3} parent=1 // pred_region
      _
    $region5: #{metanext_up_stage0_forward.3} parent=1 // pred_fallthru
      _
    // Predicated region
    $region6: #{metanext_up_stage0_forward.3} parent=1 // pred_check
      _
    $region7: #{metanext_up_stage0_forward.3} parent=1 // pred_check_branch
      %17 = sbr.rel (0) target = $region9
    $region8: #{metanext_up_stage0_forward.3} parent=1 // pred_region
      %19 = vsyncadd [#allocation3], 0
      %s20 = sshll.u32 %s1, 4
      %s21 = int_to_ptr.hbm [resolvable:$true] %s20
      %s22 = sshll.u32 [#allocation2], 4
      %s23 = int_to_ptr.vmem [resolvable:$true] %s22
      %28 = dma.hbm_to_vmem [thread:$0]  %s21, 1024, %s23, [#allocation3], 128, 128, 8
    $region9: #{metanext_up_stage0_forward.3} parent=1 // pred_fallthru
      _
    // Predicated region
    $region10: #{metanext_up_stage0_forward.3} parent=1 // pred_check
      _
    $region11: #{metanext_up_stage0_forward.3} parent=1 // pred_check_branch
      %30 = sbr.rel (0) target = $region13
    $region12: #{metanext_up_stage0_forward.3} parent=1 // pred_region
      _
    $region13: #{metanext_up_stage0_forward.3} parent=1 // pred_fallthru
      _
    // Predicated region
    $region14: #{metanext_up_stage0_forward.3} parent=1 // pred_check
      _
    $region15: #{metanext_up_stage0_forward.3} parent=1 // pred_check_branch
      %32 = sbr.rel (0) target = $region17
    $region16: #{metanext_up_stage0_forward.3} parent=1 // pred_region
      _
    $region17: #{metanext_up_stage0_forward.3} parent=1 // pred_fallthru
      _
    // Predicated region
    $region18: #{metanext_up_stage0_forward.3} parent=1 // pred_check
      _
    $region19: #{metanext_up_stage0_forward.3} parent=1 // pred_check_branch
      %34 = sbr.rel (0) target = $region21
    $region20: #{metanext_up_stage0_forward.3} parent=1 // pred_region
      %36 = vsyncadd [#allocation5], 0
      %s37 = sshll.u32 %s4, 4
      %s38 = int_to_ptr.hbm [resolvable:$true] %s37
      %s39 = sshll.u32 [#allocation4], 4
      %s40 = int_to_ptr.vmem [resolvable:$true] %s39
      %45 = dma.hbm_to_vmem [thread:$0]  %s38, 2048, %s40, [#allocation5], 128, 128, 8
    $region21: #{metanext_up_stage0_forward.3} parent=1 // pred_fallthru
      _
    // Predicated region
    $region22: #{metanext_up_stage0_forward.3} parent=1 // pred_check
      _
    $region23: #{metanext_up_stage0_forward.3} parent=1 // pred_check_branch
      %47 = sbr.rel (0) target = $region25
    $region24: #{metanext_up_stage0_forward.3} parent=1 // pred_region
      _
    $region25: #{metanext_up_stage0_forward.3} parent=1 // pred_fallthru
      _
    // Predicated region
    $region26: #{metanext_up_stage0_forward.3} parent=1 // pred_check
      _
    $region27: #{metanext_up_stage0_forward.3} parent=1 // pred_check_branch
      %49 = sbr.rel (0) target = $region29
    $region28: #{metanext_up_stage0_forward.3} parent=1 // pred_region
      _
    $region29: #{metanext_up_stage0_forward.3} parent=1 // pred_fallthru
      _
    // Predicated region
    $region30: #{metanext_up_stage0_forward.3} parent=1 // pred_check
      _
    $region31: #{metanext_up_stage0_forward.3} parent=1 // pred_check_branch
      %51 = sbr.rel (0) target = $region33
    $region32: #{metanext_up_stage0_forward.3} parent=1 // pred_region
      %53 = dma.done [#allocation3], 1024
    $region33: #{metanext_up_stage0_forward.3} parent=1 // pred_fallthru
      _
    // Predicated region
    $region34: #{metanext_up_stage0_forward.3} parent=1 // pred_check
      _
    $region35: #{metanext_up_stage0_forward.3} parent=1 // pred_check_branch
      %55 = sbr.rel (0) target = $region37
    $region36: #{metanext_up_stage0_forward.3} parent=1 // pred_region
      %57 = dma.done [#allocation5], 2048
    $region37: #{metanext_up_stage0_forward.3} parent=1 // pred_fallthru
      _
    %v58 = vld [vmem:[%s0] sm:$0xff]
    %v59 = vld [vmem:[%s0 + $0x8] sm:$0xff]
    %v60 = vld [vmem:[#allocation2] sm:$0xff]
    %v61 = vld [vmem:[#allocation2 + $0x8] sm:$0xff]
    %v62 = vld [vmem:[#allocation2 + $0x10] sm:$0xff]
    %v63 = vld [vmem:[#allocation2 + $0x18] sm:$0xff]
    %v64 = vld [vmem:[#allocation2 + $0x20] sm:$0xff]
    %v65 = vld [vmem:[#allocation2 + $0x28] sm:$0xff]
    %v66 = vld [vmem:[#allocation2 + $0x30] sm:$0xff]
    %v67 = vld [vmem:[#allocation2 + $0x38] sm:$0xff]
    %v68 = vld [vmem:[%s2] sm:$0x1]
    %v69 = vld [vmem:[%s3] sm:$0x1]
    %vm70 = vcmask 523264
    %v71 = vsel %vm70, %v58, 0.0
    %v72 = vsel %vm70, %v59, 0.0
    %v73 = vadd.f32 %v71, %v72
    %v74 = vrot.slane %v73, 4
    %v75 = vadd.f32 %v73, %v74
    %v76 = vrot.slane %v75, 2
    %v77 = vadd.f32 %v75, %v76
    %v78 = vrot.slane %v77, 1
    %v79 = vadd.f32 %v77, %v78
    %v80 = vmul.f32 %v58, %v58
    %v81 = vmul.f32 %v59, %v59
    %v82 = vsel %vm70, %v80, 0.0
    %v83 = vsel %vm70, %v81, 0.0
    %v84 = vadd.f32 %v82, %v83
    %v85 = vrot.slane %v84, 4
    %v86 = vadd.f32 %v84, %v85
    %v87 = vrot.slane %v86, 2
    %v88 = vadd.f32 %v86, %v87
    %v89 = vrot.slane %v88, 1
    %v90 = vadd.f32 %v88, %v89
    %v92 = vsel %vm70, %v79, 0
    %94 = vmatpush.msra.mxu0 0.0
    %95 = vmatpush.msra.mxu0 0.0
    %96 = vmatpush.msra.mxu0 0.0
    %97 = vmatpush.msra.mxu0 0.0
    %98 = vmatpush.msra.mxu0 0.0
    %99 = vmatpush.msra.mxu0 0.0
    %100 = vmatpush.msra.mxu0 0.0
    %101 = vmatpush.msra.mxu0 0.0
    %102 = vmatpush.msra.mxu0 %v67
    %103 = vmatpush.msra.mxu0 %v66
    %104 = vmatpush.msra.mxu0 %v65
    %105 = vmatpush.msra.mxu0 %v64
    %106 = vmatpush.msra.mxu0 %v63
    %107 = vmatpush.msra.mxu0 %v62
    %108 = vmatpush.msra.mxu0 %v61
    %109 = vmatpush.msra.mxu0 %v60
    %110 = vmatmul.f32.gmra.mxu0 %v92
    %v111 = vpop.f32.mrf.mxu0
    %v112 = vadd.f32 0.0, %v111
    %113 = vdwg.mxu0
    %v115 = vsel %vm70, %v90, 0
    %117 = vmatpush.msra.mxu0 0.0
    %118 = vmatpush.msra.mxu0 0.0
    %119 = vmatpush.msra.mxu0 0.0
    %120 = vmatpush.msra.mxu0 0.0
    %121 = vmatpush.msra.mxu0 0.0
    %122 = vmatpush.msra.mxu0 0.0
    %123 = vmatpush.msra.mxu0 0.0
    %124 = vmatpush.msra.mxu0 0.0
    %125 = vmatpush.msra.mxu0 %v67
    %126 = vmatpush.msra.mxu0 %v66
    %127 = vmatpush.msra.mxu0 %v65
    %128 = vmatpush.msra.mxu0 %v64
    %129 = vmatpush.msra.mxu0 %v63
    %130 = vmatpush.msra.mxu0 %v62
    %131 = vmatpush.msra.mxu0 %v61
    %132 = vmatpush.msra.mxu0 %v60
    %133 = vmatmul.f32.gmra.mxu0 %v115
    %v134 = vpop.f32.mrf.mxu0
    %v135 = vadd.f32 0.0, %v134
    %136 = vdwg.mxu0
    %v137 = vmul.f32 %v112, %v112
    %v138 = vsub.f32 %v135, %v137
    %v139 = vmax.f32 %v138, 0.0
    %v140 = vadd.f32 %v139, 1e-05
    %v141 = vrsqrt.pop %v140
    %v142 = vmul.f32 %v141, %v140
    %v143 = vmul.f32 %v142, %v141
    %v144 = vmul.f32 0.5, %v143
    %v145 = vsub.f32 1.5, %v144
    %v146 = vmul.f32 %v141, %v145
    %vm147 = vweird.f32 %v140
    %vm148 = vweird.f32 %v141
    %vm149 = vmor %vm147, %vm148
    %v150 = vsel %vm149, %v141, %v146
    %v151 = vperm.slane %v112, 0
    %v152 = vsub.f32 %v58, %v151
    %v153 = vsub.f32 %v59, %v151
    %v154 = vmul.f32 %v150, %v68
    %v155 = vperm.slane %v154, 0
    %v156 = vmul.f32 %v152, %v155
    %v157 = vmul.f32 %v153, %v155
    %v159 = vperm.slane %v69, 0
    %v161 = vadd.f32 %v156, %v159
    %v162 = vadd.f32 %v157, %v159
    %v163 = vld [vmem:[#allocation4] sm:$0xff]
    %v164 = vld [vmem:[#allocation4 + $0x8] sm:$0xff]
    %v165 = vld [vmem:[#allocation4 + $0x10] sm:$0xff]
    %v166 = vld [vmem:[#allocation4 + $0x18] sm:$0xff]
    %v167 = vld [vmem:[#allocation4 + $0x20] sm:$0xff]
    %v168 = vld [vmem:[#allocation4 + $0x28] sm:$0xff]
    %v169 = vld [vmem:[#allocation4 + $0x30] sm:$0xff]
    %v170 = vld [vmem:[#allocation4 + $0x38] sm:$0xff]
    %v171 = vld [vmem:[%s5] sm:$0x1]
    %v173 = vperm.slane %v171, 0
    %v176 = vsel %vm70, %v161, 0
    %v179 = vsel %vm70, %v162, 0
    %181 = vmatpush.msra.mxu0 0.0
    %182 = vmatpush.msra.mxu0 0.0
    %183 = vmatpush.msra.mxu0 0.0
    %184 = vmatpush.msra.mxu0 0.0
    %185 = vmatpush.msra.mxu0 0.0
    %186 = vmatpush.msra.mxu0 0.0
    %187 = vmatpush.msra.mxu0 0.0
    %188 = vmatpush.msra.mxu0 0.0
    %189 = vmatpush.msra.mxu0 %v170
    %190 = vmatpush.msra.mxu0 %v169
    %191 = vmatpush.msra.mxu0 %v168
    %192 = vmatpush.msra.mxu0 %v167
    %193 = vmatpush.msra.mxu0 %v166
    %194 = vmatpush.msra.mxu0 %v165
    %195 = vmatpush.msra.mxu0 %v164
    %196 = vmatpush.msra.mxu0 %v163
    %197 = vmatmul.f32.gmra.mxu0 %v176
    %v198 = vpop.f32.mrf.mxu0
    %v199 = vadd.f32 %v173, %v198
    %200 = vmatmul.f32.gmra.mxu0 %v179
    %v201 = vpop.f32.mrf.mxu0
    %v202 = vadd.f32 %v173, %v201
    %203 = vdwg.mxu0
    %s204 = scalar_lea.vmem [#allocation4], 64
    %v205 = vld [vmem:[%s204] sm:$0xff]
    %v206 = vld [vmem:[%s204 + $0x8] sm:$0xff]
    %v207 = vld [vmem:[%s204 + $0x10] sm:$0xff]
    %v208 = vld [vmem:[%s204 + $0x18] sm:$0xff]
    %v209 = vld [vmem:[%s204 + $0x20] sm:$0xff]
    %v210 = vld [vmem:[%s204 + $0x28] sm:$0xff]
    %v211 = vld [vmem:[%s204 + $0x30] sm:$0xff]
    %v212 = vld [vmem:[%s204 + $0x38] sm:$0xff]
    %s213 = scalar_lea.vmem %s5, 1
    %v214 = vld [vmem:[%s213] sm:$0x1]
    %v216 = vperm.slane %v214, 0
    %218 = vmatpush.msra.mxu0 0.0
    %219 = vmatpush.msra.mxu0 0.0
    %220 = vmatpush.msra.mxu0 0.0
    %221 = vmatpush.msra.mxu0 0.0
    %222 = vmatpush.msra.mxu0 0.0
    %223 = vmatpush.msra.mxu0 0.0
    %224 = vmatpush.msra.mxu0 0.0
    %225 = vmatpush.msra.mxu0 0.0
    %226 = vmatpush.msra.mxu0 %v212
    %227 = vmatpush.msra.mxu0 %v211
    %228 = vmatpush.msra.mxu0 %v210
    %229 = vmatpush.msra.mxu0 %v209
    %230 = vmatpush.msra.mxu0 %v208
    %231 = vmatpush.msra.mxu0 %v207
    %232 = vmatpush.msra.mxu0 %v206
    %233 = vmatpush.msra.mxu0 %v205
    %234 = vmatmul.f32.gmra.mxu0 %v176
    %v235 = vpop.f32.mrf.mxu0
    %v236 = vadd.f32 %v216, %v235
    %237 = vmatmul.f32.gmra.mxu0 %v179
    %v238 = vpop.f32.mrf.mxu0
    %v239 = vadd.f32 %v216, %v238
    %240 = vdwg.mxu0
    %v241 = vld [vmem:[%s6] sm:$0xff]
    %v242 = vld [vmem:[%s6 + $0x8] sm:$0xff]
    %v243 = vld [vmem:[%s6 + $0x10] sm:$0xff]
    %v244 = vld [vmem:[%s6 + $0x18] sm:$0xff]
    %s245 = scalar_lea.vmem %s6, 32
    %v246 = vld [vmem:[%s245] sm:$0xff]
    %v247 = vld [vmem:[%s245 + $0x8] sm:$0xff]
    %v248 = vld [vmem:[%s245 + $0x10] sm:$0xff]
    %v249 = vld [vmem:[%s245 + $0x18] sm:$0xff]
    %vm250 = vcmask 130048
    %v252 = vsel %vm250, %v246, 0
    %v255 = vsel %vm250, %v247, 0
    %v258 = vsel %vm250, %v248, 0
    %v261 = vsel %vm250, %v249, 0
    %263 = vmatpush.msra.mxu0 0.0
    %264 = vmatpush.msra.mxu0 0.0
    %265 = vmatpush.msra.mxu0 0.0
    %266 = vmatpush.msra.mxu0 0.0
    %267 = vmatpush.msra.mxu0 0.0
    %268 = vmatpush.msra.mxu0 0.0
    %269 = vmatpush.msra.mxu0 0.0
    %270 = vmatpush.msra.mxu0 0.0
    %271 = vmatpush.msra.mxu0 0.0
    %272 = vmatpush.msra.mxu0 0.0
    %273 = vmatpush.msra.mxu0 0.0
    %274 = vmatpush.msra.mxu0 0.0
    %275 = vmatpush.msra.mxu0 0.0
    %276 = vmatpush.msra.mxu0 0.0
    %277 = vmatpush.msra.mxu0 %v239
    %278 = vmatpush.msra.mxu0 %v236
    %279 = vmatmul.f32.gmra.mxu0 %v252
    %v280 = vpop.f32.mrf.mxu0
    %v281 = vadd.f32 0.0, %v280
    %282 = vmatmul.f32.gmra.mxu0 %v255
    %v283 = vpop.f32.mrf.mxu0
    %v284 = vadd.f32 0.0, %v283
    %285 = vmatmul.f32.gmra.mxu0 %v258
    %v286 = vpop.f32.mrf.mxu0
    %v287 = vadd.f32 0.0, %v286
    %288 = vmatmul.f32.gmra.mxu0 %v261
    %v289 = vpop.f32.mrf.mxu0
    %v290 = vadd.f32 0.0, %v289
    %291 = vdwg.mxu0
    %v293 = vsel %vm250, %v241, 0
    %v296 = vsel %vm250, %v242, 0
    %v299 = vsel %vm250, %v243, 0
    %v302 = vsel %vm250, %v244, 0
    %304 = vmatpush.msra.mxu0 0.0
    %305 = vmatpush.msra.mxu0 0.0
    %306 = vmatpush.msra.mxu0 0.0
    %307 = vmatpush.msra.mxu0 0.0
    %308 = vmatpush.msra.mxu0 0.0
    %309 = vmatpush.msra.mxu0 0.0
    %310 = vmatpush.msra.mxu0 0.0
    %311 = vmatpush.msra.mxu0 0.0
    %312 = vmatpush.msra.mxu0 0.0
    %313 = vmatpush.msra.mxu0 0.0
    %314 = vmatpush.msra.mxu0 0.0
    %315 = vmatpush.msra.mxu0 0.0
    %316 = vmatpush.msra.mxu0 0.0
    %317 = vmatpush.msra.mxu0 0.0
    %318 = vmatpush.msra.mxu0 %v202
    %319 = vmatpush.msra.mxu0 %v199
    %320 = vmatmul.f32.gmra.mxu0 %v293
    %v321 = vpop.f32.mrf.mxu0
    %v322 = vadd.f32 %v281, %v321
    %323 = vmatmul.f32.gmra.mxu0 %v296
    %v324 = vpop.f32.mrf.mxu0
    %v325 = vadd.f32 %v284, %v324
    %326 = vmatmul.f32.gmra.mxu0 %v299
    %v327 = vpop.f32.mrf.mxu0
    %v328 = vadd.f32 %v287, %v327
    %329 = vmatmul.f32.gmra.mxu0 %v302
    %v330 = vpop.f32.mrf.mxu0
    %v331 = vadd.f32 %v290, %v330
    %332 = vdwg.mxu0
    %333 = vst [vmem:[%s7] sm:$0xff] %v322
    %334 = vst [vmem:[%s7 + $0x8] sm:$0xff] %v325
    %335 = vst [vmem:[%s7 + $0x10] sm:$0xff] %v328
    %336 = vst [vmem:[%s7 + $0x18] sm:$0xff] %v331
    // Predicated region
    $region38: #{metanext_up_stage0_forward.3} parent=1 // pred_check
      _
    $region39: #{metanext_up_stage0_forward.3} parent=1 // pred_check_branch
      %338 = sbr.rel (0) target = $region41
    $region40: #{metanext_up_stage0_forward.3} parent=1 // pred_region
      _
    $region41: #{metanext_up_stage0_forward.3} parent=1 // pred_fallthru
      _
    // Predicated region
    $region42: #{metanext_up_stage0_forward.3} parent=1 // pred_check
      _
    $region43: #{metanext_up_stage0_forward.3} parent=1 // pred_check_branch
      %340 = sbr.rel (0) target = $region45
    $region44: #{metanext_up_stage0_forward.3} parent=1 // pred_region
      _
    $region45: #{metanext_up_stage0_forward.3} parent=1 // pred_fallthru
      _
    %341 = vsyncpa [#allocation3], 1
    %342 = vsyncpa [#allocation5], 1

// kernel: metanext_up_stage0_forward.5
$region0: #{metanext_up_stage0_forward.5}
  #allocation0 [shape = 'u32[]', space=smem, size = 0x4, offset = 0x4, fixed_abs, tag = 'smem constant byte address 0x4 - core index']
  #allocation1 [shape = 'u32[72,128]{1,0:T(1,128)}', space=vmem, size = 0x9000, scoped, tag = 'internal scratch']
  %s0 = inlined_call_operand.vmem [shape: f32[32,128], index: 0, kind: input, shape index: {}]
  %s1 = inlined_call_operand.hbm [shape: f32[128,128], index: 1, kind: input, shape index: {}]
  %s2 = inlined_call_operand.vmem [shape: f32[7,32,32], index: 2, kind: input, shape index: {}]
  %s3 = inlined_call_operand.vmem [shape: f32[1,128], index: 3, kind: input, shape index: {}]
  %s4 = inlined_call_operand.hbm [shape: f32[1,128], index: 4, kind: input, shape index: {}]
  %s5 = inlined_call_operand.hbm [shape: f32[7,128,128], index: 5, kind: input, shape index: {}]
  %s6 = inlined_call_operand.hbm [shape: f32[1,128], index: 6, kind: input, shape index: {}]
  %s7 = inlined_call_operand.hbm [shape: f32[1,128], index: 7, kind: input, shape index: {}]
  %s8 = inlined_call_operand.hbm [shape: f32[1,128], index: 8, kind: input, shape index: {}]
  %s9 = inlined_call_operand.hbm [shape: f32[128,512], index: 9, kind: input, shape index: {}]
  %s10 = inlined_call_operand.vmem [shape: f32[1,512], index: 10, kind: input, shape index: {}]
  %s11 = inlined_call_operand.hbm [shape: f32[256,128], index: 11, kind: input, shape index: {}]
  %s12 = inlined_call_operand.hbm [shape: f32[1,128], index: 12, kind: input, shape index: {}]
  %s13 = inlined_call_operand.hbm [shape: f32[1,128], index: 13, kind: input, shape index: {}]
  %s14 = inlined_call_operand.hbm [shape: f32[1,128], index: 14, kind: input, shape index: {}]
  %s15 = inlined_call_operand.hbm [shape: f32[7,128,128], index: 15, kind: input, shape index: {}]
  %s16 = inlined_call_operand.hbm [shape: f32[1,128], index: 16, kind: input, shape index: {}]
  %s17 = inlined_call_operand.hbm [shape: f32[1,128], index: 17, kind: input, shape index: {}]
  %s18 = inlined_call_operand.vmem [shape: f32[32,128], index: 18, kind: output, shape index: {}]
  %s19 = sld [smem:[#allocation0]]
  $region138: #{metanext_up_stage0_forward.5} parent=0
    _
  %s21 = ssub.s32 1, %s19
  %s22 = scalar_select 0, %s21, %s19
  $region1: #{metanext_up_stage0_forward.5} parent=0
    #allocation2 [shape = 'u8[65536]{0}', space=vmem, size = 0x10000, scoped, tag = 'input window, operand 1, single buffered']
    #allocation3 [shape = 's32[1]{0}', space=sflag, size = 0x4, scoped, tag = 'scoped memory for metanext_up_stage0_forward.5']
    #allocation4 [shape = 'u8[512]{0}', space=vmem, size = 0x400, scoped, tag = 'input window, operand 4, single buffered']
    #allocation5 [shape = 's32[1]{0}', space=sflag, size = 0x4, scoped, tag = 'scoped memory for metanext_up_stage0_forward.5']
    #allocation6 [shape = 'u8[458752]{0}', space=vmem, size = 0x70000, scoped, tag = 'input window, operand 5, single buffered']
    #allocation7 [shape = 'u8[512]{0}', space=vmem, size = 0x400, scoped, tag = 'input window, operand 6, single buffered']
    #allocation8 [shape = 's32[1]{0}', space=sflag, size = 0x4, scoped, tag = 'scoped memory for metanext_up_stage0_forward.5']
    #allocation9 [shape = 'u8[512]{0}', space=vmem, size = 0x400, scoped, tag = 'input window, operand 7, single buffered']
    #allocation10 [shape = 'u8[512]{0}', space=vmem, size = 0x400, scoped, tag = 'input window, operand 8, single buffered']
    #allocation11 [shape = 's32[1]{0}', space=sflag, size = 0x4, scoped, tag = 'scoped memory for metanext_up_stage0_forward.5']
    #allocation12 [shape = 'u8[262144]{0}', space=vmem, size = 0x40000, scoped, tag = 'input window, operand 9, single buffered']
    #allocation13 [shape = 'u8[131072]{0}', space=vmem, size = 0x20000, scoped, tag = 'input window, operand 11, single buffered']
    #allocation14 [shape = 's32[1]{0}', space=sflag, size = 0x4, scoped, tag = 'scoped memory for metanext_up_stage0_forward.5']
    #allocation15 [shape = 'u8[512]{0}', space=vmem, size = 0x400, scoped, tag = 'input window, operand 12, single buffered']
    #allocation16 [shape = 'u8[512]{0}', space=vmem, size = 0x400, scoped, tag = 'input window, operand 13, single buffered']
    #allocation17 [shape = 's32[1]{0}', space=sflag, size = 0x4, scoped, tag = 'scoped memory for metanext_up_stage0_forward.5']
    #allocation18 [shape = 'u8[512]{0}', space=vmem, size = 0x400, scoped, tag = 'input window, operand 14, single buffered']
    #allocation19 [shape = 'u8[458752]{0}', space=vmem, size = 0x70000, scoped, tag = 'input window, operand 15, single buffered']
    #allocation20 [shape = 's32[1]{0}', space=sflag, size = 0x4, scoped, tag = 'scoped memory for metanext_up_stage0_forward.5']
    #allocation21 [shape = 'u8[512]{0}', space=vmem, size = 0x400, scoped, tag = 'input window, operand 16, single buffered']
    #allocation22 [shape = 'u8[512]{0}', space=vmem, size = 0x400, scoped, tag = 'input window, operand 17, single buffered']
    #allocation23 [shape = 's32[1]{0}', space=sflag, size = 0x4, scoped, tag = 'scoped memory for metanext_up_stage0_forward.5']
    %23 = vsyncpa [#allocation3], 0
    %24 = vsyncpa [#allocation5], 0
    %25 = vsyncpa [#allocation8], 0
    %26 = vsyncpa [#allocation11], 0
    %27 = vsyncpa [#allocation14], 0
    %28 = vsyncpa [#allocation17], 0
    %29 = vsyncpa [#allocation20], 0
    %30 = vsyncpa [#allocation23], 0
    // Predicated region
    $region2: #{metanext_up_stage0_forward.5} parent=1 // pred_check
      _
    $region3: #{metanext_up_stage0_forward.5} parent=1 // pred_check_branch
      %32 = sbr.rel (0) target = $region5
    $region4: #{metanext_up_stage0_forward.5} parent=1 // pred_region
      _
    $region5: #{metanext_up_stage0_forward.5} parent=1 // pred_fallthru
      _
    // Predicated region
    $region6: #{metanext_up_stage0_forward.5} parent=1 // pred_check
      _
    $region7: #{metanext_up_stage0_forward.5} parent=1 // pred_check_branch
      %34 = sbr.rel (0) target = $region9
    $region8: #{metanext_up_stage0_forward.5} parent=1 // pred_region
      %36 = vsyncadd [#allocation3], 0
      %s37 = sshll.u32 %s1, 4
      %s38 = int_to_ptr.hbm [resolvable:$true] %s37
      %s39 = sshll.u32 [#allocation2], 4
      %s40 = int_to_ptr.vmem [resolvable:$true] %s39
      %45 = dma.hbm_to_vmem [thread:$0]  %s38, 2048, %s40, [#allocation3], 128, 128, 8
    $region9: #{metanext_up_stage0_forward.5} parent=1 // pred_fallthru
      _
    // Predicated region
    $region10: #{metanext_up_stage0_forward.5} parent=1 // pred_check
      _
    $region11: #{metanext_up_stage0_forward.5} parent=1 // pred_check_branch
      %47 = sbr.rel (0) target = $region13
    $region12: #{metanext_up_stage0_forward.5} parent=1 // pred_region
      _
    $region13: #{metanext_up_stage0_forward.5} parent=1 // pred_fallthru
      _
    // Predicated region
    $region14: #{metanext_up_stage0_forward.5} parent=1 // pred_check
      _
    $region15: #{metanext_up_stage0_forward.5} parent=1 // pred_check_branch
      %49 = sbr.rel (0) target = $region17
    $region16: #{metanext_up_stage0_forward.5} parent=1 // pred_region
      _
    $region17: #{metanext_up_stage0_forward.5} parent=1 // pred_fallthru
      _
    // Predicated region
    $region18: #{metanext_up_stage0_forward.5} parent=1 // pred_check
      _
    $region19: #{metanext_up_stage0_forward.5} parent=1 // pred_check_branch
      %51 = sbr.rel (0) target = $region21
    $region20: #{metanext_up_stage0_forward.5} parent=1 // pred_region
      %53 = vsyncadd [#allocation5], 0
      %s55 = sshll.u32 %s4, 4
      %s56 = int_to_ptr.hbm [resolvable:$true] %s55
      %s57 = sshll.u32 [#allocation4], 4
      %s58 = int_to_ptr.vmem [resolvable:$true] %s57
      %60 = dma.hbm_to_vmem [thread:$0]  %s56, 16, %s58, [#allocation5]
    $region21: #{metanext_up_stage0_forward.5} parent=1 // pred_fallthru
      _
    // Predicated region
    $region22: #{metanext_up_stage0_forward.5} parent=1 // pred_check
      _
    $region23: #{metanext_up_stage0_forward.5} parent=1 // pred_check_branch
      %62 = sbr.rel (0) target = $region25
    $region24: #{metanext_up_stage0_forward.5} parent=1 // pred_region
      %64 = vsyncadd [#allocation5], 0
      %s65 = sshll.u32 %s5, 4
      %s66 = int_to_ptr.hbm [resolvable:$true] %s65
      %s67 = sshll.u32 [#allocation6], 4
      %s68 = int_to_ptr.vmem [resolvable:$true] %s67
      %73 = dma.hbm_to_vmem [thread:$0]  %s66, 14336, %s68, [#allocation5], 128, 128, 8
    $region25: #{metanext_up_stage0_forward.5} parent=1 // pred_fallthru
      _
    // Predicated region
    $region26: #{metanext_up_stage0_forward.5} parent=1 // pred_check
      _
    $region27: #{metanext_up_stage0_forward.5} parent=1 // pred_check_branch
      %75 = sbr.rel (0) target = $region29
    $region28: #{metanext_up_stage0_forward.5} parent=1 // pred_region
      %77 = vsyncadd [#allocation8], 0
      %s79 = sshll.u32 %s6, 4
      %s80 = int_to_ptr.hbm [resolvable:$true] %s79
      %s81 = sshll.u32 [#allocation7], 4
      %s82 = int_to_ptr.vmem [resolvable:$true] %s81
      %84 = dma.hbm_to_vmem [thread:$0]  %s80, 16, %s82, [#allocation8]
    $region29: #{metanext_up_stage0_forward.5} parent=1 // pred_fallthru
      _
    // Predicated region
    $region30: #{metanext_up_stage0_forward.5} parent=1 // pred_check
      _
    $region31: #{metanext_up_stage0_forward.5} parent=1 // pred_check_branch
      %86 = sbr.rel (0) target = $region33
    $region32: #{metanext_up_stage0_forward.5} parent=1 // pred_region
      %88 = vsyncadd [#allocation8], 0
      %s90 = sshll.u32 %s7, 4
      %s91 = int_to_ptr.hbm [resolvable:$true] %s90
      %s92 = sshll.u32 [#allocation9], 4
      %s93 = int_to_ptr.vmem [resolvable:$true] %s92
      %95 = dma.hbm_to_vmem [thread:$0]  %s91, 16, %s93, [#allocation8]
    $region33: #{metanext_up_stage0_forward.5} parent=1 // pred_fallthru
      _
    // Predicated region
    $region34: #{metanext_up_stage0_forward.5} parent=1 // pred_check
      _
    $region35: #{metanext_up_stage0_forward.5} parent=1 // pred_check_branch
      %97 = sbr.rel (0) target = $region37
    $region36: #{metanext_up_stage0_forward.5} parent=1 // pred_region
      %99 = vsyncadd [#allocation11], 0
      %s101 = sshll.u32 %s8, 4
      %s102 = int_to_ptr.hbm [resolvable:$true] %s101
      %s103 = sshll.u32 [#allocation10], 4
      %s104 = int_to_ptr.vmem [resolvable:$true] %s103
      %106 = dma.hbm_to_vmem [thread:$0]  %s102, 16, %s104, [#allocation11]
    $region37: #{metanext_up_stage0_forward.5} parent=1 // pred_fallthru
      _
    // Predicated region
    $region38: #{metanext_up_stage0_forward.5} parent=1 // pred_check
      _
    $region39: #{metanext_up_stage0_forward.5} parent=1 // pred_check_branch
      %108 = sbr.rel (0) target = $region41
    $region40: #{metanext_up_stage0_forward.5} parent=1 // pred_region
      %110 = vsyncadd [#allocation11], 0
      %s111 = sshll.u32 %s9, 4
      %s112 = int_to_ptr.hbm [resolvable:$true] %s111
      %s113 = sshll.u32 [#allocation12], 4
      %s114 = int_to_ptr.vmem [resolvable:$true] %s113
      %119 = dma.hbm_to_vmem [thread:$0]  %s112, 8192, %s114, [#allocation11], 512, 512, 32
    $region41: #{metanext_up_stage0_forward.5} parent=1 // pred_fallthru
      _
    // Predicated region
    $region42: #{metanext_up_stage0_forward.5} parent=1 // pred_check
      _
    $region43: #{metanext_up_stage0_forward.5} parent=1 // pred_check_branch
      %121 = sbr.rel (0) target = $region45
    $region44: #{metanext_up_stage0_forward.5} parent=1 // pred_region
      _
    $region45: #{metanext_up_stage0_forward.5} parent=1 // pred_fallthru
      _
    // Predicated region
    $region46: #{metanext_up_stage0_forward.5} parent=1 // pred_check
      _
    $region47: #{metanext_up_stage0_forward.5} parent=1 // pred_check_branch
      %123 = sbr.rel (0) target = $region49
    $region48: #{metanext_up_stage0_forward.5} parent=1 // pred_region
      %125 = vsyncadd [#allocation14], 0
      %s126 = sshll.u32 %s11, 4
      %s127 = int_to_ptr.hbm [resolvable:$true] %s126
      %s128 = sshll.u32 [#allocation13], 4
      %s129 = int_to_ptr.vmem [resolvable:$true] %s128
      %134 = dma.hbm_to_vmem [thread:$0]  %s127, 4096, %s129, [#allocation14], 128, 128, 8
    $region49: #{metanext_up_stage0_forward.5} parent=1 // pred_fallthru
      _
    // Predicated region
    $region50: #{metanext_up_stage0_forward.5} parent=1 // pred_check
      _
    $region51: #{metanext_up_stage0_forward.5} parent=1 // pred_check_branch
      %136 = sbr.rel (0) target = $region53
    $region52: #{metanext_up_stage0_forward.5} parent=1 // pred_region
      %138 = vsyncadd [#allocation14], 0
      %s140 = sshll.u32 %s12, 4
      %s141 = int_to_ptr.hbm [resolvable:$true] %s140
      %s142 = sshll.u32 [#allocation15], 4
      %s143 = int_to_ptr.vmem [resolvable:$true] %s142
      %145 = dma.hbm_to_vmem [thread:$0]  %s141, 16, %s143, [#allocation14]
    $region53: #{metanext_up_stage0_forward.5} parent=1 // pred_fallthru
      _
    // Predicated region
    $region54: #{metanext_up_stage0_forward.5} parent=1 // pred_check
      _
    $region55: #{metanext_up_stage0_forward.5} parent=1 // pred_check_branch
      %147 = sbr.rel (0) target = $region57
    $region56: #{metanext_up_stage0_forward.5} parent=1 // pred_region
      %149 = vsyncadd [#allocation17], 0
      %s151 = sshll.u32 %s13, 4
      %s152 = int_to_ptr.hbm [resolvable:$true] %s151
      %s153 = sshll.u32 [#allocation16], 4
      %s154 = int_to_ptr.vmem [resolvable:$true] %s153
      %156 = dma.hbm_to_vmem [thread:$0]  %s152, 16, %s154, [#allocation17]
    $region57: #{metanext_up_stage0_forward.5} parent=1 // pred_fallthru
      _
    // Predicated region
    $region58: #{metanext_up_stage0_forward.5} parent=1 // pred_check
      _
    $region59: #{metanext_up_stage0_forward.5} parent=1 // pred_check_branch
      %158 = sbr.rel (0) target = $region61
    $region60: #{metanext_up_stage0_forward.5} parent=1 // pred_region
      %160 = vsyncadd [#allocation17], 0
      %s162 = sshll.u32 %s14, 4
      %s163 = int_to_ptr.hbm [resolvable:$true] %s162
      %s164 = sshll.u32 [#allocation18], 4
      %s165 = int_to_ptr.vmem [resolvable:$true] %s164
      %167 = dma.hbm_to_vmem [thread:$0]  %s163, 16, %s165, [#allocation17]
    $region61: #{metanext_up_stage0_forward.5} parent=1 // pred_fallthru
      _
    // Predicated region
    $region62: #{metanext_up_stage0_forward.5} parent=1 // pred_check
      _
    $region63: #{metanext_up_stage0_forward.5} parent=1 // pred_check_branch
      %169 = sbr.rel (0) target = $region65
    $region64: #{metanext_up_stage0_forward.5} parent=1 // pred_region
      %171 = vsyncadd [#allocation20], 0
      %s172 = sshll.u32 %s15, 4
      %s173 = int_to_ptr.hbm [resolvable:$true] %s172
      %s174 = sshll.u32 [#allocation19], 4
      %s175 = int_to_ptr.vmem [resolvable:$true] %s174
      %180 = dma.hbm_to_vmem [thread:$0]  %s173, 14336, %s175, [#allocation20], 128, 128, 8
    $region65: #{metanext_up_stage0_forward.5} parent=1 // pred_fallthru
      _
    // Predicated region
    $region66: #{metanext_up_stage0_forward.5} parent=1 // pred_check
      _
    $region67: #{metanext_up_stage0_forward.5} parent=1 // pred_check_branch
      %182 = sbr.rel (0) target = $region69
    $region68: #{metanext_up_stage0_forward.5} parent=1 // pred_region
      %184 = vsyncadd [#allocation20], 0
      %s186 = sshll.u32 %s16, 4
      %s187 = int_to_ptr.hbm [resolvable:$true] %s186
      %s188 = sshll.u32 [#allocation21], 4
      %s189 = int_to_ptr.vmem [resolvable:$true] %s188
      %191 = dma.hbm_to_vmem [thread:$0]  %s187, 16, %s189, [#allocation20]
    $region69: #{metanext_up_stage0_forward.5} parent=1 // pred_fallthru
      _
    // Predicated region
    $region70: #{metanext_up_stage0_forward.5} parent=1 // pred_check
      _
    $region71: #{metanext_up_stage0_forward.5} parent=1 // pred_check_branch
      %193 = sbr.rel (0) target = $region73
    $region72: #{metanext_up_stage0_forward.5} parent=1 // pred_region
      %195 = vsyncadd [#allocation23], 0
      %s197 = sshll.u32 %s17, 4
      %s198 = int_to_ptr.hbm [resolvable:$true] %s197
      %s199 = sshll.u32 [#allocation22], 4
      %s200 = int_to_ptr.vmem [resolvable:$true] %s199
      %202 = dma.hbm_to_vmem [thread:$0]  %s198, 16, %s200, [#allocation23]
    $region73: #{metanext_up_stage0_forward.5} parent=1 // pred_fallthru
      _
    // Predicated region
    $region74: #{metanext_up_stage0_forward.5} parent=1 // pred_check
      _
    $region75: #{metanext_up_stage0_forward.5} parent=1 // pred_check_branch
      %204 = sbr.rel (0) target = $region77
    $region76: #{metanext_up_stage0_forward.5} parent=1 // pred_region
      %206 = dma.done [#allocation3], 2048
    $region77: #{metanext_up_stage0_forward.5} parent=1 // pred_fallthru
      _
    // Predicated region
    $region78: #{metanext_up_stage0_forward.5} parent=1 // pred_check
      _
    $region79: #{metanext_up_stage0_forward.5} parent=1 // pred_check_branch
      %208 = sbr.rel (0) target = $region81
    $region80: #{metanext_up_stage0_forward.5} parent=1 // pred_region
      %210 = dma.done [#allocation5], 16
    $region81: #{metanext_up_stage0_forward.5} parent=1 // pred_fallthru
      _
    // Predicated region
    $region82: #{metanext_up_stage0_forward.5} parent=1 // pred_check
      _
    $region83: #{metanext_up_stage0_forward.5} parent=1 // pred_check_branch
      %212 = sbr.rel (0) target = $region85
    $region84: #{metanext_up_stage0_forward.5} parent=1 // pred_region
      %214 = dma.done [#allocation5], 14336
    $region85: #{metanext_up_stage0_forward.5} parent=1 // pred_fallthru
      _
    // Predicated region
    $region86: #{metanext_up_stage0_forward.5} parent=1 // pred_check
      _
    $region87: #{metanext_up_stage0_forward.5} parent=1 // pred_check_branch
      %216 = sbr.rel (0) target = $region89
    $region88: #{metanext_up_stage0_forward.5} parent=1 // pred_region
      %218 = dma.done [#allocation8], 16
    $region89: #{metanext_up_stage0_forward.5} parent=1 // pred_fallthru
      _
    // Predicated region
    $region90: #{metanext_up_stage0_forward.5} parent=1 // pred_check
      _
    $region91: #{metanext_up_stage0_forward.5} parent=1 // pred_check_branch
      %220 = sbr.rel (0) target = $region93
    $region92: #{metanext_up_stage0_forward.5} parent=1 // pred_region
      %222 = dma.done [#allocation8], 16
    $region93: #{metanext_up_stage0_forward.5} parent=1 // pred_fallthru
      _
    // Predicated region
    $region94: #{metanext_up_stage0_forward.5} parent=1 // pred_check
      _
    $region95: #{metanext_up_stage0_forward.5} parent=1 // pred_check_branch
      %224 = sbr.rel (0) target = $region97
    $region96: #{metanext_up_stage0_forward.5} parent=1 // pred_region
      %226 = dma.done [#allocation11], 16
    $region97: #{metanext_up_stage0_forward.5} parent=1 // pred_fallthru
      _
    // Predicated region
    $region98: #{metanext_up_stage0_forward.5} parent=1 // pred_check
      _
    $region99: #{metanext_up_stage0_forward.5} parent=1 // pred_check_branch
      %228 = sbr.rel (0) target = $region101
    $region100: #{metanext_up_stage0_forward.5} parent=1 // pred_region
      %230 = dma.done [#allocation11], 8192
    $region101: #{metanext_up_stage0_forward.5} parent=1 // pred_fallthru
      _
    // Predicated region
    $region102: #{metanext_up_stage0_forward.5} parent=1 // pred_check
      _
    $region103: #{metanext_up_stage0_forward.5} parent=1 // pred_check_branch
      %232 = sbr.rel (0) target = $region105
    $region104: #{metanext_up_stage0_forward.5} parent=1 // pred_region
      %234 = dma.done [#allocation14], 4096
    $region105: #{metanext_up_stage0_forward.5} parent=1 // pred_fallthru
      _
    // Predicated region
    $region106: #{metanext_up_stage0_forward.5} parent=1 // pred_check
      _
    $region107: #{metanext_up_stage0_forward.5} parent=1 // pred_check_branch
      %236 = sbr.rel (0) target = $region109
    $region108: #{metanext_up_stage0_forward.5} parent=1 // pred_region
      %238 = dma.done [#allocation14], 16
    $region109: #{metanext_up_stage0_forward.5} parent=1 // pred_fallthru
      _
    // Predicated region
    $region110: #{metanext_up_stage0_forward.5} parent=1 // pred_check
      _
    $region111: #{metanext_up_stage0_forward.5} parent=1 // pred_check_branch
      %240 = sbr.rel (0) target = $region113
    $region112: #{metanext_up_stage0_forward.5} parent=1 // pred_region
      %242 = dma.done [#allocation17], 16
    $region113: #{metanext_up_stage0_forward.5} parent=1 // pred_fallthru
      _
    // Predicated region
    $region114: #{metanext_up_stage0_forward.5} parent=1 // pred_check
      _
    $region115: #{metanext_up_stage0_forward.5} parent=1 // pred_check_branch
      %244 = sbr.rel (0) target = $region117
    $region116: #{metanext_up_stage0_forward.5} parent=1 // pred_region
      %246 = dma.done [#allocation17], 16
    $region117: #{metanext_up_stage0_forward.5} parent=1 // pred_fallthru
      _
    // Predicated region
    $region118: #{metanext_up_stage0_forward.5} parent=1 // pred_check
      _
    $region119: #{metanext_up_stage0_forward.5} parent=1 // pred_check_branch
      %248 = sbr.rel (0) target = $region121
    $region120: #{metanext_up_stage0_forward.5} parent=1 // pred_region
      %250 = dma.done [#allocation20], 14336
    $region121: #{metanext_up_stage0_forward.5} parent=1 // pred_fallthru
      _
    // Predicated region
    $region122: #{metanext_up_stage0_forward.5} parent=1 // pred_check
      _
    $region123: #{metanext_up_stage0_forward.5} parent=1 // pred_check_branch
      %252 = sbr.rel (0) target = $region125
    $region124: #{metanext_up_stage0_forward.5} parent=1 // pred_region
      %254 = dma.done [#allocation20], 16
    $region125: #{metanext_up_stage0_forward.5} parent=1 // pred_fallthru
      _
    // Predicated region
    $region126: #{metanext_up_stage0_forward.5} parent=1 // pred_check
      _
    $region127: #{metanext_up_stage0_forward.5} parent=1 // pred_check_branch
      %256 = sbr.rel (0) target = $region129
    $region128: #{metanext_up_stage0_forward.5} parent=1 // pred_region
      %258 = dma.done [#allocation23], 16
    $region129: #{metanext_up_stage0_forward.5} parent=1 // pred_fallthru
      _
    %v259 = vld [vmem:[%s0] sm:$0xff]
    %v260 = vld [vmem:[%s0 + $0x8] sm:$0xff]
    %v261 = vld [vmem:[%s0 + $0x10] sm:$0xff]
    %v262 = vld [vmem:[%s0 + $0x18] sm:$0xff]
    %v263 = vld [vmem:[#allocation2] sm:$0xff]
    %v264 = vld [vmem:[#allocation2 + $0x8] sm:$0xff]
    %v265 = vld [vmem:[#allocation2 + $0x10] sm:$0xff]
    %v266 = vld [vmem:[#allocation2 + $0x18] sm:$0xff]
    %v267 = vld [vmem:[#allocation2 + $0x20] sm:$0xff]
    %v268 = vld [vmem:[#allocation2 + $0x28] sm:$0xff]
    %v269 = vld [vmem:[#allocation2 + $0x30] sm:$0xff]
    %v270 = vld [vmem:[#allocation2 + $0x38] sm:$0xff]
    %v271 = vld [vmem:[#allocation2 + $0x40] sm:$0xff]
    %v272 = vld [vmem:[#allocation2 + $0x48] sm:$0xff]
    %v273 = vld [vmem:[#allocation2 + $0x50] sm:$0xff]
    %v274 = vld [vmem:[#allocation2 + $0x58] sm:$0xff]
    %v275 = vld [vmem:[#allocation2 + $0x60] sm:$0xff]
    %v276 = vld [vmem:[#allocation2 + $0x68] sm:$0xff]
    %v277 = vld [vmem:[#allocation2 + $0x70] sm:$0xff]
    %v278 = vld [vmem:[#allocation2 + $0x78] sm:$0xff]
    %v279 = vld [vmem:[%s3] sm:$0x1]
    %v280 = vld [vmem:[#allocation4] sm:$0x1]
    %v281 = vadd.f32 %v259, %v260
    %v282 = vadd.f32 %v281, %v261
    %v283 = vadd.f32 %v282, %v262
    %v284 = vrot.slane %v283, 4
    %v285 = vadd.f32 %v283, %v284
    %v286 = vrot.slane %v285, 2
    %v287 = vadd.f32 %v285, %v286
    %v288 = vrot.slane %v287, 1
    %v289 = vadd.f32 %v287, %v288
    %v290 = vmul.f32 %v259, %v259
    %v291 = vmul.f32 %v260, %v260
    %v292 = vmul.f32 %v261, %v261
    %v293 = vmul.f32 %v262, %v262
    %v294 = vadd.f32 %v290, %v291
    %v295 = vadd.f32 %v294, %v292
    %v296 = vadd.f32 %v295, %v293
    %v297 = vrot.slane %v296, 4
    %v298 = vadd.f32 %v296, %v297
    %v299 = vrot.slane %v298, 2
    %v300 = vadd.f32 %v298, %v299
    %v301 = vrot.slane %v300, 1
    %v302 = vadd.f32 %v300, %v301
    %303 = vmatpush.msra.mxu0 %v278
    %304 = vmatpush.msra.mxu0 %v277
    %305 = vmatpush.msra.mxu0 %v276
    %306 = vmatpush.msra.mxu0 %v275
    %307 = vmatpush.msra.mxu0 %v274
    %308 = vmatpush.msra.mxu0 %v273
    %309 = vmatpush.msra.mxu0 %v272
    %310 = vmatpush.msra.mxu0 %v271
    %311 = vmatpush.msra.mxu0 %v270
    %312 = vmatpush.msra.mxu0 %v269
    %313 = vmatpush.msra.mxu0 %v268
    %314 = vmatpush.msra.mxu0 %v267
    %315 = vmatpush.msra.mxu0 %v266
    %316 = vmatpush.msra.mxu0 %v265
    %317 = vmatpush.msra.mxu0 %v264
    %318 = vmatpush.msra.mxu0 %v263
    %319 = vmatmul.f32.gmra.mxu0 %v289
    %v320 = vpop.f32.mrf.mxu0
    %v321 = vadd.f32 0.0, %v320
    %322 = vdwg.mxu0
    %323 = vmatpush.msra.mxu0 %v278
    %324 = vmatpush.msra.mxu0 %v277
    %325 = vmatpush.msra.mxu0 %v276
    %326 = vmatpush.msra.mxu0 %v275
    %327 = vmatpush.msra.mxu0 %v274
    %328 = vmatpush.msra.mxu0 %v273
    %329 = vmatpush.msra.mxu0 %v272
    %330 = vmatpush.msra.mxu0 %v271
    %331 = vmatpush.msra.mxu0 %v270
    %332 = vmatpush.msra.mxu0 %v269
    %333 = vmatpush.msra.mxu0 %v268
    %334 = vmatpush.msra.mxu0 %v267
    %335 = vmatpush.msra.mxu0 %v266
    %336 = vmatpush.msra.mxu0 %v265
    %337 = vmatpush.msra.mxu0 %v264
    %338 = vmatpush.msra.mxu0 %v263
    %339 = vmatmul.f32.gmra.mxu0 %v302
    %v340 = vpop.f32.mrf.mxu0
    %v341 = vadd.f32 0.0, %v340
    %342 = vdwg.mxu0
    %v343 = vmul.f32 %v321, %v321
    %v344 = vsub.f32 %v341, %v343
    %v345 = vmax.f32 %v344, 0.0
    %v346 = vadd.f32 %v345, 1e-05
    %v347 = vrsqrt.pop %v346
    %v348 = vmul.f32 %v347, %v346
    %v349 = vmul.f32 %v348, %v347
    %v350 = vmul.f32 0.5, %v349
    %v351 = vsub.f32 1.5, %v350
    %v352 = vmul.f32 %v347, %v351
    %vm353 = vweird.f32 %v346
    %vm354 = vweird.f32 %v347
    %vm355 = vmor %vm353, %vm354
    %v356 = vsel %vm355, %v347, %v352
    %v357 = vperm.slane %v321, 0
    %v358 = vsub.f32 %v259, %v357
    %v359 = vsub.f32 %v260, %v357
    %v360 = vsub.f32 %v261, %v357
    %v361 = vsub.f32 %v262, %v357
    %v362 = vmul.f32 %v356, %v279
    %v363 = vperm.slane %v362, 0
    %v364 = vmul.f32 %v358, %v363
    %v365 = vmul.f32 %v359, %v363
    %v366 = vmul.f32 %v360, %v363
    %v367 = vmul.f32 %v361, %v363
    %v369 = vperm.slane %v280, 0
    %v371 = vadd.f32 %v364, %v369
    %v372 = vadd.f32 %v365, %v369
    %v373 = vadd.f32 %v366, %v369
    %v374 = vadd.f32 %v367, %v369
    %v375 = vld [vmem:[#allocation7] sm:$0x1]
    %v377 = vperm.slane %v375, 0
    %v379 = vadd.f32 %v377, 0.0
    %v380 = vld [vmem:[%s2] sm:$0xff]
    %v381 = vld [vmem:[%s2 + $0x8] sm:$0xff]
    %v382 = vld [vmem:[%s2 + $0x10] sm:$0xff]
    %v383 = vld [vmem:[%s2 + $0x18] sm:$0xff]
    %v384 = vld [vmem:[#allocation6] sm:$0xff]
    %v385 = vld [vmem:[#allocation6 + $0x8] sm:$0xff]
    %v386 = vld [vmem:[#allocation6 + $0x10] sm:$0xff]
    %v387 = vld [vmem:[#allocation6 + $0x18] sm:$0xff]
    %v388 = vld [vmem:[#allocation6 + $0x20] sm:$0xff]
    %v389 = vld [vmem:[#allocation6 + $0x28] sm:$0xff]
    %v390 = vld [vmem:[#allocation6 + $0x30] sm:$0xff]
    %v391 = vld [vmem:[#allocation6 + $0x38] sm:$0xff]
    %v392 = vld [vmem:[#allocation6 + $0x40] sm:$0xff]
    %v393 = vld [vmem:[#allocation6 + $0x48] sm:$0xff]
    %v394 = vld [vmem:[#allocation6 + $0x50] sm:$0xff]
    %v395 = vld [vmem:[#allocation6 + $0x58] sm:$0xff]
    %v396 = vld [vmem:[#allocation6 + $0x60] sm:$0xff]
    %v397 = vld [vmem:[#allocation6 + $0x68] sm:$0xff]
    %v398 = vld [vmem:[#allocation6 + $0x70] sm:$0xff]
    %v399 = vld [vmem:[#allocation6 + $0x78] sm:$0xff]
    %400 = vmatpush.msra.mxu0 %v399
    %401 = vmatpush.msra.mxu0 %v398
    %402 = vmatpush.msra.mxu0 %v397
    %403 = vmatpush.msra.mxu0 %v396
    %404 = vmatpush.msra.mxu0 %v395
    %405 = vmatpush.msra.mxu0 %v394
    %406 = vmatpush.msra.mxu0 %v393
    %407 = vmatpush.msra.mxu0 %v392
    %408 = vmatpush.msra.mxu0 %v391
    %409 = vmatpush.msra.mxu0 %v390
    %410 = vmatpush.msra.mxu0 %v389
    %411 = vmatpush.msra.mxu0 %v388
    %412 = vmatpush.msra.mxu0 %v387
    %413 = vmatpush.msra.mxu0 %v386
    %414 = vmatpush.msra.mxu0 %v385
    %415 = vmatpush.msra.mxu0 %v384
    %416 = vmatmul.f32.gmra.mxu0 %v371
    %v417 = vpop.f32.mrf.mxu0
    %v418 = vadd.f32 0.0, %v417
    %419 = vmatmul.f32.gmra.mxu0 %v372
    %v420 = vpop.f32.mrf.mxu0
    %v421 = vadd.f32 0.0, %v420
    %422 = vmatmul.f32.gmra.mxu0 %v373
    %v423 = vpop.f32.mrf.mxu0
    %v424 = vadd.f32 0.0, %v423
    %425 = vmatmul.f32.gmra.mxu0 %v374
    %v426 = vpop.f32.mrf.mxu0
    %v427 = vadd.f32 0.0, %v426
    %428 = vdwg.mxu0
    %vm429 = vcmask 261120
    %v431 = vsel %vm429, %v380, 0
    %v434 = vsel %vm429, %v381, 0
    %v437 = vsel %vm429, %v382, 0
    %v440 = vsel %vm429, %v383, 0
    %442 = vmatpush.msra.mxu0 0.0
    %443 = vmatpush.msra.mxu0 0.0
    %444 = vmatpush.msra.mxu0 0.0
    %445 = vmatpush.msra.mxu0 0.0
    %446 = vmatpush.msra.mxu0 0.0
    %447 = vmatpush.msra.mxu0 0.0
    %448 = vmatpush.msra.mxu0 0.0
    %449 = vmatpush.msra.mxu0 0.0
    %450 = vmatpush.msra.mxu0 0.0
    %451 = vmatpush.msra.mxu0 0.0
    %452 = vmatpush.msra.mxu0 0.0
    %453 = vmatpush.msra.mxu0 0.0
    %454 = vmatpush.msra.mxu0 %v427
    %455 = vmatpush.msra.mxu0 %v424
    %456 = vmatpush.msra.mxu0 %v421
    %457 = vmatpush.msra.mxu0 %v418
    %458 = vmatmul.f32.gmra.mxu0 %v431
    %v459 = vpop.f32.mrf.mxu0
    %v460 = vadd.f32 0.0, %v459
    %461 = vmatmul.f32.gmra.mxu0 %v434
    %v462 = vpop.f32.mrf.mxu0
    %v463 = vadd.f32 0.0, %v462
    %464 = vmatmul.f32.gmra.mxu0 %v437
    %v465 = vpop.f32.mrf.mxu0
    %v466 = vadd.f32 0.0, %v465
    %467 = vmatmul.f32.gmra.mxu0 %v440
    %v468 = vpop.f32.mrf.mxu0
    %v469 = vadd.f32 0.0, %v468
    %470 = vdwg.mxu0
    %v471 = vadd.f32 %v379, %v460
    %v472 = vadd.f32 %v379, %v463
    %v473 = vadd.f32 %v379, %v466
    %v474 = vadd.f32 %v379, %v469
    %s475 = scalar_lea.vmem %s2, 32
    %v476 = vld [vmem:[%s475] sm:$0xff]
    %v477 = vld [vmem:[%s475 + $0x8] sm:$0xff]
    %v478 = vld [vmem:[%s475 + $0x10] sm:$0xff]
    %v479 = vld [vmem:[%s475 + $0x18] sm:$0xff]
    %s480 = scalar_lea.vmem [#allocation6], 128
    %v481 = vld [vmem:[%s480] sm:$0xff]
    %v482 = vld [vmem:[%s480 + $0x8] sm:$0xff]
    %v483 = vld [vmem:[%s480 + $0x10] sm:$0xff]
    %v484 = vld [vmem:[%s480 + $0x18] sm:$0xff]
    %v485 = vld [vmem:[%s480 + $0x20] sm:$0xff]
    %v486 = vld [vmem:[%s480 + $0x28] sm:$0xff]
    %v487 = vld [vmem:[%s480 + $0x30] sm:$0xff]
    %v488 = vld [vmem:[%s480 + $0x38] sm:$0xff]
    %v489 = vld [vmem:[%s480 + $0x40] sm:$0xff]
    %v490 = vld [vmem:[%s480 + $0x48] sm:$0xff]
    %v491 = vld [vmem:[%s480 + $0x50] sm:$0xff]
    %v492 = vld [vmem:[%s480 + $0x58] sm:$0xff]
    %v493 = vld [vmem:[%s480 + $0x60] sm:$0xff]
    %v494 = vld [vmem:[%s480 + $0x68] sm:$0xff]
    %v495 = vld [vmem:[%s480 + $0x70] sm:$0xff]
    %v496 = vld [vmem:[%s480 + $0x78] sm:$0xff]
    %497 = vmatpush.msra.mxu0 %v496
    %498 = vmatpush.msra.mxu0 %v495
    %499 = vmatpush.msra.mxu0 %v494
    %500 = vmatpush.msra.mxu0 %v493
    %501 = vmatpush.msra.mxu0 %v492
    %502 = vmatpush.msra.mxu0 %v491
    %503 = vmatpush.msra.mxu0 %v490
    %504 = vmatpush.msra.mxu0 %v489
    %505 = vmatpush.msra.mxu0 %v488
    %506 = vmatpush.msra.mxu0 %v487
    %507 = vmatpush.msra.mxu0 %v486
    %508 = vmatpush.msra.mxu0 %v485
    %509 = vmatpush.msra.mxu0 %v484
    %510 = vmatpush.msra.mxu0 %v483
    %511 = vmatpush.msra.mxu0 %v482
    %512 = vmatpush.msra.mxu0 %v481
    %513 = vmatmul.f32.gmra.mxu0 %v371
    %v514 = vpop.f32.mrf.mxu0
    %v515 = vadd.f32 0.0, %v514
    %516 = vmatmul.f32.gmra.mxu0 %v372
    %v517 = vpop.f32.mrf.mxu0
    %v518 = vadd.f32 0.0, %v517
    %519 = vmatmul.f32.gmra.mxu0 %v373
    %v520 = vpop.f32.mrf.mxu0
    %v521 = vadd.f32 0.0, %v520
    %522 = vmatmul.f32.gmra.mxu0 %v374
    %v523 = vpop.f32.mrf.mxu0
    %v524 = vadd.f32 0.0, %v523
    %525 = vdwg.mxu0
    %v527 = vsel %vm429, %v476, 0
    %v530 = vsel %vm429, %v477, 0
    %v533 = vsel %vm429, %v478, 0
    %v536 = vsel %vm429, %v479, 0
    %538 = vmatpush.msra.mxu0 0.0
    %539 = vmatpush.msra.mxu0 0.0
    %540 = vmatpush.msra.mxu0 0.0
    %541 = vmatpush.msra.mxu0 0.0
    %542 = vmatpush.msra.mxu0 0.0
    %543 = vmatpush.msra.mxu0 0.0
    %544 = vmatpush.msra.mxu0 0.0
    %545 = vmatpush.msra.mxu0 0.0
    %546 = vmatpush.msra.mxu0 0.0
    %547 = vmatpush.msra.mxu0 0.0
    %548 = vmatpush.msra.mxu0 0.0
    %549 = vmatpush.msra.mxu0 0.0
    %550 = vmatpush.msra.mxu0 %v524
    %551 = vmatpush.msra.mxu0 %v521
    %552 = vmatpush.msra.mxu0 %v518
    %553 = vmatpush.msra.mxu0 %v515
    %554 = vmatmul.f32.gmra.mxu0 %v527
    %v555 = vpop.f32.mrf.mxu0
    %v556 = vadd.f32 0.0, %v555
    %557 = vmatmul.f32.gmra.mxu0 %v530
    %v558 = vpop.f32.mrf.mxu0
    %v559 = vadd.f32 0.0, %v558
    %560 = vmatmul.f32.gmra.mxu0 %v533
    %v561 = vpop.f32.mrf.mxu0
    %v562 = vadd.f32 0.0, %v561
    %563 = vmatmul.f32.gmra.mxu0 %v536
    %v564 = vpop.f32.mrf.mxu0
    %v565 = vadd.f32 0.0, %v564
    %566 = vdwg.mxu0
    %v567 = vadd.f32 %v471, %v556
    %v568 = vadd.f32 %v472, %v559
    %v569 = vadd.f32 %v473, %v562
    %v570 = vadd.f32 %v474, %v565
    %s571 = scalar_lea.vmem %s2, 64
    %v572 = vld [vmem:[%s571] sm:$0xff]
    %v573 = vld [vmem:[%s571 + $0x8] sm:$0xff]
    %v574 = vld [vmem:[%s571 + $0x10] sm:$0xff]
    %v575 = vld [vmem:[%s571 + $0x18] sm:$0xff]
    %s576 = scalar_lea.vmem [#allocation6], 256
    %v577 = vld [vmem:[%s576] sm:$0xff]
    %v578 = vld [vmem:[%s576 + $0x8] sm:$0xff]
    %v579 = vld [vmem:[%s576 + $0x10] sm:$0xff]
    %v580 = vld [vmem:[%s576 + $0x18] sm:$0xff]
    %v581 = vld [vmem:[%s576 + $0x20] sm:$0xff]
    %v582 = vld [vmem:[%s576 + $0x28] sm:$0xff]
    %v583 = vld [vmem:[%s576 + $0x30] sm:$0xff]
    %v584 = vld [vmem:[%s576 + $0x38] sm:$0xff]
    %v585 = vld [vmem:[%s576 + $0x40] sm:$0xff]
    %v586 = vld [vmem:[%s576 + $0x48] sm:$0xff]
    %v587 = vld [vmem:[%s576 + $0x50] sm:$0xff]
    %v588 = vld [vmem:[%s576 + $0x58] sm:$0xff]
    %v589 = vld [vmem:[%s576 + $0x60] sm:$0xff]
    %v590 = vld [vmem:[%s576 + $0x68] sm:$0xff]
    %v591 = vld [vmem:[%s576 + $0x70] sm:$0xff]
    %v592 = vld [vmem:[%s576 + $0x78] sm:$0xff]
    %593 = vmatpush.msra.mxu0 %v592
    %594 = vmatpush.msra.mxu0 %v591
    %595 = vmatpush.msra.mxu0 %v590
    %596 = vmatpush.msra.mxu0 %v589
    %597 = vmatpush.msra.mxu0 %v588
    %598 = vmatpush.msra.mxu0 %v587
    %599 = vmatpush.msra.mxu0 %v586
    %600 = vmatpush.msra.mxu0 %v585
    %601 = vmatpush.msra.mxu0 %v584
    %602 = vmatpush.msra.mxu0 %v583
    %603 = vmatpush.msra.mxu0 %v582
    %604 = vmatpush.msra.mxu0 %v581
    %605 = vmatpush.msra.mxu0 %v580
    %606 = vmatpush.msra.mxu0 %v579
    %607 = vmatpush.msra.mxu0 %v578
    %608 = vmatpush.msra.mxu0 %v577
    %609 = vmatmul.f32.gmra.mxu0 %v371
    %v610 = vpop.f32.mrf.mxu0
    %v611 = vadd.f32 0.0, %v610
    %612 = vmatmul.f32.gmra.mxu0 %v372
    %v613 = vpop.f32.mrf.mxu0
    %v614 = vadd.f32 0.0, %v613
    %615 = vmatmul.f32.gmra.mxu0 %v373
    %v616 = vpop.f32.mrf.mxu0
    %v617 = vadd.f32 0.0, %v616
    %618 = vmatmul.f32.gmra.mxu0 %v374
    %v619 = vpop.f32.mrf.mxu0
    %v620 = vadd.f32 0.0, %v619
    %621 = vdwg.mxu0
    %v623 = vsel %vm429, %v572, 0
    %v626 = vsel %vm429, %v573, 0
    %v629 = vsel %vm429, %v574, 0
    %v632 = vsel %vm429, %v575, 0
    %634 = vmatpush.msra.mxu0 0.0
    %635 = vmatpush.msra.mxu0 0.0
    %636 = vmatpush.msra.mxu0 0.0
    %637 = vmatpush.msra.mxu0 0.0
    %638 = vmatpush.msra.mxu0 0.0
    %639 = vmatpush.msra.mxu0 0.0
    %640 = vmatpush.msra.mxu0 0.0
    %641 = vmatpush.msra.mxu0 0.0
    %642 = vmatpush.msra.mxu0 0.0
    %643 = vmatpush.msra.mxu0 0.0
    %644 = vmatpush.msra.mxu0 0.0
    %645 = vmatpush.msra.mxu0 0.0
    %646 = vmatpush.msra.mxu0 %v620
    %647 = vmatpush.msra.mxu0 %v617
    %648 = vmatpush.msra.mxu0 %v614
    %649 = vmatpush.msra.mxu0 %v611
    %650 = vmatmul.f32.gmra.mxu0 %v623
    %v651 = vpop.f32.mrf.mxu0
    %v652 = vadd.f32 0.0, %v651
    %653 = vmatmul.f32.gmra.mxu0 %v626
    %v654 = vpop.f32.mrf.mxu0
    %v655 = vadd.f32 0.0, %v654
    %656 = vmatmul.f32.gmra.mxu0 %v629
    %v657 = vpop.f32.mrf.mxu0
    %v658 = vadd.f32 0.0, %v657
    %659 = vmatmul.f32.gmra.mxu0 %v632
    %v660 = vpop.f32.mrf.mxu0
    %v661 = vadd.f32 0.0, %v660
    %662 = vdwg.mxu0
    %v663 = vadd.f32 %v567, %v652
    %v664 = vadd.f32 %v568, %v655
    %v665 = vadd.f32 %v569, %v658
    %v666 = vadd.f32 %v570, %v661
    %s667 = scalar_lea.vmem %s2, 96
    %v668 = vld [vmem:[%s667] sm:$0xff]
    %v669 = vld [vmem:[%s667 + $0x8] sm:$0xff]
    %v670 = vld [vmem:[%s667 + $0x10] sm:$0xff]
    %v671 = vld [vmem:[%s667 + $0x18] sm:$0xff]
    %s672 = scalar_lea.vmem [#allocation6], 384
    %v673 = vld [vmem:[%s672] sm:$0xff]
    %v674 = vld [vmem:[%s672 + $0x8] sm:$0xff]
    %v675 = vld [vmem:[%s672 + $0x10] sm:$0xff]
    %v676 = vld [vmem:[%s672 + $0x18] sm:$0xff]
    %v677 = vld [vmem:[%s672 + $0x20] sm:$0xff]
    %v678 = vld [vmem:[%s672 + $0x28] sm:$0xff]
    %v679 = vld [vmem:[%s672 + $0x30] sm:$0xff]
    %v680 = vld [vmem:[%s672 + $0x38] sm:$0xff]
    %v681 = vld [vmem:[%s672 + $0x40] sm:$0xff]
    %v682 = vld [vmem:[%s672 + $0x48] sm:$0xff]
    %v683 = vld [vmem:[%s672 + $0x50] sm:$0xff]
    %v684 = vld [vmem:[%s672 + $0x58] sm:$0xff]
    %v685 = vld [vmem:[%s672 + $0x60] sm:$0xff]
    %v686 = vld [vmem:[%s672 + $0x68] sm:$0xff]
    %v687 = vld [vmem:[%s672 + $0x70] sm:$0xff]
    %v688 = vld [vmem:[%s672 + $0x78] sm:$0xff]
    %689 = vmatpush.msra.mxu0 %v688
    %690 = vmatpush.msra.mxu0 %v687
    %691 = vmatpush.msra.mxu0 %v686
    %692 = vmatpush.msra.mxu0 %v685
    %693 = vmatpush.msra.mxu0 %v684
    %694 = vmatpush.msra.mxu0 %v683
    %695 = vmatpush.msra.mxu0 %v682
    %696 = vmatpush.msra.mxu0 %v681
    %697 = vmatpush.msra.mxu0 %v680
    %698 = vmatpush.msra.mxu0 %v679
    %699 = vmatpush.msra.mxu0 %v678
    %700 = vmatpush.msra.mxu0 %v677
    %701 = vmatpush.msra.mxu0 %v676
    %702 = vmatpush.msra.mxu0 %v675
    %703 = vmatpush.msra.mxu0 %v674
    %704 = vmatpush.msra.mxu0 %v673
    %705 = vmatmul.f32.gmra.mxu0 %v371
    %v706 = vpop.f32.mrf.mxu0
    %v707 = vadd.f32 0.0, %v706
    %708 = vmatmul.f32.gmra.mxu0 %v372
    %v709 = vpop.f32.mrf.mxu0
    %v710 = vadd.f32 0.0, %v709
    %711 = vmatmul.f32.gmra.mxu0 %v373
    %v712 = vpop.f32.mrf.mxu0
    %v713 = vadd.f32 0.0, %v712
    %714 = vmatmul.f32.gmra.mxu0 %v374
    %v715 = vpop.f32.mrf.mxu0
    %v716 = vadd.f32 0.0, %v715
    %717 = vdwg.mxu0
    %v719 = vsel %vm429, %v668, 0
    %v722 = vsel %vm429, %v669, 0
    %v725 = vsel %vm429, %v670, 0
    %v728 = vsel %vm429, %v671, 0
    %730 = vmatpush.msra.mxu0 0.0
    %731 = vmatpush.msra.mxu0 0.0
    %732 = vmatpush.msra.mxu0 0.0
    %733 = vmatpush.msra.mxu0 0.0
    %734 = vmatpush.msra.mxu0 0.0
    %735 = vmatpush.msra.mxu0 0.0
    %736 = vmatpush.msra.mxu0 0.0
    %737 = vmatpush.msra.mxu0 0.0
    %738 = vmatpush.msra.mxu0 0.0
    %739 = vmatpush.msra.mxu0 0.0
    %740 = vmatpush.msra.mxu0 0.0
    %741 = vmatpush.msra.mxu0 0.0
    %742 = vmatpush.msra.mxu0 %v716
    %743 = vmatpush.msra.mxu0 %v713
    %744 = vmatpush.msra.mxu0 %v710
    %745 = vmatpush.msra.mxu0 %v707
    %746 = vmatmul.f32.gmra.mxu0 %v719
    %v747 = vpop.f32.mrf.mxu0
    %v748 = vadd.f32 0.0, %v747
    %749 = vmatmul.f32.gmra.mxu0 %v722
    %v750 = vpop.f32.mrf.mxu0
    %v751 = vadd.f32 0.0, %v750
    %752 = vmatmul.f32.gmra.mxu0 %v725
    %v753 = vpop.f32.mrf.mxu0
    %v754 = vadd.f32 0.0, %v753
    %755 = vmatmul.f32.gmra.mxu0 %v728
    %v756 = vpop.f32.mrf.mxu0
    %v757 = vadd.f32 0.0, %v756
    %758 = vdwg.mxu0
    %v759 = vadd.f32 %v663, %v748
    %v760 = vadd.f32 %v664, %v751
    %v761 = vadd.f32 %v665, %v754
    %v762 = vadd.f32 %v666, %v757
    %s763 = scalar_lea.vmem %s2, 128
    %v764 = vld [vmem:[%s763] sm:$0xff]
    %v765 = vld [vmem:[%s763 + $0x8] sm:$0xff]
    %v766 = vld [vmem:[%s763 + $0x10] sm:$0xff]
    %v767 = vld [vmem:[%s763 + $0x18] sm:$0xff]
    %s768 = scalar_lea.vmem [#allocation6], 512
    %v769 = vld [vmem:[%s768] sm:$0xff]
    %v770 = vld [vmem:[%s768 + $0x8] sm:$0xff]
    %v771 = vld [vmem:[%s768 + $0x10] sm:$0xff]
    %v772 = vld [vmem:[%s768 + $0x18] sm:$0xff]
    %v773 = vld [vmem:[%s768 + $0x20] sm:$0xff]
    %v774 = vld [vmem:[%s768 + $0x28] sm:$0xff]
    %v775 = vld [vmem:[%s768 + $0x30] sm:$0xff]
    %v776 = vld [vmem:[%s768 + $0x38] sm:$0xff]
    %v777 = vld [vmem:[%s768 + $0x40] sm:$0xff]
    %v778 = vld [vmem:[%s768 + $0x48] sm:$0xff]
    %v779 = vld [vmem:[%s768 + $0x50] sm:$0xff]
    %v780 = vld [vmem:[%s768 + $0x58] sm:$0xff]
    %v781 = vld [vmem:[%s768 + $0x60] sm:$0xff]
    %v782 = vld [vmem:[%s768 + $0x68] sm:$0xff]
    %v783 = vld [vmem:[%s768 + $0x70] sm:$0xff]
    %v784 = vld [vmem:[%s768 + $0x78] sm:$0xff]
    %785 = vmatpush.msra.mxu0 %v784
    %786 = vmatpush.msra.mxu0 %v783
    %787 = vmatpush.msra.mxu0 %v782
    %788 = vmatpush.msra.mxu0 %v781
    %789 = vmatpush.msra.mxu0 %v780
    %790 = vmatpush.msra.mxu0 %v779
    %791 = vmatpush.msra.mxu0 %v778
    %792 = vmatpush.msra.mxu0 %v777
    %793 = vmatpush.msra.mxu0 %v776
    %794 = vmatpush.msra.mxu0 %v775
    %795 = vmatpush.msra.mxu0 %v774
    %796 = vmatpush.msra.mxu0 %v773
    %797 = vmatpush.msra.mxu0 %v772
    %798 = vmatpush.msra.mxu0 %v771
    %799 = vmatpush.msra.mxu0 %v770
    %800 = vmatpush.msra.mxu0 %v769
    %801 = vmatmul.f32.gmra.mxu0 %v371
    %v802 = vpop.f32.mrf.mxu0
    %v803 = vadd.f32 0.0, %v802
    %804 = vmatmul.f32.gmra.mxu0 %v372
    %v805 = vpop.f32.mrf.mxu0
    %v806 = vadd.f32 0.0, %v805
    %807 = vmatmul.f32.gmra.mxu0 %v373
    %v808 = vpop.f32.mrf.mxu0
    %v809 = vadd.f32 0.0, %v808
    %810 = vmatmul.f32.gmra.mxu0 %v374
    %v811 = vpop.f32.mrf.mxu0
    %v812 = vadd.f32 0.0, %v811
    %813 = vdwg.mxu0
    %v815 = vsel %vm429, %v764, 0
    %v818 = vsel %vm429, %v765, 0
    %v821 = vsel %vm429, %v766, 0
    %v824 = vsel %vm429, %v767, 0
    %826 = vmatpush.msra.mxu0 0.0
    %827 = vmatpush.msra.mxu0 0.0
    %828 = vmatpush.msra.mxu0 0.0
    %829 = vmatpush.msra.mxu0 0.0
    %830 = vmatpush.msra.mxu0 0.0
    %831 = vmatpush.msra.mxu0 0.0
    %832 = vmatpush.msra.mxu0 0.0
    %833 = vmatpush.msra.mxu0 0.0
    %834 = vmatpush.msra.mxu0 0.0
    %835 = vmatpush.msra.mxu0 0.0
    %836 = vmatpush.msra.mxu0 0.0
    %837 = vmatpush.msra.mxu0 0.0
    %838 = vmatpush.msra.mxu0 %v812
    %839 = vmatpush.msra.mxu0 %v809
    %840 = vmatpush.msra.mxu0 %v806
    %841 = vmatpush.msra.mxu0 %v803
    %842 = vmatmul.f32.gmra.mxu0 %v815
    %v843 = vpop.f32.mrf.mxu0
    %v844 = vadd.f32 0.0, %v843
    %845 = vmatmul.f32.gmra.mxu0 %v818
    %v846 = vpop.f32.mrf.mxu0
    %v847 = vadd.f32 0.0, %v846
    %848 = vmatmul.f32.gmra.mxu0 %v821
    %v849 = vpop.f32.mrf.mxu0
    %v850 = vadd.f32 0.0, %v849
    %851 = vmatmul.f32.gmra.mxu0 %v824
    %v852 = vpop.f32.mrf.mxu0
    %v853 = vadd.f32 0.0, %v852
    %854 = vdwg.mxu0
    %v855 = vadd.f32 %v759, %v844
    %v856 = vadd.f32 %v760, %v847
    %v857 = vadd.f32 %v761, %v850
    %v858 = vadd.f32 %v762, %v853
    %s859 = scalar_lea.vmem %s2, 160
    %v860 = vld [vmem:[%s859] sm:$0xff]
    %v861 = vld [vmem:[%s859 + $0x8] sm:$0xff]
    %v862 = vld [vmem:[%s859 + $0x10] sm:$0xff]
    %v863 = vld [vmem:[%s859 + $0x18] sm:$0xff]
    %s864 = scalar_lea.vmem [#allocation6], 640
    %v865 = vld [vmem:[%s864] sm:$0xff]
    %v866 = vld [vmem:[%s864 + $0x8] sm:$0xff]
    %v867 = vld [vmem:[%s864 + $0x10] sm:$0xff]
    %v868 = vld [vmem:[%s864 + $0x18] sm:$0xff]
    %v869 = vld [vmem:[%s864 + $0x20] sm:$0xff]
    %v870 = vld [vmem:[%s864 + $0x28] sm:$0xff]
    %v871 = vld [vmem:[%s864 + $0x30] sm:$0xff]
    %v872 = vld [vmem:[%s864 + $0x38] sm:$0xff]
    %v873 = vld [vmem:[%s864 + $0x40] sm:$0xff]
    %v874 = vld [vmem:[%s864 + $0x48] sm:$0xff]
    %v875 = vld [vmem:[%s864 + $0x50] sm:$0xff]
    %v876 = vld [vmem:[%s864 + $0x58] sm:$0xff]
    %v877 = vld [vmem:[%s864 + $0x60] sm:$0xff]
    %v878 = vld [vmem:[%s864 + $0x68] sm:$0xff]
    %v879 = vld [vmem:[%s864 + $0x70] sm:$0xff]
    %v880 = vld [vmem:[%s864 + $0x78] sm:$0xff]
    %881 = vmatpush.msra.mxu0 %v880
    %882 = vmatpush.msra.mxu0 %v879
    %883 = vmatpush.msra.mxu0 %v878
    %884 = vmatpush.msra.mxu0 %v877
    %885 = vmatpush.msra.mxu0 %v876
    %886 = vmatpush.msra.mxu0 %v875
    %887 = vmatpush.msra.mxu0 %v874
    %888 = vmatpush.msra.mxu0 %v873
    %889 = vmatpush.msra.mxu0 %v872
    %890 = vmatpush.msra.mxu0 %v871
    %891 = vmatpush.msra.mxu0 %v870
    %892 = vmatpush.msra.mxu0 %v869
    %893 = vmatpush.msra.mxu0 %v868
    %894 = vmatpush.msra.mxu0 %v867
    %895 = vmatpush.msra.mxu0 %v866
    %896 = vmatpush.msra.mxu0 %v865
    %897 = vmatmul.f32.gmra.mxu0 %v371
    %v898 = vpop.f32.mrf.mxu0
    %v899 = vadd.f32 0.0, %v898
    %900 = vmatmul.f32.gmra.mxu0 %v372
    %v901 = vpop.f32.mrf.mxu0
    %v902 = vadd.f32 0.0, %v901
    %903 = vmatmul.f32.gmra.mxu0 %v373
    %v904 = vpop.f32.mrf.mxu0
    %v905 = vadd.f32 0.0, %v904
    %906 = vmatmul.f32.gmra.mxu0 %v374
    %v907 = vpop.f32.mrf.mxu0
    %v908 = vadd.f32 0.0, %v907
    %909 = vdwg.mxu0
    %v911 = vsel %vm429, %v860, 0
    %v914 = vsel %vm429, %v861, 0
    %v917 = vsel %vm429, %v862, 0
    %v920 = vsel %vm429, %v863, 0
    %922 = vmatpush.msra.mxu0 0.0
    %923 = vmatpush.msra.mxu0 0.0
    %924 = vmatpush.msra.mxu0 0.0
    %925 = vmatpush.msra.mxu0 0.0
    %926 = vmatpush.msra.mxu0 0.0
    %927 = vmatpush.msra.mxu0 0.0
    %928 = vmatpush.msra.mxu0 0.0
    %929 = vmatpush.msra.mxu0 0.0
    %930 = vmatpush.msra.mxu0 0.0
    %931 = vmatpush.msra.mxu0 0.0
    %932 = vmatpush.msra.mxu0 0.0
    %933 = vmatpush.msra.mxu0 0.0
    %934 = vmatpush.msra.mxu0 %v908
    %935 = vmatpush.msra.mxu0 %v905
    %936 = vmatpush.msra.mxu0 %v902
    %937 = vmatpush.msra.mxu0 %v899
    %938 = vmatmul.f32.gmra.mxu0 %v911
    %v939 = vpop.f32.mrf.mxu0
    %v940 = vadd.f32 0.0, %v939
    %941 = vmatmul.f32.gmra.mxu0 %v914
    %v942 = vpop.f32.mrf.mxu0
    %v943 = vadd.f32 0.0, %v942
    %944 = vmatmul.f32.gmra.mxu0 %v917
    %v945 = vpop.f32.mrf.mxu0
    %v946 = vadd.f32 0.0, %v945
    %947 = vmatmul.f32.gmra.mxu0 %v920
    %v948 = vpop.f32.mrf.mxu0
    %v949 = vadd.f32 0.0, %v948
    %950 = vdwg.mxu0
    %v951 = vadd.f32 %v855, %v940
    %v952 = vadd.f32 %v856, %v943
    %v953 = vadd.f32 %v857, %v946
    %v954 = vadd.f32 %v858, %v949
    %s955 = scalar_lea.vmem %s2, 192
    %v956 = vld [vmem:[%s955] sm:$0xff]
    %v957 = vld [vmem:[%s955 + $0x8] sm:$0xff]
    %v958 = vld [vmem:[%s955 + $0x10] sm:$0xff]
    %v959 = vld [vmem:[%s955 + $0x18] sm:$0xff]
    %s960 = scalar_lea.vmem [#allocation6], 768
    %v961 = vld [vmem:[%s960] sm:$0xff]
    %v962 = vld [vmem:[%s960 + $0x8] sm:$0xff]
    %v963 = vld [vmem:[%s960 + $0x10] sm:$0xff]
    %v964 = vld [vmem:[%s960 + $0x18] sm:$0xff]
    %v965 = vld [vmem:[%s960 + $0x20] sm:$0xff]
    %v966 = vld [vmem:[%s960 + $0x28] sm:$0xff]
    %v967 = vld [vmem:[%s960 + $0x30] sm:$0xff]
    %v968 = vld [vmem:[%s960 + $0x38] sm:$0xff]
    %v969 = vld [vmem:[%s960 + $0x40] sm:$0xff]
    %v970 = vld [vmem:[%s960 + $0x48] sm:$0xff]
    %v971 = vld [vmem:[%s960 + $0x50] sm:$0xff]
    %v972 = vld [vmem:[%s960 + $0x58] sm:$0xff]
    %v973 = vld [vmem:[%s960 + $0x60] sm:$0xff]
    %v974 = vld [vmem:[%s960 + $0x68] sm:$0xff]
    %v975 = vld [vmem:[%s960 + $0x70] sm:$0xff]
    %v976 = vld [vmem:[%s960 + $0x78] sm:$0xff]
    %977 = vmatpush.msra.mxu0 %v976
    %978 = vmatpush.msra.mxu0 %v975
    %979 = vmatpush.msra.mxu0 %v974
    %980 = vmatpush.msra.mxu0 %v973
    %981 = vmatpush.msra.mxu0 %v972
    %982 = vmatpush.msra.mxu0 %v971
    %983 = vmatpush.msra.mxu0 %v970
    %984 = vmatpush.msra.mxu0 %v969
    %985 = vmatpush.msra.mxu0 %v968
    %986 = vmatpush.msra.mxu0 %v967
    %987 = vmatpush.msra.mxu0 %v966
    %988 = vmatpush.msra.mxu0 %v965
    %989 = vmatpush.msra.mxu0 %v964
    %990 = vmatpush.msra.mxu0 %v963
    %991 = vmatpush.msra.mxu0 %v962
    %992 = vmatpush.msra.mxu0 %v961
    %993 = vmatmul.f32.gmra.mxu0 %v371
    %v994 = vpop.f32.mrf.mxu0
    %v995 = vadd.f32 0.0, %v994
    %996 = vmatmul.f32.gmra.mxu0 %v372
    %v997 = vpop.f32.mrf.mxu0
    %v998 = vadd.f32 0.0, %v997
    %999 = vmatmul.f32.gmra.mxu0 %v373
    %v1000 = vpop.f32.mrf.mxu0
    %v1001 = vadd.f32 0.0, %v1000
    %1002 = vmatmul.f32.gmra.mxu0 %v374
    %v1003 = vpop.f32.mrf.mxu0
    %v1004 = vadd.f32 0.0, %v1003
    %1005 = vdwg.mxu0
    %v1007 = vsel %vm429, %v956, 0
    %v1010 = vsel %vm429, %v957, 0
    %v1013 = vsel %vm429, %v958, 0
    %v1016 = vsel %vm429, %v959, 0
    %1018 = vmatpush.msra.mxu0 0.0
    %1019 = vmatpush.msra.mxu0 0.0
    %1020 = vmatpush.msra.mxu0 0.0
    %1021 = vmatpush.msra.mxu0 0.0
    %1022 = vmatpush.msra.mxu0 0.0
    %1023 = vmatpush.msra.mxu0 0.0
    %1024 = vmatpush.msra.mxu0 0.0
    %1025 = vmatpush.msra.mxu0 0.0
    %1026 = vmatpush.msra.mxu0 0.0
    %1027 = vmatpush.msra.mxu0 0.0
    %1028 = vmatpush.msra.mxu0 0.0
    %1029 = vmatpush.msra.mxu0 0.0
    %1030 = vmatpush.msra.mxu0 %v1004
    %1031 = vmatpush.msra.mxu0 %v1001
    %1032 = vmatpush.msra.mxu0 %v998
    %1033 = vmatpush.msra.mxu0 %v995
    %1034 = vmatmul.f32.gmra.mxu0 %v1007
    %v1035 = vpop.f32.mrf.mxu0
    %v1036 = vadd.f32 0.0, %v1035
    %1037 = vmatmul.f32.gmra.mxu0 %v1010
    %v1038 = vpop.f32.mrf.mxu0
    %v1039 = vadd.f32 0.0, %v1038
    %1040 = vmatmul.f32.gmra.mxu0 %v1013
    %v1041 = vpop.f32.mrf.mxu0
    %v1042 = vadd.f32 0.0, %v1041
    %1043 = vmatmul.f32.gmra.mxu0 %v1016
    %v1044 = vpop.f32.mrf.mxu0
    %v1045 = vadd.f32 0.0, %v1044
    %1046 = vdwg.mxu0
    %v1047 = vadd.f32 %v951, %v1036
    %v1048 = vadd.f32 %v952, %v1039
    %v1049 = vadd.f32 %v953, %v1042
    %v1050 = vadd.f32 %v954, %v1045
    %v1051 = vld [vmem:[#allocation9] sm:$0x1]
    %v1052 = vld [vmem:[#allocation10] sm:$0x1]
    %v1053 = vadd.f32 %v1047, %v1048
    %v1054 = vadd.f32 %v1053, %v1049
    %v1055 = vadd.f32 %v1054, %v1050
    %v1056 = vrot.slane %v1055, 4
    %v1057 = vadd.f32 %v1055, %v1056
    %v1058 = vrot.slane %v1057, 2
    %v1059 = vadd.f32 %v1057, %v1058
    %v1060 = vrot.slane %v1059, 1
    %v1061 = vadd.f32 %v1059, %v1060
    %v1062 = vmul.f32 %v1047, %v1047
    %v1063 = vmul.f32 %v1048, %v1048
    %v1064 = vmul.f32 %v1049, %v1049
    %v1065 = vmul.f32 %v1050, %v1050
    %v1066 = vadd.f32 %v1062, %v1063
    %v1067 = vadd.f32 %v1066, %v1064
    %v1068 = vadd.f32 %v1067, %v1065
    %v1069 = vrot.slane %v1068, 4
    %v1070 = vadd.f32 %v1068, %v1069
    %v1071 = vrot.slane %v1070, 2
    %v1072 = vadd.f32 %v1070, %v1071
    %v1073 = vrot.slane %v1072, 1
    %v1074 = vadd.f32 %v1072, %v1073
    %1075 = vmatpush.msra.mxu0 %v278
    %1076 = vmatpush.msra.mxu0 %v277
    %1077 = vmatpush.msra.mxu0 %v276
    %1078 = vmatpush.msra.mxu0 %v275
    %1079 = vmatpush.msra.mxu0 %v274
    %1080 = vmatpush.msra.mxu0 %v273
    %1081 = vmatpush.msra.mxu0 %v272
    %1082 = vmatpush.msra.mxu0 %v271
    %1083 = vmatpush.msra.mxu0 %v270
    %1084 = vmatpush.msra.mxu0 %v269
    %1085 = vmatpush.msra.mxu0 %v268
    %1086 = vmatpush.msra.mxu0 %v267
    %1087 = vmatpush.msra.mxu0 %v266
    %1088 = vmatpush.msra.mxu0 %v265
    %1089 = vmatpush.msra.mxu0 %v264
    %1090 = vmatpush.msra.mxu0 %v263
    %1091 = vmatmul.f32.gmra.mxu0 %v1061
    %v1092 = vpop.f32.mrf.mxu0
    %v1093 = vadd.f32 0.0, %v1092
    %1094 = vdwg.mxu0
    %1095 = vmatpush.msra.mxu0 %v278
    %1096 = vmatpush.msra.mxu0 %v277
    %1097 = vmatpush.msra.mxu0 %v276
    %1098 = vmatpush.msra.mxu0 %v275
    %1099 = vmatpush.msra.mxu0 %v274
    %1100 = vmatpush.msra.mxu0 %v273
    %1101 = vmatpush.msra.mxu0 %v272
    %1102 = vmatpush.msra.mxu0 %v271
    %1103 = vmatpush.msra.mxu0 %v270
    %1104 = vmatpush.msra.mxu0 %v269
    %1105 = vmatpush.msra.mxu0 %v268
    %1106 = vmatpush.msra.mxu0 %v267
    %1107 = vmatpush.msra.mxu0 %v266
    %1108 = vmatpush.msra.mxu0 %v265
    %1109 = vmatpush.msra.mxu0 %v264
    %1110 = vmatpush.msra.mxu0 %v263
    %1111 = vmatmul.f32.gmra.mxu0 %v1074
    %v1112 = vpop.f32.mrf.mxu0
    %v1113 = vadd.f32 0.0, %v1112
    %1114 = vdwg.mxu0
    %v1115 = vmul.f32 %v1093, %v1093
    %v1116 = vsub.f32 %v1113, %v1115
    %v1117 = vmax.f32 %v1116, 0.0
    %v1118 = vadd.f32 %v1117, 1e-05
    %v1119 = vrsqrt.pop %v1118
    %v1120 = vmul.f32 %v1119, %v1118
    %v1121 = vmul.f32 %v1120, %v1119
    %v1122 = vmul.f32 0.5, %v1121
    %v1123 = vsub.f32 1.5, %v1122
    %v1124 = vmul.f32 %v1119, %v1123
    %vm1125 = vweird.f32 %v1118
    %vm1126 = vweird.f32 %v1119
    %vm1127 = vmor %vm1125, %vm1126
    %v1128 = vsel %vm1127, %v1119, %v1124
    %v1129 = vperm.slane %v1093, 0
    %v1130 = vsub.f32 %v1047, %v1129
    %v1131 = vsub.f32 %v1048, %v1129
    %v1132 = vsub.f32 %v1049, %v1129
    %v1133 = vsub.f32 %v1050, %v1129
    %v1134 = vmul.f32 %v1128, %v1051
    %v1135 = vperm.slane %v1134, 0
    %v1136 = vmul.f32 %v1130, %v1135
    %v1137 = vmul.f32 %v1131, %v1135
    %v1138 = vmul.f32 %v1132, %v1135
    %v1139 = vmul.f32 %v1133, %v1135
    %v1141 = vperm.slane %v1052, 0
    %v1143 = vadd.f32 %v1136, %v1141
    %v1144 = vadd.f32 %v1137, %v1141
    %v1145 = vadd.f32 %v1138, %v1141
    %v1146 = vadd.f32 %v1139, %v1141
    %v1147 = vld [vmem:[#allocation12] sm:$0xff]
    %v1148 = vld [vmem:[#allocation12 + $0x8] sm:$0xff]
    %v1149 = vld [vmem:[#allocation12 + $0x10] sm:$0xff]
    %v1150 = vld [vmem:[#allocation12 + $0x18] sm:$0xff]
    %v1151 = vld [vmem:[#allocation12 + $0x20] sm:$0xff]
    %v1152 = vld [vmem:[#allocation12 + $0x28] sm:$0xff]
    %v1153 = vld [vmem:[#allocation12 + $0x30] sm:$0xff]
    %v1154 = vld [vmem:[#allocation12 + $0x38] sm:$0xff]
    %v1155 = vld [vmem:[#allocation12 + $0x40] sm:$0xff]
    %v1156 = vld [vmem:[#allocation12 + $0x48] sm:$0xff]
    %v1157 = vld [vmem:[#allocation12 + $0x50] sm:$0xff]
    %v1158 = vld [vmem:[#allocation12 + $0x58] sm:$0xff]
    %v1159 = vld [vmem:[#allocation12 + $0x60] sm:$0xff]
    %v1160 = vld [vmem:[#allocation12 + $0x68] sm:$0xff]
    %v1161 = vld [vmem:[#allocation12 + $0x70] sm:$0xff]
    %v1162 = vld [vmem:[#allocation12 + $0x78] sm:$0xff]
    %v1163 = vld [vmem:[#allocation12 + $0x80] sm:$0xff]
    %v1164 = vld [vmem:[#allocation12 + $0x88] sm:$0xff]
    %v1165 = vld [vmem:[#allocation12 + $0x90] sm:$0xff]
    %v1166 = vld [vmem:[#allocation12 + $0x98] sm:$0xff]
    %v1167 = vld [vmem:[#allocation12 + $0xa0] sm:$0xff]
    %v1168 = vld [vmem:[#allocation12 + $0xa8] sm:$0xff]
    %v1169 = vld [vmem:[#allocation12 + $0xb0] sm:$0xff]
    %v1170 = vld [vmem:[#allocation12 + $0xb8] sm:$0xff]
    %v1171 = vld [vmem:[#allocation12 + $0xc0] sm:$0xff]
    %v1172 = vld [vmem:[#allocation12 + $0xc8] sm:$0xff]
    %v1173 = vld [vmem:[#allocation12 + $0xd0] sm:$0xff]
    %v1174 = vld [vmem:[#allocation12 + $0xd8] sm:$0xff]
    %v1175 = vld [vmem:[#allocation12 + $0xe0] sm:$0xff]
    %v1176 = vld [vmem:[#allocation12 + $0xe8] sm:$0xff]
    %v1177 = vld [vmem:[#allocation12 + $0xf0] sm:$0xff]
    %v1178 = vld [vmem:[#allocation12 + $0xf8] sm:$0xff]
    %v1179 = vld [vmem:[#allocation12 + $0x100] sm:$0xff]
    %v1180 = vld [vmem:[#allocation12 + $0x108] sm:$0xff]
    %v1181 = vld [vmem:[#allocation12 + $0x110] sm:$0xff]
    %v1182 = vld [vmem:[#allocation12 + $0x118] sm:$0xff]
    %v1183 = vld [vmem:[#allocation12 + $0x120] sm:$0xff]
    %v1184 = vld [vmem:[#allocation12 + $0x128] sm:$0xff]
    %v1185 = vld [vmem:[#allocation12 + $0x130] sm:$0xff]
    %v1186 = vld [vmem:[#allocation12 + $0x138] sm:$0xff]
    %v1187 = vld [vmem:[#allocation12 + $0x140] sm:$0xff]
    %v1188 = vld [vmem:[#allocation12 + $0x148] sm:$0xff]
    %v1189 = vld [vmem:[#allocation12 + $0x150] sm:$0xff]
    %v1190 = vld [vmem:[#allocation12 + $0x158] sm:$0xff]
    %v1191 = vld [vmem:[#allocation12 + $0x160] sm:$0xff]
    %v1192 = vld [vmem:[#allocation12 + $0x168] sm:$0xff]
    %v1193 = vld [vmem:[#allocation12 + $0x170] sm:$0xff]
    %v1194 = vld [vmem:[#allocation12 + $0x178] sm:$0xff]
    %v1195 = vld [vmem:[#allocation12 + $0x180] sm:$0xff]
    %v1196 = vld [vmem:[#allocation12 + $0x188] sm:$0xff]
    %v1197 = vld [vmem:[#allocation12 + $0x190] sm:$0xff]
    %v1198 = vld [vmem:[#allocation12 + $0x198] sm:$0xff]
    %v1199 = vld [vmem:[#allocation12 + $0x1a0] sm:$0xff]
    %v1200 = vld [vmem:[#allocation12 + $0x1a8] sm:$0xff]
    %v1201 = vld [vmem:[#allocation12 + $0x1b0] sm:$0xff]
    %v1202 = vld [vmem:[#allocation12 + $0x1b8] sm:$0xff]
    %v1203 = vld [vmem:[#allocation12 + $0x1c0] sm:$0xff]
    %v1204 = vld [vmem:[#allocation12 + $0x1c8] sm:$0xff]
    %v1205 = vld [vmem:[#allocation12 + $0x1d0] sm:$0xff]
    %v1206 = vld [vmem:[#allocation12 + $0x1d8] sm:$0xff]
    %v1207 = vld [vmem:[#allocation12 + $0x1e0] sm:$0xff]
    %v1208 = vld [vmem:[#allocation12 + $0x1e8] sm:$0xff]
    %v1209 = vld [vmem:[#allocation12 + $0x1f0] sm:$0xff]
    %v1210 = vld [vmem:[#allocation12 + $0x1f8] sm:$0xff]
    %v1211 = vld [vmem:[%s10] sm:$0xf]
    %v1213 = vperm.slane %v1211, 0
    %v1214 = vperm.slane %v1211, 1
    %v1215 = vperm.slane %v1211, 2
    %v1216 = vperm.slane %v1211, 3
    %1221 = vmatpush.msra.mxu0 %v1207
    %1222 = vmatpush.msra.mxu0 %v1203
    %1223 = vmatpush.msra.mxu0 %v1199
    %1224 = vmatpush.msra.mxu0 %v1195
    %1225 = vmatpush.msra.mxu0 %v1191
    %1226 = vmatpush.msra.mxu0 %v1187
    %1227 = vmatpush.msra.mxu0 %v1183
    %1228 = vmatpush.msra.mxu0 %v1179
    %1229 = vmatpush.msra.mxu0 %v1175
    %1230 = vmatpush.msra.mxu0 %v1171
    %1231 = vmatpush.msra.mxu0 %v1167
    %1232 = vmatpush.msra.mxu0 %v1163
    %1233 = vmatpush.msra.mxu0 %v1159
    %1234 = vmatpush.msra.mxu0 %v1155
    %1235 = vmatpush.msra.mxu0 %v1151
    %1236 = vmatpush.msra.mxu0 %v1147
    %1237 = vmatmul.f32.gmra.mxu0 %v1143
    %v1238 = vpop.f32.mrf.mxu0
    %v1239 = vadd.f32 %v1213, %v1238
    %1240 = vmatmul.f32.gmra.mxu0 %v1144
    %v1241 = vpop.f32.mrf.mxu0
    %v1242 = vadd.f32 %v1213, %v1241
    %1243 = vmatmul.f32.gmra.mxu0 %v1145
    %v1244 = vpop.f32.mrf.mxu0
    %v1245 = vadd.f32 %v1213, %v1244
    %1246 = vmatmul.f32.gmra.mxu0 %v1146
    %v1247 = vpop.f32.mrf.mxu0
    %v1248 = vadd.f32 %v1213, %v1247
    %1249 = vdwg.mxu0
    %1250 = vmatpush.msra.mxu0 %v1208
    %1251 = vmatpush.msra.mxu0 %v1204
    %1252 = vmatpush.msra.mxu0 %v1200
    %1253 = vmatpush.msra.mxu0 %v1196
    %1254 = vmatpush.msra.mxu0 %v1192
    %1255 = vmatpush.msra.mxu0 %v1188
    %1256 = vmatpush.msra.mxu0 %v1184
    %1257 = vmatpush.msra.mxu0 %v1180
    %1258 = vmatpush.msra.mxu0 %v1176
    %1259 = vmatpush.msra.mxu0 %v1172
    %1260 = vmatpush.msra.mxu0 %v1168
    %1261 = vmatpush.msra.mxu0 %v1164
    %1262 = vmatpush.msra.mxu0 %v1160
    %1263 = vmatpush.msra.mxu0 %v1156
    %1264 = vmatpush.msra.mxu0 %v1152
    %1265 = vmatpush.msra.mxu0 %v1148
    %1266 = vmatmul.f32.gmra.mxu0 %v1143
    %v1267 = vpop.f32.mrf.mxu0
    %v1268 = vadd.f32 %v1214, %v1267
    %1269 = vmatmul.f32.gmra.mxu0 %v1144
    %v1270 = vpop.f32.mrf.mxu0
    %v1271 = vadd.f32 %v1214, %v1270
    %1272 = vmatmul.f32.gmra.mxu0 %v1145
    %v1273 = vpop.f32.mrf.mxu0
    %v1274 = vadd.f32 %v1214, %v1273
    %1275 = vmatmul.f32.gmra.mxu0 %v1146
    %v1276 = vpop.f32.mrf.mxu0
    %v1277 = vadd.f32 %v1214, %v1276
    %1278 = vdwg.mxu0
    %1279 = vmatpush.msra.mxu0 %v1209
    %1280 = vmatpush.msra.mxu0 %v1205
    %1281 = vmatpush.msra.mxu0 %v1201
    %1282 = vmatpush.msra.mxu0 %v1197
    %1283 = vmatpush.msra.mxu0 %v1193
    %1284 = vmatpush.msra.mxu0 %v1189
    %1285 = vmatpush.msra.mxu0 %v1185
    %1286 = vmatpush.msra.mxu0 %v1181
    %1287 = vmatpush.msra.mxu0 %v1177
    %1288 = vmatpush.msra.mxu0 %v1173
    %1289 = vmatpush.msra.mxu0 %v1169
    %1290 = vmatpush.msra.mxu0 %v1165
    %1291 = vmatpush.msra.mxu0 %v1161
    %1292 = vmatpush.msra.mxu0 %v1157
    %1293 = vmatpush.msra.mxu0 %v1153
    %1294 = vmatpush.msra.mxu0 %v1149
    %1295 = vmatmul.f32.gmra.mxu0 %v1143
    %v1296 = vpop.f32.mrf.mxu0
    %v1297 = vadd.f32 %v1215, %v1296
    %1298 = vmatmul.f32.gmra.mxu0 %v1144
    %v1299 = vpop.f32.mrf.mxu0
    %v1300 = vadd.f32 %v1215, %v1299
    %1301 = vmatmul.f32.gmra.mxu0 %v1145
    %v1302 = vpop.f32.mrf.mxu0
    %v1303 = vadd.f32 %v1215, %v1302
    %1304 = vmatmul.f32.gmra.mxu0 %v1146
    %v1305 = vpop.f32.mrf.mxu0
    %v1306 = vadd.f32 %v1215, %v1305
    %1307 = vdwg.mxu0
    %1308 = vmatpush.msra.mxu0 %v1210
    %1309 = vmatpush.msra.mxu0 %v1206
    %1310 = vmatpush.msra.mxu0 %v1202
    %1311 = vmatpush.msra.mxu0 %v1198
    %1312 = vmatpush.msra.mxu0 %v1194
    %1313 = vmatpush.msra.mxu0 %v1190
    %1314 = vmatpush.msra.mxu0 %v1186
    %1315 = vmatpush.msra.mxu0 %v1182
    %1316 = vmatpush.msra.mxu0 %v1178
    %1317 = vmatpush.msra.mxu0 %v1174
    %1318 = vmatpush.msra.mxu0 %v1170
    %1319 = vmatpush.msra.mxu0 %v1166
    %1320 = vmatpush.msra.mxu0 %v1162
    %1321 = vmatpush.msra.mxu0 %v1158
    %1322 = vmatpush.msra.mxu0 %v1154
    %1323 = vmatpush.msra.mxu0 %v1150
    %1324 = vmatmul.f32.gmra.mxu0 %v1143
    %v1325 = vpop.f32.mrf.mxu0
    %v1326 = vadd.f32 %v1216, %v1325
    %1327 = vmatmul.f32.gmra.mxu0 %v1144
    %v1328 = vpop.f32.mrf.mxu0
    %v1329 = vadd.f32 %v1216, %v1328
    %1330 = vmatmul.f32.gmra.mxu0 %v1145
    %v1331 = vpop.f32.mrf.mxu0
    %v1332 = vadd.f32 %v1216, %v1331
    %1333 = vmatmul.f32.gmra.mxu0 %v1146
    %v1334 = vpop.f32.mrf.mxu0
    %v1335 = vadd.f32 %v1216, %v1334
    %1336 = vdwg.mxu0
    %v1337 = vmax.f32 %v1239, 0.0
    %v1338 = vmax.f32 %v1268, 0.0
    %v1339 = vmax.f32 %v1242, 0.0
    %v1340 = vmax.f32 %v1271, 0.0
    %v1341 = vmax.f32 %v1245, 0.0
    %v1342 = vmax.f32 %v1274, 0.0
    %v1343 = vmax.f32 %v1248, 0.0
    %v1344 = vmax.f32 %v1277, 0.0
    %v1345 = vmin.f32 %v1337, 6.0
    %v1346 = vmin.f32 %v1338, 6.0
    %v1347 = vmin.f32 %v1339, 6.0
    %v1348 = vmin.f32 %v1340, 6.0
    %v1349 = vmin.f32 %v1341, 6.0
    %v1350 = vmin.f32 %v1342, 6.0
    %v1351 = vmin.f32 %v1343, 6.0
    %v1352 = vmin.f32 %v1344, 6.0
    %v1353 = vmul.f32 %v1345, %v1297
    %v1354 = vmul.f32 %v1346, %v1326
    %v1355 = vmul.f32 %v1347, %v1300
    %v1356 = vmul.f32 %v1348, %v1329
    %v1357 = vmul.f32 %v1349, %v1303
    %v1358 = vmul.f32 %v1350, %v1332
    %v1359 = vmul.f32 %v1351, %v1306
    %v1360 = vmul.f32 %v1352, %v1335
    %v1361 = vld [vmem:[#allocation13] sm:$0xff]
    %v1362 = vld [vmem:[#allocation13 + $0x8] sm:$0xff]
    %v1363 = vld [vmem:[#allocation13 + $0x10] sm:$0xff]
    %v1364 = vld [vmem:[#allocation13 + $0x18] sm:$0xff]
    %v1365 = vld [vmem:[#allocation13 + $0x20] sm:$0xff]
    %v1366 = vld [vmem:[#allocation13 + $0x28] sm:$0xff]
    %v1367 = vld [vmem:[#allocation13 + $0x30] sm:$0xff]
    %v1368 = vld [vmem:[#allocation13 + $0x38] sm:$0xff]
    %v1369 = vld [vmem:[#allocation13 + $0x40] sm:$0xff]
    %v1370 = vld [vmem:[#allocation13 + $0x48] sm:$0xff]
    %v1371 = vld [vmem:[#allocation13 + $0x50] sm:$0xff]
    %v1372 = vld [vmem:[#allocation13 + $0x58] sm:$0xff]
    %v1373 = vld [vmem:[#allocation13 + $0x60] sm:$0xff]
    %v1374 = vld [vmem:[#allocation13 + $0x68] sm:$0xff]
    %v1375 = vld [vmem:[#allocation13 + $0x70] sm:$0xff]
    %v1376 = vld [vmem:[#allocation13 + $0x78] sm:$0xff]
    %v1377 = vld [vmem:[#allocation13 + $0x80] sm:$0xff]
    %v1378 = vld [vmem:[#allocation13 + $0x88] sm:$0xff]
    %v1379 = vld [vmem:[#allocation13 + $0x90] sm:$0xff]
    %v1380 = vld [vmem:[#allocation13 + $0x98] sm:$0xff]
    %v1381 = vld [vmem:[#allocation13 + $0xa0] sm:$0xff]
    %v1382 = vld [vmem:[#allocation13 + $0xa8] sm:$0xff]
    %v1383 = vld [vmem:[#allocation13 + $0xb0] sm:$0xff]
    %v1384 = vld [vmem:[#allocation13 + $0xb8] sm:$0xff]
    %v1385 = vld [vmem:[#allocation13 + $0xc0] sm:$0xff]
    %v1386 = vld [vmem:[#allocation13 + $0xc8] sm:$0xff]
    %v1387 = vld [vmem:[#allocation13 + $0xd0] sm:$0xff]
    %v1388 = vld [vmem:[#allocation13 + $0xd8] sm:$0xff]
    %v1389 = vld [vmem:[#allocation13 + $0xe0] sm:$0xff]
    %v1390 = vld [vmem:[#allocation13 + $0xe8] sm:$0xff]
    %v1391 = vld [vmem:[#allocation13 + $0xf0] sm:$0xff]
    %v1392 = vld [vmem:[#allocation13 + $0xf8] sm:$0xff]
    %v1393 = vld [vmem:[#allocation15] sm:$0x1]
    %v1395 = vperm.slane %v1393, 0
    %1397 = vmatpush.msra.mxu0 %v1376
    %1398 = vmatpush.msra.mxu0 %v1375
    %1399 = vmatpush.msra.mxu0 %v1374
    %1400 = vmatpush.msra.mxu0 %v1373
    %1401 = vmatpush.msra.mxu0 %v1372
    %1402 = vmatpush.msra.mxu0 %v1371
    %1403 = vmatpush.msra.mxu0 %v1370
    %1404 = vmatpush.msra.mxu0 %v1369
    %1405 = vmatpush.msra.mxu0 %v1368
    %1406 = vmatpush.msra.mxu0 %v1367
    %1407 = vmatpush.msra.mxu0 %v1366
    %1408 = vmatpush.msra.mxu0 %v1365
    %1409 = vmatpush.msra.mxu0 %v1364
    %1410 = vmatpush.msra.mxu0 %v1363
    %1411 = vmatpush.msra.mxu0 %v1362
    %1412 = vmatpush.msra.mxu0 %v1361
    %1413 = vmatmul.f32.gmra.mxu0 %v1353
    %v1414 = vpop.f32.mrf.mxu0
    %v1415 = vadd.f32 %v1395, %v1414
    %1416 = vmatmul.f32.gmra.mxu0 %v1355
    %v1417 = vpop.f32.mrf.mxu0
    %v1418 = vadd.f32 %v1395, %v1417
    %1419 = vmatmul.f32.gmra.mxu0 %v1357
    %v1420 = vpop.f32.mrf.mxu0
    %v1421 = vadd.f32 %v1395, %v1420
    %1422 = vmatmul.f32.gmra.mxu0 %v1359
    %v1423 = vpop.f32.mrf.mxu0
    %v1424 = vadd.f32 %v1395, %v1423
    %1425 = vdwg.mxu0
    %1426 = vmatpush.msra.mxu0 %v1392
    %1427 = vmatpush.msra.mxu0 %v1391
    %1428 = vmatpush.msra.mxu0 %v1390
    %1429 = vmatpush.msra.mxu0 %v1389
    %1430 = vmatpush.msra.mxu0 %v1388
    %1431 = vmatpush.msra.mxu0 %v1387
    %1432 = vmatpush.msra.mxu0 %v1386
    %1433 = vmatpush.msra.mxu0 %v1385
    %1434 = vmatpush.msra.mxu0 %v1384
    %1435 = vmatpush.msra.mxu0 %v1383
    %1436 = vmatpush.msra.mxu0 %v1382
    %1437 = vmatpush.msra.mxu0 %v1381
    %1438 = vmatpush.msra.mxu0 %v1380
    %1439 = vmatpush.msra.mxu0 %v1379
    %1440 = vmatpush.msra.mxu0 %v1378
    %1441 = vmatpush.msra.mxu0 %v1377
    %1442 = vmatmul.f32.gmra.mxu0 %v1354
    %v1443 = vpop.f32.mrf.mxu0
    %v1444 = vadd.f32 %v1415, %v1443
    %1445 = vmatmul.f32.gmra.mxu0 %v1356
    %v1446 = vpop.f32.mrf.mxu0
    %v1447 = vadd.f32 %v1418, %v1446
    %1448 = vmatmul.f32.gmra.mxu0 %v1358
    %v1449 = vpop.f32.mrf.mxu0
    %v1450 = vadd.f32 %v1421, %v1449
    %1451 = vmatmul.f32.gmra.mxu0 %v1360
    %v1452 = vpop.f32.mrf.mxu0
    %v1453 = vadd.f32 %v1424, %v1452
    %1454 = vdwg.mxu0
    %v1455 = vld [vmem:[#allocation16] sm:$0x1]
    %v1456 = vld [vmem:[#allocation18] sm:$0x1]
    %v1457 = vadd.f32 %v1444, %v1447
    %v1458 = vadd.f32 %v1457, %v1450
    %v1459 = vadd.f32 %v1458, %v1453
    %v1460 = vrot.slane %v1459, 4
    %v1461 = vadd.f32 %v1459, %v1460
    %v1462 = vrot.slane %v1461, 2
    %v1463 = vadd.f32 %v1461, %v1462
    %v1464 = vrot.slane %v1463, 1
    %v1465 = vadd.f32 %v1463, %v1464
    %v1466 = vmul.f32 %v1444, %v1444
    %v1467 = vmul.f32 %v1447, %v1447
    %v1468 = vmul.f32 %v1450, %v1450
    %v1469 = vmul.f32 %v1453, %v1453
    %v1470 = vadd.f32 %v1466, %v1467
    %v1471 = vadd.f32 %v1470, %v1468
    %v1472 = vadd.f32 %v1471, %v1469
    %v1473 = vrot.slane %v1472, 4
    %v1474 = vadd.f32 %v1472, %v1473
    %v1475 = vrot.slane %v1474, 2
    %v1476 = vadd.f32 %v1474, %v1475
    %v1477 = vrot.slane %v1476, 1
    %v1478 = vadd.f32 %v1476, %v1477
    %1479 = vmatpush.msra.mxu0 %v278
    %1480 = vmatpush.msra.mxu0 %v277
    %1481 = vmatpush.msra.mxu0 %v276
    %1482 = vmatpush.msra.mxu0 %v275
    %1483 = vmatpush.msra.mxu0 %v274
    %1484 = vmatpush.msra.mxu0 %v273
    %1485 = vmatpush.msra.mxu0 %v272
    %1486 = vmatpush.msra.mxu0 %v271
    %1487 = vmatpush.msra.mxu0 %v270
    %1488 = vmatpush.msra.mxu0 %v269
    %1489 = vmatpush.msra.mxu0 %v268
    %1490 = vmatpush.msra.mxu0 %v267
    %1491 = vmatpush.msra.mxu0 %v266
    %1492 = vmatpush.msra.mxu0 %v265
    %1493 = vmatpush.msra.mxu0 %v264
    %1494 = vmatpush.msra.mxu0 %v263
    %1495 = vmatmul.f32.gmra.mxu0 %v1465
    %v1496 = vpop.f32.mrf.mxu0
    %v1497 = vadd.f32 0.0, %v1496
    %1498 = vdwg.mxu0
    %1499 = vmatpush.msra.mxu0 %v278
    %1500 = vmatpush.msra.mxu0 %v277
    %1501 = vmatpush.msra.mxu0 %v276
    %1502 = vmatpush.msra.mxu0 %v275
    %1503 = vmatpush.msra.mxu0 %v274
    %1504 = vmatpush.msra.mxu0 %v273
    %1505 = vmatpush.msra.mxu0 %v272
    %1506 = vmatpush.msra.mxu0 %v271
    %1507 = vmatpush.msra.mxu0 %v270
    %1508 = vmatpush.msra.mxu0 %v269
    %1509 = vmatpush.msra.mxu0 %v268
    %1510 = vmatpush.msra.mxu0 %v267
    %1511 = vmatpush.msra.mxu0 %v266
    %1512 = vmatpush.msra.mxu0 %v265
    %1513 = vmatpush.msra.mxu0 %v264
    %1514 = vmatpush.msra.mxu0 %v263
    %1515 = vmatmul.f32.gmra.mxu0 %v1478
    %v1516 = vpop.f32.mrf.mxu0
    %v1517 = vadd.f32 0.0, %v1516
    %1518 = vdwg.mxu0
    %v1519 = vmul.f32 %v1497, %v1497
    %v1520 = vsub.f32 %v1517, %v1519
    %v1521 = vmax.f32 %v1520, 0.0
    %v1522 = vadd.f32 %v1521, 1e-05
    %v1523 = vrsqrt.pop %v1522
    %v1524 = vmul.f32 %v1523, %v1522
    %v1525 = vmul.f32 %v1524, %v1523
    %v1526 = vmul.f32 0.5, %v1525
    %v1527 = vsub.f32 1.5, %v1526
    %v1528 = vmul.f32 %v1523, %v1527
    %vm1529 = vweird.f32 %v1522
    %vm1530 = vweird.f32 %v1523
    %vm1531 = vmor %vm1529, %vm1530
    %v1532 = vsel %vm1531, %v1523, %v1528
    %v1533 = vperm.slane %v1497, 0
    %v1534 = vsub.f32 %v1444, %v1533
    %v1535 = vsub.f32 %v1447, %v1533
    %v1536 = vsub.f32 %v1450, %v1533
    %v1537 = vsub.f32 %v1453, %v1533
    %v1538 = vmul.f32 %v1532, %v1455
    %v1539 = vperm.slane %v1538, 0
    %v1540 = vmul.f32 %v1534, %v1539
    %v1541 = vmul.f32 %v1535, %v1539
    %v1542 = vmul.f32 %v1536, %v1539
    %v1543 = vmul.f32 %v1537, %v1539
    %v1545 = vperm.slane %v1456, 0
    %v1547 = vadd.f32 %v1540, %v1545
    %v1548 = vadd.f32 %v1541, %v1545
    %v1549 = vadd.f32 %v1542, %v1545
    %v1550 = vadd.f32 %v1543, %v1545
    %v1551 = vld [vmem:[#allocation21] sm:$0x1]
    %v1553 = vperm.slane %v1551, 0
    %v1555 = vadd.f32 %v1553, 0.0
    %v1556 = vld [vmem:[#allocation19] sm:$0xff]
    %v1557 = vld [vmem:[#allocation19 + $0x8] sm:$0xff]
    %v1558 = vld [vmem:[#allocation19 + $0x10] sm:$0xff]
    %v1559 = vld [vmem:[#allocation19 + $0x18] sm:$0xff]
    %v1560 = vld [vmem:[#allocation19 + $0x20] sm:$0xff]
    %v1561 = vld [vmem:[#allocation19 + $0x28] sm:$0xff]
    %v1562 = vld [vmem:[#allocation19 + $0x30] sm:$0xff]
    %v1563 = vld [vmem:[#allocation19 + $0x38] sm:$0xff]
    %v1564 = vld [vmem:[#allocation19 + $0x40] sm:$0xff]
    %v1565 = vld [vmem:[#allocation19 + $0x48] sm:$0xff]
    %v1566 = vld [vmem:[#allocation19 + $0x50] sm:$0xff]
    %v1567 = vld [vmem:[#allocation19 + $0x58] sm:$0xff]
    %v1568 = vld [vmem:[#allocation19 + $0x60] sm:$0xff]
    %v1569 = vld [vmem:[#allocation19 + $0x68] sm:$0xff]
    %v1570 = vld [vmem:[#allocation19 + $0x70] sm:$0xff]
    %v1571 = vld [vmem:[#allocation19 + $0x78] sm:$0xff]
    %1572 = vmatpush.msra.mxu0 %v1571
    %1573 = vmatpush.msra.mxu0 %v1570
    %1574 = vmatpush.msra.mxu0 %v1569
    %1575 = vmatpush.msra.mxu0 %v1568
    %1576 = vmatpush.msra.mxu0 %v1567
    %1577 = vmatpush.msra.mxu0 %v1566
    %1578 = vmatpush.msra.mxu0 %v1565
    %1579 = vmatpush.msra.mxu0 %v1564
    %1580 = vmatpush.msra.mxu0 %v1563
    %1581 = vmatpush.msra.mxu0 %v1562
    %1582 = vmatpush.msra.mxu0 %v1561
    %1583 = vmatpush.msra.mxu0 %v1560
    %1584 = vmatpush.msra.mxu0 %v1559
    %1585 = vmatpush.msra.mxu0 %v1558
    %1586 = vmatpush.msra.mxu0 %v1557
    %1587 = vmatpush.msra.mxu0 %v1556
    %1588 = vmatmul.f32.gmra.mxu0 %v1547
    %v1589 = vpop.f32.mrf.mxu0
    %v1590 = vadd.f32 0.0, %v1589
    %1591 = vmatmul.f32.gmra.mxu0 %v1548
    %v1592 = vpop.f32.mrf.mxu0
    %v1593 = vadd.f32 0.0, %v1592
    %1594 = vmatmul.f32.gmra.mxu0 %v1549
    %v1595 = vpop.f32.mrf.mxu0
    %v1596 = vadd.f32 0.0, %v1595
    %1597 = vmatmul.f32.gmra.mxu0 %v1550
    %v1598 = vpop.f32.mrf.mxu0
    %v1599 = vadd.f32 0.0, %v1598
    %1600 = vdwg.mxu0
    %1601 = vmatpush.msra.mxu0 0.0
    %1602 = vmatpush.msra.mxu0 0.0
    %1603 = vmatpush.msra.mxu0 0.0
    %1604 = vmatpush.msra.mxu0 0.0
    %1605 = vmatpush.msra.mxu0 0.0
    %1606 = vmatpush.msra.mxu0 0.0
    %1607 = vmatpush.msra.mxu0 0.0
    %1608 = vmatpush.msra.mxu0 0.0
    %1609 = vmatpush.msra.mxu0 0.0
    %1610 = vmatpush.msra.mxu0 0.0
    %1611 = vmatpush.msra.mxu0 0.0
    %1612 = vmatpush.msra.mxu0 0.0
    %1613 = vmatpush.msra.mxu0 %v1599
    %1614 = vmatpush.msra.mxu0 %v1596
    %1615 = vmatpush.msra.mxu0 %v1593
    %1616 = vmatpush.msra.mxu0 %v1590
    %1617 = vmatmul.f32.gmra.mxu0 %v431
    %v1618 = vpop.f32.mrf.mxu0
    %v1619 = vadd.f32 0.0, %v1618
    %1620 = vmatmul.f32.gmra.mxu0 %v434
    %v1621 = vpop.f32.mrf.mxu0
    %v1622 = vadd.f32 0.0, %v1621
    %1623 = vmatmul.f32.gmra.mxu0 %v437
    %v1624 = vpop.f32.mrf.mxu0
    %v1625 = vadd.f32 0.0, %v1624
    %1626 = vmatmul.f32.gmra.mxu0 %v440
    %v1627 = vpop.f32.mrf.mxu0
    %v1628 = vadd.f32 0.0, %v1627
    %1629 = vdwg.mxu0
    %v1630 = vadd.f32 %v1555, %v1619
    %v1631 = vadd.f32 %v1555, %v1622
    %v1632 = vadd.f32 %v1555, %v1625
    %v1633 = vadd.f32 %v1555, %v1628
    %s1634 = scalar_lea.vmem [#allocation19], 128
    %v1635 = vld [vmem:[%s1634] sm:$0xff]
    %v1636 = vld [vmem:[%s1634 + $0x8] sm:$0xff]
    %v1637 = vld [vmem:[%s1634 + $0x10] sm:$0xff]
    %v1638 = vld [vmem:[%s1634 + $0x18] sm:$0xff]
    %v1639 = vld [vmem:[%s1634 + $0x20] sm:$0xff]
    %v1640 = vld [vmem:[%s1634 + $0x28] sm:$0xff]
    %v1641 = vld [vmem:[%s1634 + $0x30] sm:$0xff]
    %v1642 = vld [vmem:[%s1634 + $0x38] sm:$0xff]
    %v1643 = vld [vmem:[%s1634 + $0x40] sm:$0xff]
    %v1644 = vld [vmem:[%s1634 + $0x48] sm:$0xff]
    %v1645 = vld [vmem:[%s1634 + $0x50] sm:$0xff]
    %v1646 = vld [vmem:[%s1634 + $0x58] sm:$0xff]
    %v1647 = vld [vmem:[%s1634 + $0x60] sm:$0xff]
    %v1648 = vld [vmem:[%s1634 + $0x68] sm:$0xff]
    %v1649 = vld [vmem:[%s1634 + $0x70] sm:$0xff]
    %v1650 = vld [vmem:[%s1634 + $0x78] sm:$0xff]
    %1651 = vmatpush.msra.mxu0 %v1650
    %1652 = vmatpush.msra.mxu0 %v1649
    %1653 = vmatpush.msra.mxu0 %v1648
    %1654 = vmatpush.msra.mxu0 %v1647
    %1655 = vmatpush.msra.mxu0 %v1646
    %1656 = vmatpush.msra.mxu0 %v1645
    %1657 = vmatpush.msra.mxu0 %v1644
    %1658 = vmatpush.msra.mxu0 %v1643
    %1659 = vmatpush.msra.mxu0 %v1642
    %1660 = vmatpush.msra.mxu0 %v1641
    %1661 = vmatpush.msra.mxu0 %v1640
    %1662 = vmatpush.msra.mxu0 %v1639
    %1663 = vmatpush.msra.mxu0 %v1638
    %1664 = vmatpush.msra.mxu0 %v1637
    %1665 = vmatpush.msra.mxu0 %v1636
    %1666 = vmatpush.msra.mxu0 %v1635
    %1667 = vmatmul.f32.gmra.mxu0 %v1547
    %v1668 = vpop.f32.mrf.mxu0
    %v1669 = vadd.f32 0.0, %v1668
    %1670 = vmatmul.f32.gmra.mxu0 %v1548
    %v1671 = vpop.f32.mrf.mxu0
    %v1672 = vadd.f32 0.0, %v1671
    %1673 = vmatmul.f32.gmra.mxu0 %v1549
    %v1674 = vpop.f32.mrf.mxu0
    %v1675 = vadd.f32 0.0, %v1674
    %1676 = vmatmul.f32.gmra.mxu0 %v1550
    %v1677 = vpop.f32.mrf.mxu0
    %v1678 = vadd.f32 0.0, %v1677
    %1679 = vdwg.mxu0
    %1680 = vmatpush.msra.mxu0 0.0
    %1681 = vmatpush.msra.mxu0 0.0
    %1682 = vmatpush.msra.mxu0 0.0
    %1683 = vmatpush.msra.mxu0 0.0
    %1684 = vmatpush.msra.mxu0 0.0
    %1685 = vmatpush.msra.mxu0 0.0
    %1686 = vmatpush.msra.mxu0 0.0
    %1687 = vmatpush.msra.mxu0 0.0
    %1688 = vmatpush.msra.mxu0 0.0
    %1689 = vmatpush.msra.mxu0 0.0
    %1690 = vmatpush.msra.mxu0 0.0
    %1691 = vmatpush.msra.mxu0 0.0
    %1692 = vmatpush.msra.mxu0 %v1678
    %1693 = vmatpush.msra.mxu0 %v1675
    %1694 = vmatpush.msra.mxu0 %v1672
    %1695 = vmatpush.msra.mxu0 %v1669
    %1696 = vmatmul.f32.gmra.mxu0 %v527
    %v1697 = vpop.f32.mrf.mxu0
    %v1698 = vadd.f32 0.0, %v1697
    %1699 = vmatmul.f32.gmra.mxu0 %v530
    %v1700 = vpop.f32.mrf.mxu0
    %v1701 = vadd.f32 0.0, %v1700
    %1702 = vmatmul.f32.gmra.mxu0 %v533
    %v1703 = vpop.f32.mrf.mxu0
    %v1704 = vadd.f32 0.0, %v1703
    %1705 = vmatmul.f32.gmra.mxu0 %v536
    %v1706 = vpop.f32.mrf.mxu0
    %v1707 = vadd.f32 0.0, %v1706
    %1708 = vdwg.mxu0
    %v1709 = vadd.f32 %v1630, %v1698
    %v1710 = vadd.f32 %v1631, %v1701
    %v1711 = vadd.f32 %v1632, %v1704
    %v1712 = vadd.f32 %v1633, %v1707
    %s1713 = scalar_lea.vmem [#allocation19], 256
    %v1714 = vld [vmem:[%s1713] sm:$0xff]
    %v1715 = vld [vmem:[%s1713 + $0x8] sm:$0xff]
    %v1716 = vld [vmem:[%s1713 + $0x10] sm:$0xff]
    %v1717 = vld [vmem:[%s1713 + $0x18] sm:$0xff]
    %v1718 = vld [vmem:[%s1713 + $0x20] sm:$0xff]
    %v1719 = vld [vmem:[%s1713 + $0x28] sm:$0xff]
    %v1720 = vld [vmem:[%s1713 + $0x30] sm:$0xff]
    %v1721 = vld [vmem:[%s1713 + $0x38] sm:$0xff]
    %v1722 = vld [vmem:[%s1713 + $0x40] sm:$0xff]
    %v1723 = vld [vmem:[%s1713 + $0x48] sm:$0xff]
    %v1724 = vld [vmem:[%s1713 + $0x50] sm:$0xff]
    %v1725 = vld [vmem:[%s1713 + $0x58] sm:$0xff]
    %v1726 = vld [vmem:[%s1713 + $0x60] sm:$0xff]
    %v1727 = vld [vmem:[%s1713 + $0x68] sm:$0xff]
    %v1728 = vld [vmem:[%s1713 + $0x70] sm:$0xff]
    %v1729 = vld [vmem:[%s1713 + $0x78] sm:$0xff]
    %1730 = vmatpush.msra.mxu0 %v1729
    %1731 = vmatpush.msra.mxu0 %v1728
    %1732 = vmatpush.msra.mxu0 %v1727
    %1733 = vmatpush.msra.mxu0 %v1726
    %1734 = vmatpush.msra.mxu0 %v1725
    %1735 = vmatpush.msra.mxu0 %v1724
    %1736 = vmatpush.msra.mxu0 %v1723
    %1737 = vmatpush.msra.mxu0 %v1722
    %1738 = vmatpush.msra.mxu0 %v1721
    %1739 = vmatpush.msra.mxu0 %v1720
    %1740 = vmatpush.msra.mxu0 %v1719
    %1741 = vmatpush.msra.mxu0 %v1718
    %1742 = vmatpush.msra.mxu0 %v1717
    %1743 = vmatpush.msra.mxu0 %v1716
    %1744 = vmatpush.msra.mxu0 %v1715
    %1745 = vmatpush.msra.mxu0 %v1714
    %1746 = vmatmul.f32.gmra.mxu0 %v1547
    %v1747 = vpop.f32.mrf.mxu0
    %v1748 = vadd.f32 0.0, %v1747
    %1749 = vmatmul.f32.gmra.mxu0 %v1548
    %v1750 = vpop.f32.mrf.mxu0
    %v1751 = vadd.f32 0.0, %v1750
    %1752 = vmatmul.f32.gmra.mxu0 %v1549
    %v1753 = vpop.f32.mrf.mxu0
    %v1754 = vadd.f32 0.0, %v1753
    %1755 = vmatmul.f32.gmra.mxu0 %v1550
    %v1756 = vpop.f32.mrf.mxu0
    %v1757 = vadd.f32 0.0, %v1756
    %1758 = vdwg.mxu0
    %1759 = vmatpush.msra.mxu0 0.0
    %1760 = vmatpush.msra.mxu0 0.0
    %1761 = vmatpush.msra.mxu0 0.0
    %1762 = vmatpush.msra.mxu0 0.0
    %1763 = vmatpush.msra.mxu0 0.0
    %1764 = vmatpush.msra.mxu0 0.0
    %1765 = vmatpush.msra.mxu0 0.0
    %1766 = vmatpush.msra.mxu0 0.0
    %1767 = vmatpush.msra.mxu0 0.0
    %1768 = vmatpush.msra.mxu0 0.0
    %1769 = vmatpush.msra.mxu0 0.0
    %1770 = vmatpush.msra.mxu0 0.0
    %1771 = vmatpush.msra.mxu0 %v1757
    %1772 = vmatpush.msra.mxu0 %v1754
    %1773 = vmatpush.msra.mxu0 %v1751
    %1774 = vmatpush.msra.mxu0 %v1748
    %1775 = vmatmul.f32.gmra.mxu0 %v623
    %v1776 = vpop.f32.mrf.mxu0
    %v1777 = vadd.f32 0.0, %v1776
    %1778 = vmatmul.f32.gmra.mxu0 %v626
    %v1779 = vpop.f32.mrf.mxu0
    %v1780 = vadd.f32 0.0, %v1779
    %1781 = vmatmul.f32.gmra.mxu0 %v629
    %v1782 = vpop.f32.mrf.mxu0
    %v1783 = vadd.f32 0.0, %v1782
    %1784 = vmatmul.f32.gmra.mxu0 %v632
    %v1785 = vpop.f32.mrf.mxu0
    %v1786 = vadd.f32 0.0, %v1785
    %1787 = vdwg.mxu0
    %v1788 = vadd.f32 %v1709, %v1777
    %v1789 = vadd.f32 %v1710, %v1780
    %v1790 = vadd.f32 %v1711, %v1783
    %v1791 = vadd.f32 %v1712, %v1786
    %s1792 = scalar_lea.vmem [#allocation19], 384
    %v1793 = vld [vmem:[%s1792] sm:$0xff]
    %v1794 = vld [vmem:[%s1792 + $0x8] sm:$0xff]
    %v1795 = vld [vmem:[%s1792 + $0x10] sm:$0xff]
    %v1796 = vld [vmem:[%s1792 + $0x18] sm:$0xff]
    %v1797 = vld [vmem:[%s1792 + $0x20] sm:$0xff]
    %v1798 = vld [vmem:[%s1792 + $0x28] sm:$0xff]
    %v1799 = vld [vmem:[%s1792 + $0x30] sm:$0xff]
    %v1800 = vld [vmem:[%s1792 + $0x38] sm:$0xff]
    %v1801 = vld [vmem:[%s1792 + $0x40] sm:$0xff]
    %v1802 = vld [vmem:[%s1792 + $0x48] sm:$0xff]
    %v1803 = vld [vmem:[%s1792 + $0x50] sm:$0xff]
    %v1804 = vld [vmem:[%s1792 + $0x58] sm:$0xff]
    %v1805 = vld [vmem:[%s1792 + $0x60] sm:$0xff]
    %v1806 = vld [vmem:[%s1792 + $0x68] sm:$0xff]
    %v1807 = vld [vmem:[%s1792 + $0x70] sm:$0xff]
    %v1808 = vld [vmem:[%s1792 + $0x78] sm:$0xff]
    %1809 = vmatpush.msra.mxu0 %v1808
    %1810 = vmatpush.msra.mxu0 %v1807
    %1811 = vmatpush.msra.mxu0 %v1806
    %1812 = vmatpush.msra.mxu0 %v1805
    %1813 = vmatpush.msra.mxu0 %v1804
    %1814 = vmatpush.msra.mxu0 %v1803
    %1815 = vmatpush.msra.mxu0 %v1802
    %1816 = vmatpush.msra.mxu0 %v1801
    %1817 = vmatpush.msra.mxu0 %v1800
    %1818 = vmatpush.msra.mxu0 %v1799
    %1819 = vmatpush.msra.mxu0 %v1798
    %1820 = vmatpush.msra.mxu0 %v1797
    %1821 = vmatpush.msra.mxu0 %v1796
    %1822 = vmatpush.msra.mxu0 %v1795
    %1823 = vmatpush.msra.mxu0 %v1794
    %1824 = vmatpush.msra.mxu0 %v1793
    %1825 = vmatmul.f32.gmra.mxu0 %v1547
    %v1826 = vpop.f32.mrf.mxu0
    %v1827 = vadd.f32 0.0, %v1826
    %1828 = vmatmul.f32.gmra.mxu0 %v1548
    %v1829 = vpop.f32.mrf.mxu0
    %v1830 = vadd.f32 0.0, %v1829
    %1831 = vmatmul.f32.gmra.mxu0 %v1549
    %v1832 = vpop.f32.mrf.mxu0
    %v1833 = vadd.f32 0.0, %v1832
    %1834 = vmatmul.f32.gmra.mxu0 %v1550
    %v1835 = vpop.f32.mrf.mxu0
    %v1836 = vadd.f32 0.0, %v1835
    %1837 = vdwg.mxu0
    %1838 = vmatpush.msra.mxu0 0.0
    %1839 = vmatpush.msra.mxu0 0.0
    %1840 = vmatpush.msra.mxu0 0.0
    %1841 = vmatpush.msra.mxu0 0.0
    %1842 = vmatpush.msra.mxu0 0.0
    %1843 = vmatpush.msra.mxu0 0.0
    %1844 = vmatpush.msra.mxu0 0.0
    %1845 = vmatpush.msra.mxu0 0.0
    %1846 = vmatpush.msra.mxu0 0.0
    %1847 = vmatpush.msra.mxu0 0.0
    %1848 = vmatpush.msra.mxu0 0.0
    %1849 = vmatpush.msra.mxu0 0.0
    %1850 = vmatpush.msra.mxu0 %v1836
    %1851 = vmatpush.msra.mxu0 %v1833
    %1852 = vmatpush.msra.mxu0 %v1830
    %1853 = vmatpush.msra.mxu0 %v1827
    %1854 = vmatmul.f32.gmra.mxu0 %v719
    %v1855 = vpop.f32.mrf.mxu0
    %v1856 = vadd.f32 0.0, %v1855
    %1857 = vmatmul.f32.gmra.mxu0 %v722
    %v1858 = vpop.f32.mrf.mxu0
    %v1859 = vadd.f32 0.0, %v1858
    %1860 = vmatmul.f32.gmra.mxu0 %v725
    %v1861 = vpop.f32.mrf.mxu0
    %v1862 = vadd.f32 0.0, %v1861
    %1863 = vmatmul.f32.gmra.mxu0 %v728
    %v1864 = vpop.f32.mrf.mxu0
    %v1865 = vadd.f32 0.0, %v1864
    %1866 = vdwg.mxu0
    %v1867 = vadd.f32 %v1788, %v1856
    %v1868 = vadd.f32 %v1789, %v1859
    %v1869 = vadd.f32 %v1790, %v1862
    %v1870 = vadd.f32 %v1791, %v1865
    %s1871 = scalar_lea.vmem [#allocation19], 512
    %v1872 = vld [vmem:[%s1871] sm:$0xff]
    %v1873 = vld [vmem:[%s1871 + $0x8] sm:$0xff]
    %v1874 = vld [vmem:[%s1871 + $0x10] sm:$0xff]
    %v1875 = vld [vmem:[%s1871 + $0x18] sm:$0xff]
    %v1876 = vld [vmem:[%s1871 + $0x20] sm:$0xff]
    %v1877 = vld [vmem:[%s1871 + $0x28] sm:$0xff]
    %v1878 = vld [vmem:[%s1871 + $0x30] sm:$0xff]
    %v1879 = vld [vmem:[%s1871 + $0x38] sm:$0xff]
    %v1880 = vld [vmem:[%s1871 + $0x40] sm:$0xff]
    %v1881 = vld [vmem:[%s1871 + $0x48] sm:$0xff]
    %v1882 = vld [vmem:[%s1871 + $0x50] sm:$0xff]
    %v1883 = vld [vmem:[%s1871 + $0x58] sm:$0xff]
    %v1884 = vld [vmem:[%s1871 + $0x60] sm:$0xff]
    %v1885 = vld [vmem:[%s1871 + $0x68] sm:$0xff]
    %v1886 = vld [vmem:[%s1871 + $0x70] sm:$0xff]
    %v1887 = vld [vmem:[%s1871 + $0x78] sm:$0xff]
    %1888 = vmatpush.msra.mxu0 %v1887
    %1889 = vmatpush.msra.mxu0 %v1886
    %1890 = vmatpush.msra.mxu0 %v1885
    %1891 = vmatpush.msra.mxu0 %v1884
    %1892 = vmatpush.msra.mxu0 %v1883
    %1893 = vmatpush.msra.mxu0 %v1882
    %1894 = vmatpush.msra.mxu0 %v1881
    %1895 = vmatpush.msra.mxu0 %v1880
    %1896 = vmatpush.msra.mxu0 %v1879
    %1897 = vmatpush.msra.mxu0 %v1878
    %1898 = vmatpush.msra.mxu0 %v1877
    %1899 = vmatpush.msra.mxu0 %v1876
    %1900 = vmatpush.msra.mxu0 %v1875
    %1901 = vmatpush.msra.mxu0 %v1874
    %1902 = vmatpush.msra.mxu0 %v1873
    %1903 = vmatpush.msra.mxu0 %v1872
    %1904 = vmatmul.f32.gmra.mxu0 %v1547
    %v1905 = vpop.f32.mrf.mxu0
    %v1906 = vadd.f32 0.0, %v1905
    %1907 = vmatmul.f32.gmra.mxu0 %v1548
    %v1908 = vpop.f32.mrf.mxu0
    %v1909 = vadd.f32 0.0, %v1908
    %1910 = vmatmul.f32.gmra.mxu0 %v1549
    %v1911 = vpop.f32.mrf.mxu0
    %v1912 = vadd.f32 0.0, %v1911
    %1913 = vmatmul.f32.gmra.mxu0 %v1550
    %v1914 = vpop.f32.mrf.mxu0
    %v1915 = vadd.f32 0.0, %v1914
    %1916 = vdwg.mxu0
    %1917 = vmatpush.msra.mxu0 0.0
    %1918 = vmatpush.msra.mxu0 0.0
    %1919 = vmatpush.msra.mxu0 0.0
    %1920 = vmatpush.msra.mxu0 0.0
    %1921 = vmatpush.msra.mxu0 0.0
    %1922 = vmatpush.msra.mxu0 0.0
    %1923 = vmatpush.msra.mxu0 0.0
    %1924 = vmatpush.msra.mxu0 0.0
    %1925 = vmatpush.msra.mxu0 0.0
    %1926 = vmatpush.msra.mxu0 0.0
    %1927 = vmatpush.msra.mxu0 0.0
    %1928 = vmatpush.msra.mxu0 0.0
    %1929 = vmatpush.msra.mxu0 %v1915
    %1930 = vmatpush.msra.mxu0 %v1912
    %1931 = vmatpush.msra.mxu0 %v1909
    %1932 = vmatpush.msra.mxu0 %v1906
    %1933 = vmatmul.f32.gmra.mxu0 %v815
    %v1934 = vpop.f32.mrf.mxu0
    %v1935 = vadd.f32 0.0, %v1934
    %1936 = vmatmul.f32.gmra.mxu0 %v818
    %v1937 = vpop.f32.mrf.mxu0
    %v1938 = vadd.f32 0.0, %v1937
    %1939 = vmatmul.f32.gmra.mxu0 %v821
    %v1940 = vpop.f32.mrf.mxu0
    %v1941 = vadd.f32 0.0, %v1940
    %1942 = vmatmul.f32.gmra.mxu0 %v824
    %v1943 = vpop.f32.mrf.mxu0
    %v1944 = vadd.f32 0.0, %v1943
    %1945 = vdwg.mxu0
    %v1946 = vadd.f32 %v1867, %v1935
    %v1947 = vadd.f32 %v1868, %v1938
    %v1948 = vadd.f32 %v1869, %v1941
    %v1949 = vadd.f32 %v1870, %v1944
    %s1950 = scalar_lea.vmem [#allocation19], 640
    %v1951 = vld [vmem:[%s1950] sm:$0xff]
    %v1952 = vld [vmem:[%s1950 + $0x8] sm:$0xff]
    %v1953 = vld [vmem:[%s1950 + $0x10] sm:$0xff]
    %v1954 = vld [vmem:[%s1950 + $0x18] sm:$0xff]
    %v1955 = vld [vmem:[%s1950 + $0x20] sm:$0xff]
    %v1956 = vld [vmem:[%s1950 + $0x28] sm:$0xff]
    %v1957 = vld [vmem:[%s1950 + $0x30] sm:$0xff]
    %v1958 = vld [vmem:[%s1950 + $0x38] sm:$0xff]
    %v1959 = vld [vmem:[%s1950 + $0x40] sm:$0xff]
    %v1960 = vld [vmem:[%s1950 + $0x48] sm:$0xff]
    %v1961 = vld [vmem:[%s1950 + $0x50] sm:$0xff]
    %v1962 = vld [vmem:[%s1950 + $0x58] sm:$0xff]
    %v1963 = vld [vmem:[%s1950 + $0x60] sm:$0xff]
    %v1964 = vld [vmem:[%s1950 + $0x68] sm:$0xff]
    %v1965 = vld [vmem:[%s1950 + $0x70] sm:$0xff]
    %v1966 = vld [vmem:[%s1950 + $0x78] sm:$0xff]
    %1967 = vmatpush.msra.mxu0 %v1966
    %1968 = vmatpush.msra.mxu0 %v1965
    %1969 = vmatpush.msra.mxu0 %v1964
    %1970 = vmatpush.msra.mxu0 %v1963
    %1971 = vmatpush.msra.mxu0 %v1962
    %1972 = vmatpush.msra.mxu0 %v1961
    %1973 = vmatpush.msra.mxu0 %v1960
    %1974 = vmatpush.msra.mxu0 %v1959
    %1975 = vmatpush.msra.mxu0 %v1958
    %1976 = vmatpush.msra.mxu0 %v1957
    %1977 = vmatpush.msra.mxu0 %v1956
    %1978 = vmatpush.msra.mxu0 %v1955
    %1979 = vmatpush.msra.mxu0 %v1954
    %1980 = vmatpush.msra.mxu0 %v1953
    %1981 = vmatpush.msra.mxu0 %v1952
    %1982 = vmatpush.msra.mxu0 %v1951
    %1983 = vmatmul.f32.gmra.mxu0 %v1547
    %v1984 = vpop.f32.mrf.mxu0
    %v1985 = vadd.f32 0.0, %v1984
    %1986 = vmatmul.f32.gmra.mxu0 %v1548
    %v1987 = vpop.f32.mrf.mxu0
    %v1988 = vadd.f32 0.0, %v1987
    %1989 = vmatmul.f32.gmra.mxu0 %v1549
    %v1990 = vpop.f32.mrf.mxu0
    %v1991 = vadd.f32 0.0, %v1990
    %1992 = vmatmul.f32.gmra.mxu0 %v1550
    %v1993 = vpop.f32.mrf.mxu0
    %v1994 = vadd.f32 0.0, %v1993
    %1995 = vdwg.mxu0
    %1996 = vmatpush.msra.mxu0 0.0
    %1997 = vmatpush.msra.mxu0 0.0
    %1998 = vmatpush.msra.mxu0 0.0
    %1999 = vmatpush.msra.mxu0 0.0
    %2000 = vmatpush.msra.mxu0 0.0
    %2001 = vmatpush.msra.mxu0 0.0
    %2002 = vmatpush.msra.mxu0 0.0
    %2003 = vmatpush.msra.mxu0 0.0
    %2004 = vmatpush.msra.mxu0 0.0
    %2005 = vmatpush.msra.mxu0 0.0
    %2006 = vmatpush.msra.mxu0 0.0
    %2007 = vmatpush.msra.mxu0 0.0
    %2008 = vmatpush.msra.mxu0 %v1994
    %2009 = vmatpush.msra.mxu0 %v1991
    %2010 = vmatpush.msra.mxu0 %v1988
    %2011 = vmatpush.msra.mxu0 %v1985
    %2012 = vmatmul.f32.gmra.mxu0 %v911
    %v2013 = vpop.f32.mrf.mxu0
    %v2014 = vadd.f32 0.0, %v2013
    %2015 = vmatmul.f32.gmra.mxu0 %v914
    %v2016 = vpop.f32.mrf.mxu0
    %v2017 = vadd.f32 0.0, %v2016
    %2018 = vmatmul.f32.gmra.mxu0 %v917
    %v2019 = vpop.f32.mrf.mxu0
    %v2020 = vadd.f32 0.0, %v2019
    %2021 = vmatmul.f32.gmra.mxu0 %v920
    %v2022 = vpop.f32.mrf.mxu0
    %v2023 = vadd.f32 0.0, %v2022
    %2024 = vdwg.mxu0
    %v2025 = vadd.f32 %v1946, %v2014
    %v2026 = vadd.f32 %v1947, %v2017
    %v2027 = vadd.f32 %v1948, %v2020
    %v2028 = vadd.f32 %v1949, %v2023
    %s2029 = scalar_lea.vmem [#allocation19], 768
    %v2030 = vld [vmem:[%s2029] sm:$0xff]
    %v2031 = vld [vmem:[%s2029 + $0x8] sm:$0xff]
    %v2032 = vld [vmem:[%s2029 + $0x10] sm:$0xff]
    %v2033 = vld [vmem:[%s2029 + $0x18] sm:$0xff]
    %v2034 = vld [vmem:[%s2029 + $0x20] sm:$0xff]
    %v2035 = vld [vmem:[%s2029 + $0x28] sm:$0xff]
    %v2036 = vld [vmem:[%s2029 + $0x30] sm:$0xff]
    %v2037 = vld [vmem:[%s2029 + $0x38] sm:$0xff]
    %v2038 = vld [vmem:[%s2029 + $0x40] sm:$0xff]
    %v2039 = vld [vmem:[%s2029 + $0x48] sm:$0xff]
    %v2040 = vld [vmem:[%s2029 + $0x50] sm:$0xff]
    %v2041 = vld [vmem:[%s2029 + $0x58] sm:$0xff]
    %v2042 = vld [vmem:[%s2029 + $0x60] sm:$0xff]
    %v2043 = vld [vmem:[%s2029 + $0x68] sm:$0xff]
    %v2044 = vld [vmem:[%s2029 + $0x70] sm:$0xff]
    %v2045 = vld [vmem:[%s2029 + $0x78] sm:$0xff]
    %2046 = vmatpush.msra.mxu0 %v2045
    %2047 = vmatpush.msra.mxu0 %v2044
    %2048 = vmatpush.msra.mxu0 %v2043
    %2049 = vmatpush.msra.mxu0 %v2042
    %2050 = vmatpush.msra.mxu0 %v2041
    %2051 = vmatpush.msra.mxu0 %v2040
    %2052 = vmatpush.msra.mxu0 %v2039
    %2053 = vmatpush.msra.mxu0 %v2038
    %2054 = vmatpush.msra.mxu0 %v2037
    %2055 = vmatpush.msra.mxu0 %v2036
    %2056 = vmatpush.msra.mxu0 %v2035
    %2057 = vmatpush.msra.mxu0 %v2034
    %2058 = vmatpush.msra.mxu0 %v2033
    %2059 = vmatpush.msra.mxu0 %v2032
    %2060 = vmatpush.msra.mxu0 %v2031
    %2061 = vmatpush.msra.mxu0 %v2030
    %2062 = vmatmul.f32.gmra.mxu0 %v1547
    %v2063 = vpop.f32.mrf.mxu0
    %v2064 = vadd.f32 0.0, %v2063
    %2065 = vmatmul.f32.gmra.mxu0 %v1548
    %v2066 = vpop.f32.mrf.mxu0
    %v2067 = vadd.f32 0.0, %v2066
    %2068 = vmatmul.f32.gmra.mxu0 %v1549
    %v2069 = vpop.f32.mrf.mxu0
    %v2070 = vadd.f32 0.0, %v2069
    %2071 = vmatmul.f32.gmra.mxu0 %v1550
    %v2072 = vpop.f32.mrf.mxu0
    %v2073 = vadd.f32 0.0, %v2072
    %2074 = vdwg.mxu0
    %2075 = vmatpush.msra.mxu0 0.0
    %2076 = vmatpush.msra.mxu0 0.0
    %2077 = vmatpush.msra.mxu0 0.0
    %2078 = vmatpush.msra.mxu0 0.0
    %2079 = vmatpush.msra.mxu0 0.0
    %2080 = vmatpush.msra.mxu0 0.0
    %2081 = vmatpush.msra.mxu0 0.0
    %2082 = vmatpush.msra.mxu0 0.0
    %2083 = vmatpush.msra.mxu0 0.0
    %2084 = vmatpush.msra.mxu0 0.0
    %2085 = vmatpush.msra.mxu0 0.0
    %2086 = vmatpush.msra.mxu0 0.0
    %2087 = vmatpush.msra.mxu0 %v2073
    %2088 = vmatpush.msra.mxu0 %v2070
    %2089 = vmatpush.msra.mxu0 %v2067
    %2090 = vmatpush.msra.mxu0 %v2064
    %2091 = vmatmul.f32.gmra.mxu0 %v1007
    %v2092 = vpop.f32.mrf.mxu0
    %v2093 = vadd.f32 0.0, %v2092
    %2094 = vmatmul.f32.gmra.mxu0 %v1010
    %v2095 = vpop.f32.mrf.mxu0
    %v2096 = vadd.f32 0.0, %v2095
    %2097 = vmatmul.f32.gmra.mxu0 %v1013
    %v2098 = vpop.f32.mrf.mxu0
    %v2099 = vadd.f32 0.0, %v2098
    %2100 = vmatmul.f32.gmra.mxu0 %v1016
    %v2101 = vpop.f32.mrf.mxu0
    %v2102 = vadd.f32 0.0, %v2101
    %2103 = vdwg.mxu0
    %v2104 = vadd.f32 %v2025, %v2093
    %v2105 = vadd.f32 %v2026, %v2096
    %v2106 = vadd.f32 %v2027, %v2099
    %v2107 = vadd.f32 %v2028, %v2102
    %v2108 = vld [vmem:[#allocation22] sm:$0x1]
    %v2109 = vadd.f32 %v371, %v2104
    %v2110 = vadd.f32 %v372, %v2105
    %v2111 = vadd.f32 %v373, %v2106
    %v2112 = vadd.f32 %v374, %v2107
    %v2114 = vperm.slane %v2108, 0
    %v2116 = vmul.f32 %v2114, %v2109
    %v2117 = vmul.f32 %v2114, %v2110
    %v2118 = vmul.f32 %v2114, %v2111
    %v2119 = vmul.f32 %v2114, %v2112
    %v2120 = vadd.f32 %v259, %v2116
    %v2121 = vadd.f32 %v260, %v2117
    %v2122 = vadd.f32 %v261, %v2118
    %v2123 = vadd.f32 %v262, %v2119
    %2124 = vst [vmem:[%s18] sm:$0xff] %v2120
    %2125 = vst [vmem:[%s18 + $0x8] sm:$0xff] %v2121
    %2126 = vst [vmem:[%s18 + $0x10] sm:$0xff] %v2122
    %2127 = vst [vmem:[%s18 + $0x18] sm:$0xff] %v2123
    // Predicated region
    $region130: #{metanext_up_stage0_forward.5} parent=1 // pred_check
      _
    $region131: #{metanext_up_stage0_forward.5} parent=1 // pred_check_branch
      %2129 = sbr.rel (0) target = $region133
    $region132: #{metanext_up_stage0_forward.5} parent=1 // pred_region
      _
    $region133: #{metanext_up_stage0_forward.5} parent=1 // pred_fallthru
      _
    // Predicated region
    $region134: #{metanext_up_stage0_forward.5} parent=1 // pred_check
      _
    $region135: #{metanext_up_stage0_forward.5} parent=1 // pred_check_branch
      %2131 = sbr.rel (0) target = $region137
    $region136: #{metanext_up_stage0_forward.5} parent=1 // pred_region
      _
    $region137: #{metanext_up_stage0_forward.5} parent=1 // pred_fallthru
      _
    %2132 = vsyncpa [#allocation3], 1
    %2133 = vsyncpa [#allocation5], 1
    %2134 = vsyncpa [#allocation8], 1
    %2135 = vsyncpa [#allocation11], 1
    %2136 = vsyncpa [#allocation14], 1
    %2137 = vsyncpa [#allocation17], 1
    %2138 = vsyncpa [#allocation20], 1
    %2139 = vsyncpa [#allocation23], 1

// kernel: metanext_up_stage0_forward.4
$region0: #{metanext_up_stage0_forward.4}
  #allocation0 [shape = 'u32[]', space=smem, size = 0x4, offset = 0x4, fixed_abs, tag = 'smem constant byte address 0x4 - core index']
  #allocation1 [shape = 'u32[72,128]{1,0:T(1,128)}', space=vmem, size = 0x9000, scoped, tag = 'internal scratch']
  %s0 = inlined_call_operand.vmem [shape: f32[32,128], index: 0, kind: input, shape index: {}]
  %s1 = inlined_call_operand.hbm [shape: f32[128,128], index: 1, kind: input, shape index: {}]
  %s2 = inlined_call_operand.vmem [shape: f32[7,32,32], index: 2, kind: input, shape index: {}]
  %s3 = inlined_call_operand.vmem [shape: f32[1,128], index: 3, kind: input, shape index: {}]
  %s4 = inlined_call_operand.vmem [shape: f32[1,128], index: 4, kind: input, shape index: {}]
  %s5 = inlined_call_operand.hbm [shape: f32[7,128,128], index: 5, kind: input, shape index: {}]
  %s6 = inlined_call_operand.vmem [shape: f32[1,128], index: 6, kind: input, shape index: {}]
  %s7 = inlined_call_operand.vmem [shape: f32[1,128], index: 7, kind: input, shape index: {}]
  %s8 = inlined_call_operand.vmem [shape: f32[1,128], index: 8, kind: input, shape index: {}]
  %s9 = inlined_call_operand.hbm [shape: f32[128,512], index: 9, kind: input, shape index: {}]
  %s10 = inlined_call_operand.vmem [shape: f32[1,512], index: 10, kind: input, shape index: {}]
  %s11 = inlined_call_operand.vmem [shape: f32[256,128], index: 11, kind: input, shape index: {}]
  %s12 = inlined_call_operand.vmem [shape: f32[1,128], index: 12, kind: input, shape index: {}]
  %s13 = inlined_call_operand.hbm [shape: f32[1,128], index: 13, kind: input, shape index: {}]
  %s14 = inlined_call_operand.hbm [shape: f32[1,128], index: 14, kind: input, shape index: {}]
  %s15 = inlined_call_operand.hbm [shape: f32[7,128,128], index: 15, kind: input, shape index: {}]
  %s16 = inlined_call_operand.hbm [shape: f32[1,128], index: 16, kind: input, shape index: {}]
  %s17 = inlined_call_operand.hbm [shape: f32[1,128], index: 17, kind: input, shape index: {}]
  %s18 = inlined_call_operand.vmem [shape: f32[32,128], index: 18, kind: output, shape index: {}]
  %s19 = sld [smem:[#allocation0]]
  $region114: #{metanext_up_stage0_forward.4} parent=0
    _
  %s21 = ssub.s32 1, %s19
  %s22 = scalar_select 0, %s21, %s19
  $region1: #{metanext_up_stage0_forward.4} parent=0
    #allocation2 [shape = 'u8[65536]{0}', space=vmem, size = 0x10000, scoped, tag = 'input window, operand 1, single buffered']
    #allocation3 [shape = 's32[1]{0}', space=sflag, size = 0x4, scoped, tag = 'scoped memory for metanext_up_stage0_forward.4']
    #allocation4 [shape = 'u8[458752]{0}', space=vmem, size = 0x70000, scoped, tag = 'input window, operand 5, single buffered']
    #allocation5 [shape = 's32[1]{0}', space=sflag, size = 0x4, scoped, tag = 'scoped memory for metanext_up_stage0_forward.4']
    #allocation6 [shape = 'u8[262144]{0}', space=vmem, size = 0x40000, scoped, tag = 'input window, operand 9, single buffered']
    #allocation7 [shape = 'u8[512]{0}', space=vmem, size = 0x400, scoped, tag = 'input window, operand 13, single buffered']
    #allocation8 [shape = 's32[1]{0}', space=sflag, size = 0x4, scoped, tag = 'scoped memory for metanext_up_stage0_forward.4']
    #allocation9 [shape = 'u8[512]{0}', space=vmem, size = 0x400, scoped, tag = 'input window, operand 14, single buffered']
    #allocation10 [shape = 'u8[458752]{0}', space=vmem, size = 0x70000, scoped, tag = 'input window, operand 15, single buffered']
    #allocation11 [shape = 's32[1]{0}', space=sflag, size = 0x4, scoped, tag = 'scoped memory for metanext_up_stage0_forward.4']
    #allocation12 [shape = 'u8[512]{0}', space=vmem, size = 0x400, scoped, tag = 'input window, operand 16, single buffered']
    #allocation13 [shape = 'u8[512]{0}', space=vmem, size = 0x400, scoped, tag = 'input window, operand 17, single buffered']
    #allocation14 [shape = 's32[1]{0}', space=sflag, size = 0x4, scoped, tag = 'scoped memory for metanext_up_stage0_forward.4']
    %23 = vsyncpa [#allocation3], 0
    %24 = vsyncpa [#allocation5], 0
    %25 = vsyncpa [#allocation8], 0
    %26 = vsyncpa [#allocation11], 0
    %27 = vsyncpa [#allocation14], 0
    // Predicated region
    $region2: #{metanext_up_stage0_forward.4} parent=1 // pred_check
      _
    $region3: #{metanext_up_stage0_forward.4} parent=1 // pred_check_branch
      %29 = sbr.rel (0) target = $region5
    $region4: #{metanext_up_stage0_forward.4} parent=1 // pred_region
      _
    $region5: #{metanext_up_stage0_forward.4} parent=1 // pred_fallthru
      _
    // Predicated region
    $region6: #{metanext_up_stage0_forward.4} parent=1 // pred_check
      _
    $region7: #{metanext_up_stage0_forward.4} parent=1 // pred_check_branch
      %31 = sbr.rel (0) target = $region9
    $region8: #{metanext_up_stage0_forward.4} parent=1 // pred_region
      %33 = vsyncadd [#allocation3], 0
      %s34 = sshll.u32 %s1, 4
      %s35 = int_to_ptr.hbm [resolvable:$true] %s34
      %s36 = sshll.u32 [#allocation2], 4
      %s37 = int_to_ptr.vmem [resolvable:$true] %s36
      %42 = dma.hbm_to_vmem [thread:$0]  %s35, 2048, %s37, [#allocation3], 128, 128, 8
    $region9: #{metanext_up_stage0_forward.4} parent=1 // pred_fallthru
      _
    // Predicated region
    $region10: #{metanext_up_stage0_forward.4} parent=1 // pred_check
      _
    $region11: #{metanext_up_stage0_forward.4} parent=1 // pred_check_branch
      %44 = sbr.rel (0) target = $region13
    $region12: #{metanext_up_stage0_forward.4} parent=1 // pred_region
      _
    $region13: #{metanext_up_stage0_forward.4} parent=1 // pred_fallthru
      _
    // Predicated region
    $region14: #{metanext_up_stage0_forward.4} parent=1 // pred_check
      _
    $region15: #{metanext_up_stage0_forward.4} parent=1 // pred_check_branch
      %46 = sbr.rel (0) target = $region17
    $region16: #{metanext_up_stage0_forward.4} parent=1 // pred_region
      _
    $region17: #{metanext_up_stage0_forward.4} parent=1 // pred_fallthru
      _
    // Predicated region
    $region18: #{metanext_up_stage0_forward.4} parent=1 // pred_check
      _
    $region19: #{metanext_up_stage0_forward.4} parent=1 // pred_check_branch
      %48 = sbr.rel (0) target = $region21
    $region20: #{metanext_up_stage0_forward.4} parent=1 // pred_region
      _
    $region21: #{metanext_up_stage0_forward.4} parent=1 // pred_fallthru
      _
    // Predicated region
    $region22: #{metanext_up_stage0_forward.4} parent=1 // pred_check
      _
    $region23: #{metanext_up_stage0_forward.4} parent=1 // pred_check_branch
      %50 = sbr.rel (0) target = $region25
    $region24: #{metanext_up_stage0_forward.4} parent=1 // pred_region
      %52 = vsyncadd [#allocation5], 0
      %s53 = sshll.u32 %s5, 4
      %s54 = int_to_ptr.hbm [resolvable:$true] %s53
      %s55 = sshll.u32 [#allocation4], 4
      %s56 = int_to_ptr.vmem [resolvable:$true] %s55
      %61 = dma.hbm_to_vmem [thread:$0]  %s54, 14336, %s56, [#allocation5], 128, 128, 8
    $region25: #{metanext_up_stage0_forward.4} parent=1 // pred_fallthru
      _
    // Predicated region
    $region26: #{metanext_up_stage0_forward.4} parent=1 // pred_check
      _
    $region27: #{metanext_up_stage0_forward.4} parent=1 // pred_check_branch
      %63 = sbr.rel (0) target = $region29
    $region28: #{metanext_up_stage0_forward.4} parent=1 // pred_region
      _
    $region29: #{metanext_up_stage0_forward.4} parent=1 // pred_fallthru
      _
    // Predicated region
    $region30: #{metanext_up_stage0_forward.4} parent=1 // pred_check
      _
    $region31: #{metanext_up_stage0_forward.4} parent=1 // pred_check_branch
      %65 = sbr.rel (0) target = $region33
    $region32: #{metanext_up_stage0_forward.4} parent=1 // pred_region
      _
    $region33: #{metanext_up_stage0_forward.4} parent=1 // pred_fallthru
      _
    // Predicated region
    $region34: #{metanext_up_stage0_forward.4} parent=1 // pred_check
      _
    $region35: #{metanext_up_stage0_forward.4} parent=1 // pred_check_branch
      %67 = sbr.rel (0) target = $region37
    $region36: #{metanext_up_stage0_forward.4} parent=1 // pred_region
      _
    $region37: #{metanext_up_stage0_forward.4} parent=1 // pred_fallthru
      _
    // Predicated region
    $region38: #{metanext_up_stage0_forward.4} parent=1 // pred_check
      _
    $region39: #{metanext_up_stage0_forward.4} parent=1 // pred_check_branch
      %69 = sbr.rel (0) target = $region41
    $region40: #{metanext_up_stage0_forward.4} parent=1 // pred_region
      %71 = vsyncadd [#allocation5], 0
      %s72 = sshll.u32 %s9, 4
      %s73 = int_to_ptr.hbm [resolvable:$true] %s72
      %s74 = sshll.u32 [#allocation6], 4
      %s75 = int_to_ptr.vmem [resolvable:$true] %s74
      %80 = dma.hbm_to_vmem [thread:$0]  %s73, 8192, %s75, [#allocation5], 512, 512, 32
    $region41: #{metanext_up_stage0_forward.4} parent=1 // pred_fallthru
      _
    // Predicated region
    $region42: #{metanext_up_stage0_forward.4} parent=1 // pred_check
      _
    $region43: #{metanext_up_stage0_forward.4} parent=1 // pred_check_branch
      %82 = sbr.rel (0) target = $region45
    $region44: #{metanext_up_stage0_forward.4} parent=1 // pred_region
      _
    $region45: #{metanext_up_stage0_forward.4} parent=1 // pred_fallthru
      _
    // Predicated region
    $region46: #{metanext_up_stage0_forward.4} parent=1 // pred_check
      _
    $region47: #{metanext_up_stage0_forward.4} parent=1 // pred_check_branch
      %84 = sbr.rel (0) target = $region49
    $region48: #{metanext_up_stage0_forward.4} parent=1 // pred_region
      _
    $region49: #{metanext_up_stage0_forward.4} parent=1 // pred_fallthru
      _
    // Predicated region
    $region50: #{metanext_up_stage0_forward.4} parent=1 // pred_check
      _
    $region51: #{metanext_up_stage0_forward.4} parent=1 // pred_check_branch
      %86 = sbr.rel (0) target = $region53
    $region52: #{metanext_up_stage0_forward.4} parent=1 // pred_region
      _
    $region53: #{metanext_up_stage0_forward.4} parent=1 // pred_fallthru
      _
    // Predicated region
    $region54: #{metanext_up_stage0_forward.4} parent=1 // pred_check
      _
    $region55: #{metanext_up_stage0_forward.4} parent=1 // pred_check_branch
      %88 = sbr.rel (0) target = $region57
    $region56: #{metanext_up_stage0_forward.4} parent=1 // pred_region
      %90 = vsyncadd [#allocation8], 0
      %s92 = sshll.u32 %s13, 4
      %s93 = int_to_ptr.hbm [resolvable:$true] %s92
      %s94 = sshll.u32 [#allocation7], 4
      %s95 = int_to_ptr.vmem [resolvable:$true] %s94
      %97 = dma.hbm_to_vmem [thread:$0]  %s93, 16, %s95, [#allocation8]
    $region57: #{metanext_up_stage0_forward.4} parent=1 // pred_fallthru
      _
    // Predicated region
    $region58: #{metanext_up_stage0_forward.4} parent=1 // pred_check
      _
    $region59: #{metanext_up_stage0_forward.4} parent=1 // pred_check_branch
      %99 = sbr.rel (0) target = $region61
    $region60: #{metanext_up_stage0_forward.4} parent=1 // pred_region
      %101 = vsyncadd [#allocation8], 0
      %s103 = sshll.u32 %s14, 4
      %s104 = int_to_ptr.hbm [resolvable:$true] %s103
      %s105 = sshll.u32 [#allocation9], 4
      %s106 = int_to_ptr.vmem [resolvable:$true] %s105
      %108 = dma.hbm_to_vmem [thread:$0]  %s104, 16, %s106, [#allocation8]
    $region61: #{metanext_up_stage0_forward.4} parent=1 // pred_fallthru
      _
    // Predicated region
    $region62: #{metanext_up_stage0_forward.4} parent=1 // pred_check
      _
    $region63: #{metanext_up_stage0_forward.4} parent=1 // pred_check_branch
      %110 = sbr.rel (0) target = $region65
    $region64: #{metanext_up_stage0_forward.4} parent=1 // pred_region
      %112 = vsyncadd [#allocation11], 0
      %s113 = sshll.u32 %s15, 4
      %s114 = int_to_ptr.hbm [resolvable:$true] %s113
      %s115 = sshll.u32 [#allocation10], 4
      %s116 = int_to_ptr.vmem [resolvable:$true] %s115
      %121 = dma.hbm_to_vmem [thread:$0]  %s114, 14336, %s116, [#allocation11], 128, 128, 8
    $region65: #{metanext_up_stage0_forward.4} parent=1 // pred_fallthru
      _
    // Predicated region
    $region66: #{metanext_up_stage0_forward.4} parent=1 // pred_check
      _
    $region67: #{metanext_up_stage0_forward.4} parent=1 // pred_check_branch
      %123 = sbr.rel (0) target = $region69
    $region68: #{metanext_up_stage0_forward.4} parent=1 // pred_region
      %125 = vsyncadd [#allocation11], 0
      %s127 = sshll.u32 %s16, 4
      %s128 = int_to_ptr.hbm [resolvable:$true] %s127
      %s129 = sshll.u32 [#allocation12], 4
      %s130 = int_to_ptr.vmem [resolvable:$true] %s129
      %132 = dma.hbm_to_vmem [thread:$0]  %s128, 16, %s130, [#allocation11]
    $region69: #{metanext_up_stage0_forward.4} parent=1 // pred_fallthru
      _
    // Predicated region
    $region70: #{metanext_up_stage0_forward.4} parent=1 // pred_check
      _
    $region71: #{metanext_up_stage0_forward.4} parent=1 // pred_check_branch
      %134 = sbr.rel (0) target = $region73
    $region72: #{metanext_up_stage0_forward.4} parent=1 // pred_region
      %136 = vsyncadd [#allocation14], 0
      %s138 = sshll.u32 %s17, 4
      %s139 = int_to_ptr.hbm [resolvable:$true] %s138
      %s140 = sshll.u32 [#allocation13], 4
      %s141 = int_to_ptr.vmem [resolvable:$true] %s140
      %143 = dma.hbm_to_vmem [thread:$0]  %s139, 16, %s141, [#allocation14]
    $region73: #{metanext_up_stage0_forward.4} parent=1 // pred_fallthru
      _
    // Predicated region
    $region74: #{metanext_up_stage0_forward.4} parent=1 // pred_check
      _
    $region75: #{metanext_up_stage0_forward.4} parent=1 // pred_check_branch
      %145 = sbr.rel (0) target = $region77
    $region76: #{metanext_up_stage0_forward.4} parent=1 // pred_region
      %147 = dma.done [#allocation3], 2048
    $region77: #{metanext_up_stage0_forward.4} parent=1 // pred_fallthru
      _
    // Predicated region
    $region78: #{metanext_up_stage0_forward.4} parent=1 // pred_check
      _
    $region79: #{metanext_up_stage0_forward.4} parent=1 // pred_check_branch
      %149 = sbr.rel (0) target = $region81
    $region80: #{metanext_up_stage0_forward.4} parent=1 // pred_region
      %151 = dma.done [#allocation5], 14336
    $region81: #{metanext_up_stage0_forward.4} parent=1 // pred_fallthru
      _
    // Predicated region
    $region82: #{metanext_up_stage0_forward.4} parent=1 // pred_check
      _
    $region83: #{metanext_up_stage0_forward.4} parent=1 // pred_check_branch
      %153 = sbr.rel (0) target = $region85
    $region84: #{metanext_up_stage0_forward.4} parent=1 // pred_region
      %155 = dma.done [#allocation5], 8192
    $region85: #{metanext_up_stage0_forward.4} parent=1 // pred_fallthru
      _
    // Predicated region
    $region86: #{metanext_up_stage0_forward.4} parent=1 // pred_check
      _
    $region87: #{metanext_up_stage0_forward.4} parent=1 // pred_check_branch
      %157 = sbr.rel (0) target = $region89
    $region88: #{metanext_up_stage0_forward.4} parent=1 // pred_region
      %159 = dma.done [#allocation8], 16
    $region89: #{metanext_up_stage0_forward.4} parent=1 // pred_fallthru
      _
    // Predicated region
    $region90: #{metanext_up_stage0_forward.4} parent=1 // pred_check
      _
    $region91: #{metanext_up_stage0_forward.4} parent=1 // pred_check_branch
      %161 = sbr.rel (0) target = $region93
    $region92: #{metanext_up_stage0_forward.4} parent=1 // pred_region
      %163 = dma.done [#allocation8], 16
    $region93: #{metanext_up_stage0_forward.4} parent=1 // pred_fallthru
      _
    // Predicated region
    $region94: #{metanext_up_stage0_forward.4} parent=1 // pred_check
      _
    $region95: #{metanext_up_stage0_forward.4} parent=1 // pred_check_branch
      %165 = sbr.rel (0) target = $region97
    $region96: #{metanext_up_stage0_forward.4} parent=1 // pred_region
      %167 = dma.done [#allocation11], 14336
    $region97: #{metanext_up_stage0_forward.4} parent=1 // pred_fallthru
      _
    // Predicated region
    $region98: #{metanext_up_stage0_forward.4} parent=1 // pred_check
      _
    $region99: #{metanext_up_stage0_forward.4} parent=1 // pred_check_branch
      %169 = sbr.rel (0) target = $region101
    $region100: #{metanext_up_stage0_forward.4} parent=1 // pred_region
      %171 = dma.done [#allocation11], 16
    $region101: #{metanext_up_stage0_forward.4} parent=1 // pred_fallthru
      _
    // Predicated region
    $region102: #{metanext_up_stage0_forward.4} parent=1 // pred_check
      _
    $region103: #{metanext_up_stage0_forward.4} parent=1 // pred_check_branch
      %173 = sbr.rel (0) target = $region105
    $region104: #{metanext_up_stage0_forward.4} parent=1 // pred_region
      %175 = dma.done [#allocation14], 16
    $region105: #{metanext_up_stage0_forward.4} parent=1 // pred_fallthru
      _
    %v176 = vld [vmem:[%s0] sm:$0xff]
    %v177 = vld [vmem:[%s0 + $0x8] sm:$0xff]
    %v178 = vld [vmem:[%s0 + $0x10] sm:$0xff]
    %v179 = vld [vmem:[%s0 + $0x18] sm:$0xff]
    %v180 = vld [vmem:[#allocation2] sm:$0xff]
    %v181 = vld [vmem:[#allocation2 + $0x8] sm:$0xff]
    %v182 = vld [vmem:[#allocation2 + $0x10] sm:$0xff]
    %v183 = vld [vmem:[#allocation2 + $0x18] sm:$0xff]
    %v184 = vld [vmem:[#allocation2 + $0x20] sm:$0xff]
    %v185 = vld [vmem:[#allocation2 + $0x28] sm:$0xff]
    %v186 = vld [vmem:[#allocation2 + $0x30] sm:$0xff]
    %v187 = vld [vmem:[#allocation2 + $0x38] sm:$0xff]
    %v188 = vld [vmem:[#allocation2 + $0x40] sm:$0xff]
    %v189 = vld [vmem:[#allocation2 + $0x48] sm:$0xff]
    %v190 = vld [vmem:[#allocation2 + $0x50] sm:$0xff]
    %v191 = vld [vmem:[#allocation2 + $0x58] sm:$0xff]
    %v192 = vld [vmem:[#allocation2 + $0x60] sm:$0xff]
    %v193 = vld [vmem:[#allocation2 + $0x68] sm:$0xff]
    %v194 = vld [vmem:[#allocation2 + $0x70] sm:$0xff]
    %v195 = vld [vmem:[#allocation2 + $0x78] sm:$0xff]
    %v196 = vld [vmem:[%s3] sm:$0x1]
    %v197 = vld [vmem:[%s4] sm:$0x1]
    %v198 = vadd.f32 %v176, %v177
    %v199 = vadd.f32 %v198, %v178
    %v200 = vadd.f32 %v199, %v179
    %v201 = vrot.slane %v200, 4
    %v202 = vadd.f32 %v200, %v201
    %v203 = vrot.slane %v202, 2
    %v204 = vadd.f32 %v202, %v203
    %v205 = vrot.slane %v204, 1
    %v206 = vadd.f32 %v204, %v205
    %v207 = vmul.f32 %v176, %v176
    %v208 = vmul.f32 %v177, %v177
    %v209 = vmul.f32 %v178, %v178
    %v210 = vmul.f32 %v179, %v179
    %v211 = vadd.f32 %v207, %v208
    %v212 = vadd.f32 %v211, %v209
    %v213 = vadd.f32 %v212, %v210
    %v214 = vrot.slane %v213, 4
    %v215 = vadd.f32 %v213, %v214
    %v216 = vrot.slane %v215, 2
    %v217 = vadd.f32 %v215, %v216
    %v218 = vrot.slane %v217, 1
    %v219 = vadd.f32 %v217, %v218
    %220 = vmatpush.msra.mxu0 %v195
    %221 = vmatpush.msra.mxu0 %v194
    %222 = vmatpush.msra.mxu0 %v193
    %223 = vmatpush.msra.mxu0 %v192
    %224 = vmatpush.msra.mxu0 %v191
    %225 = vmatpush.msra.mxu0 %v190
    %226 = vmatpush.msra.mxu0 %v189
    %227 = vmatpush.msra.mxu0 %v188
    %228 = vmatpush.msra.mxu0 %v187
    %229 = vmatpush.msra.mxu0 %v186
    %230 = vmatpush.msra.mxu0 %v185
    %231 = vmatpush.msra.mxu0 %v184
    %232 = vmatpush.msra.mxu0 %v183
    %233 = vmatpush.msra.mxu0 %v182
    %234 = vmatpush.msra.mxu0 %v181
    %235 = vmatpush.msra.mxu0 %v180
    %236 = vmatmul.f32.gmra.mxu0 %v206
    %v237 = vpop.f32.mrf.mxu0
    %v238 = vadd.f32 0.0, %v237
    %239 = vdwg.mxu0
    %240 = vmatpush.msra.mxu0 %v195
    %241 = vmatpush.msra.mxu0 %v194
    %242 = vmatpush.msra.mxu0 %v193
    %243 = vmatpush.msra.mxu0 %v192
    %244 = vmatpush.msra.mxu0 %v191
    %245 = vmatpush.msra.mxu0 %v190
    %246 = vmatpush.msra.mxu0 %v189
    %247 = vmatpush.msra.mxu0 %v188
    %248 = vmatpush.msra.mxu0 %v187
    %249 = vmatpush.msra.mxu0 %v186
    %250 = vmatpush.msra.mxu0 %v185
    %251 = vmatpush.msra.mxu0 %v184
    %252 = vmatpush.msra.mxu0 %v183
    %253 = vmatpush.msra.mxu0 %v182
    %254 = vmatpush.msra.mxu0 %v181
    %255 = vmatpush.msra.mxu0 %v180
    %256 = vmatmul.f32.gmra.mxu0 %v219
    %v257 = vpop.f32.mrf.mxu0
    %v258 = vadd.f32 0.0, %v257
    %259 = vdwg.mxu0
    %v260 = vmul.f32 %v238, %v238
    %v261 = vsub.f32 %v258, %v260
    %v262 = vmax.f32 %v261, 0.0
    %v263 = vadd.f32 %v262, 1e-05
    %v264 = vrsqrt.pop %v263
    %v265 = vmul.f32 %v264, %v263
    %v266 = vmul.f32 %v265, %v264
    %v267 = vmul.f32 0.5, %v266
    %v268 = vsub.f32 1.5, %v267
    %v269 = vmul.f32 %v264, %v268
    %vm270 = vweird.f32 %v263
    %vm271 = vweird.f32 %v264
    %vm272 = vmor %vm270, %vm271
    %v273 = vsel %vm272, %v264, %v269
    %v274 = vperm.slane %v238, 0
    %v275 = vsub.f32 %v176, %v274
    %v276 = vsub.f32 %v177, %v274
    %v277 = vsub.f32 %v178, %v274
    %v278 = vsub.f32 %v179, %v274
    %v279 = vmul.f32 %v273, %v196
    %v280 = vperm.slane %v279, 0
    %v281 = vmul.f32 %v275, %v280
    %v282 = vmul.f32 %v276, %v280
    %v283 = vmul.f32 %v277, %v280
    %v284 = vmul.f32 %v278, %v280
    %v286 = vperm.slane %v197, 0
    %v288 = vadd.f32 %v281, %v286
    %v289 = vadd.f32 %v282, %v286
    %v290 = vadd.f32 %v283, %v286
    %v291 = vadd.f32 %v284, %v286
    %v292 = vld [vmem:[%s6] sm:$0x1]
    %v294 = vperm.slane %v292, 0
    %v296 = vadd.f32 %v294, 0.0
    %v297 = vld [vmem:[%s2] sm:$0xff]
    %v298 = vld [vmem:[%s2 + $0x8] sm:$0xff]
    %v299 = vld [vmem:[%s2 + $0x10] sm:$0xff]
    %v300 = vld [vmem:[%s2 + $0x18] sm:$0xff]
    %v301 = vld [vmem:[#allocation4] sm:$0xff]
    %v302 = vld [vmem:[#allocation4 + $0x8] sm:$0xff]
    %v303 = vld [vmem:[#allocation4 + $0x10] sm:$0xff]
    %v304 = vld [vmem:[#allocation4 + $0x18] sm:$0xff]
    %v305 = vld [vmem:[#allocation4 + $0x20] sm:$0xff]
    %v306 = vld [vmem:[#allocation4 + $0x28] sm:$0xff]
    %v307 = vld [vmem:[#allocation4 + $0x30] sm:$0xff]
    %v308 = vld [vmem:[#allocation4 + $0x38] sm:$0xff]
    %v309 = vld [vmem:[#allocation4 + $0x40] sm:$0xff]
    %v310 = vld [vmem:[#allocation4 + $0x48] sm:$0xff]
    %v311 = vld [vmem:[#allocation4 + $0x50] sm:$0xff]
    %v312 = vld [vmem:[#allocation4 + $0x58] sm:$0xff]
    %v313 = vld [vmem:[#allocation4 + $0x60] sm:$0xff]
    %v314 = vld [vmem:[#allocation4 + $0x68] sm:$0xff]
    %v315 = vld [vmem:[#allocation4 + $0x70] sm:$0xff]
    %v316 = vld [vmem:[#allocation4 + $0x78] sm:$0xff]
    %317 = vmatpush.msra.mxu0 %v316
    %318 = vmatpush.msra.mxu0 %v315
    %319 = vmatpush.msra.mxu0 %v314
    %320 = vmatpush.msra.mxu0 %v313
    %321 = vmatpush.msra.mxu0 %v312
    %322 = vmatpush.msra.mxu0 %v311
    %323 = vmatpush.msra.mxu0 %v310
    %324 = vmatpush.msra.mxu0 %v309
    %325 = vmatpush.msra.mxu0 %v308
    %326 = vmatpush.msra.mxu0 %v307
    %327 = vmatpush.msra.mxu0 %v306
    %328 = vmatpush.msra.mxu0 %v305
    %329 = vmatpush.msra.mxu0 %v304
    %330 = vmatpush.msra.mxu0 %v303
    %331 = vmatpush.msra.mxu0 %v302
    %332 = vmatpush.msra.mxu0 %v301
    %333 = vmatmul.f32.gmra.mxu0 %v288
    %v334 = vpop.f32.mrf.mxu0
    %v335 = vadd.f32 0.0, %v334
    %336 = vmatmul.f32.gmra.mxu0 %v289
    %v337 = vpop.f32.mrf.mxu0
    %v338 = vadd.f32 0.0, %v337
    %339 = vmatmul.f32.gmra.mxu0 %v290
    %v340 = vpop.f32.mrf.mxu0
    %v341 = vadd.f32 0.0, %v340
    %342 = vmatmul.f32.gmra.mxu0 %v291
    %v343 = vpop.f32.mrf.mxu0
    %v344 = vadd.f32 0.0, %v343
    %345 = vdwg.mxu0
    %vm346 = vcmask 261120
    %v348 = vsel %vm346, %v297, 0
    %v351 = vsel %vm346, %v298, 0
    %v354 = vsel %vm346, %v299, 0
    %v357 = vsel %vm346, %v300, 0
    %359 = vmatpush.msra.mxu0 0.0
    %360 = vmatpush.msra.mxu0 0.0
    %361 = vmatpush.msra.mxu0 0.0
    %362 = vmatpush.msra.mxu0 0.0
    %363 = vmatpush.msra.mxu0 0.0
    %364 = vmatpush.msra.mxu0 0.0
    %365 = vmatpush.msra.mxu0 0.0
    %366 = vmatpush.msra.mxu0 0.0
    %367 = vmatpush.msra.mxu0 0.0
    %368 = vmatpush.msra.mxu0 0.0
    %369 = vmatpush.msra.mxu0 0.0
    %370 = vmatpush.msra.mxu0 0.0
    %371 = vmatpush.msra.mxu0 %v344
    %372 = vmatpush.msra.mxu0 %v341
    %373 = vmatpush.msra.mxu0 %v338
    %374 = vmatpush.msra.mxu0 %v335
    %375 = vmatmul.f32.gmra.mxu0 %v348
    %v376 = vpop.f32.mrf.mxu0
    %v377 = vadd.f32 0.0, %v376
    %378 = vmatmul.f32.gmra.mxu0 %v351
    %v379 = vpop.f32.mrf.mxu0
    %v380 = vadd.f32 0.0, %v379
    %381 = vmatmul.f32.gmra.mxu0 %v354
    %v382 = vpop.f32.mrf.mxu0
    %v383 = vadd.f32 0.0, %v382
    %384 = vmatmul.f32.gmra.mxu0 %v357
    %v385 = vpop.f32.mrf.mxu0
    %v386 = vadd.f32 0.0, %v385
    %387 = vdwg.mxu0
    %v388 = vadd.f32 %v296, %v377
    %v389 = vadd.f32 %v296, %v380
    %v390 = vadd.f32 %v296, %v383
    %v391 = vadd.f32 %v296, %v386
    %s392 = scalar_lea.vmem %s2, 32
    %v393 = vld [vmem:[%s392] sm:$0xff]
    %v394 = vld [vmem:[%s392 + $0x8] sm:$0xff]
    %v395 = vld [vmem:[%s392 + $0x10] sm:$0xff]
    %v396 = vld [vmem:[%s392 + $0x18] sm:$0xff]
    %s397 = scalar_lea.vmem [#allocation4], 128
    %v398 = vld [vmem:[%s397] sm:$0xff]
    %v399 = vld [vmem:[%s397 + $0x8] sm:$0xff]
    %v400 = vld [vmem:[%s397 + $0x10] sm:$0xff]
    %v401 = vld [vmem:[%s397 + $0x18] sm:$0xff]
    %v402 = vld [vmem:[%s397 + $0x20] sm:$0xff]
    %v403 = vld [vmem:[%s397 + $0x28] sm:$0xff]
    %v404 = vld [vmem:[%s397 + $0x30] sm:$0xff]
    %v405 = vld [vmem:[%s397 + $0x38] sm:$0xff]
    %v406 = vld [vmem:[%s397 + $0x40] sm:$0xff]
    %v407 = vld [vmem:[%s397 + $0x48] sm:$0xff]
    %v408 = vld [vmem:[%s397 + $0x50] sm:$0xff]
    %v409 = vld [vmem:[%s397 + $0x58] sm:$0xff]
    %v410 = vld [vmem:[%s397 + $0x60] sm:$0xff]
    %v411 = vld [vmem:[%s397 + $0x68] sm:$0xff]
    %v412 = vld [vmem:[%s397 + $0x70] sm:$0xff]
    %v413 = vld [vmem:[%s397 + $0x78] sm:$0xff]
    %414 = vmatpush.msra.mxu0 %v413
    %415 = vmatpush.msra.mxu0 %v412
    %416 = vmatpush.msra.mxu0 %v411
    %417 = vmatpush.msra.mxu0 %v410
    %418 = vmatpush.msra.mxu0 %v409
    %419 = vmatpush.msra.mxu0 %v408
    %420 = vmatpush.msra.mxu0 %v407
    %421 = vmatpush.msra.mxu0 %v406
    %422 = vmatpush.msra.mxu0 %v405
    %423 = vmatpush.msra.mxu0 %v404
    %424 = vmatpush.msra.mxu0 %v403
    %425 = vmatpush.msra.mxu0 %v402
    %426 = vmatpush.msra.mxu0 %v401
    %427 = vmatpush.msra.mxu0 %v400
    %428 = vmatpush.msra.mxu0 %v399
    %429 = vmatpush.msra.mxu0 %v398
    %430 = vmatmul.f32.gmra.mxu0 %v288
    %v431 = vpop.f32.mrf.mxu0
    %v432 = vadd.f32 0.0, %v431
    %433 = vmatmul.f32.gmra.mxu0 %v289
    %v434 = vpop.f32.mrf.mxu0
    %v435 = vadd.f32 0.0, %v434
    %436 = vmatmul.f32.gmra.mxu0 %v290
    %v437 = vpop.f32.mrf.mxu0
    %v438 = vadd.f32 0.0, %v437
    %439 = vmatmul.f32.gmra.mxu0 %v291
    %v440 = vpop.f32.mrf.mxu0
    %v441 = vadd.f32 0.0, %v440
    %442 = vdwg.mxu0
    %v444 = vsel %vm346, %v393, 0
    %v447 = vsel %vm346, %v394, 0
    %v450 = vsel %vm346, %v395, 0
    %v453 = vsel %vm346, %v396, 0
    %455 = vmatpush.msra.mxu0 0.0
    %456 = vmatpush.msra.mxu0 0.0
    %457 = vmatpush.msra.mxu0 0.0
    %458 = vmatpush.msra.mxu0 0.0
    %459 = vmatpush.msra.mxu0 0.0
    %460 = vmatpush.msra.mxu0 0.0
    %461 = vmatpush.msra.mxu0 0.0
    %462 = vmatpush.msra.mxu0 0.0
    %463 = vmatpush.msra.mxu0 0.0
    %464 = vmatpush.msra.mxu0 0.0
    %465 = vmatpush.msra.mxu0 0.0
    %466 = vmatpush.msra.mxu0 0.0
    %467 = vmatpush.msra.mxu0 %v441
    %468 = vmatpush.msra.mxu0 %v438
    %469 = vmatpush.msra.mxu0 %v435
    %470 = vmatpush.msra.mxu0 %v432
    %471 = vmatmul.f32.gmra.mxu0 %v444
    %v472 = vpop.f32.mrf.mxu0
    %v473 = vadd.f32 0.0, %v472
    %474 = vmatmul.f32.gmra.mxu0 %v447
    %v475 = vpop.f32.mrf.mxu0
    %v476 = vadd.f32 0.0, %v475
    %477 = vmatmul.f32.gmra.mxu0 %v450
    %v478 = vpop.f32.mrf.mxu0
    %v479 = vadd.f32 0.0, %v478
    %480 = vmatmul.f32.gmra.mxu0 %v453
    %v481 = vpop.f32.mrf.mxu0
    %v482 = vadd.f32 0.0, %v481
    %483 = vdwg.mxu0
    %v484 = vadd.f32 %v388, %v473
    %v485 = vadd.f32 %v389, %v476
    %v486 = vadd.f32 %v390, %v479
    %v487 = vadd.f32 %v391, %v482
    %s488 = scalar_lea.vmem %s2, 64
    %v489 = vld [vmem:[%s488] sm:$0xff]
    %v490 = vld [vmem:[%s488 + $0x8] sm:$0xff]
    %v491 = vld [vmem:[%s488 + $0x10] sm:$0xff]
    %v492 = vld [vmem:[%s488 + $0x18] sm:$0xff]
    %s493 = scalar_lea.vmem [#allocation4], 256
    %v494 = vld [vmem:[%s493] sm:$0xff]
    %v495 = vld [vmem:[%s493 + $0x8] sm:$0xff]
    %v496 = vld [vmem:[%s493 + $0x10] sm:$0xff]
    %v497 = vld [vmem:[%s493 + $0x18] sm:$0xff]
    %v498 = vld [vmem:[%s493 + $0x20] sm:$0xff]
    %v499 = vld [vmem:[%s493 + $0x28] sm:$0xff]
    %v500 = vld [vmem:[%s493 + $0x30] sm:$0xff]
    %v501 = vld [vmem:[%s493 + $0x38] sm:$0xff]
    %v502 = vld [vmem:[%s493 + $0x40] sm:$0xff]
    %v503 = vld [vmem:[%s493 + $0x48] sm:$0xff]
    %v504 = vld [vmem:[%s493 + $0x50] sm:$0xff]
    %v505 = vld [vmem:[%s493 + $0x58] sm:$0xff]
    %v506 = vld [vmem:[%s493 + $0x60] sm:$0xff]
    %v507 = vld [vmem:[%s493 + $0x68] sm:$0xff]
    %v508 = vld [vmem:[%s493 + $0x70] sm:$0xff]
    %v509 = vld [vmem:[%s493 + $0x78] sm:$0xff]
    %510 = vmatpush.msra.mxu0 %v509
    %511 = vmatpush.msra.mxu0 %v508
    %512 = vmatpush.msra.mxu0 %v507
    %513 = vmatpush.msra.mxu0 %v506
    %514 = vmatpush.msra.mxu0 %v505
    %515 = vmatpush.msra.mxu0 %v504
    %516 = vmatpush.msra.mxu0 %v503
    %517 = vmatpush.msra.mxu0 %v502
    %518 = vmatpush.msra.mxu0 %v501
    %519 = vmatpush.msra.mxu0 %v500
    %520 = vmatpush.msra.mxu0 %v499
    %521 = vmatpush.msra.mxu0 %v498
    %522 = vmatpush.msra.mxu0 %v497
    %523 = vmatpush.msra.mxu0 %v496
    %524 = vmatpush.msra.mxu0 %v495
    %525 = vmatpush.msra.mxu0 %v494
    %526 = vmatmul.f32.gmra.mxu0 %v288
    %v527 = vpop.f32.mrf.mxu0
    %v528 = vadd.f32 0.0, %v527
    %529 = vmatmul.f32.gmra.mxu0 %v289
    %v530 = vpop.f32.mrf.mxu0
    %v531 = vadd.f32 0.0, %v530
    %532 = vmatmul.f32.gmra.mxu0 %v290
    %v533 = vpop.f32.mrf.mxu0
    %v534 = vadd.f32 0.0, %v533
    %535 = vmatmul.f32.gmra.mxu0 %v291
    %v536 = vpop.f32.mrf.mxu0
    %v537 = vadd.f32 0.0, %v536
    %538 = vdwg.mxu0
    %v540 = vsel %vm346, %v489, 0
    %v543 = vsel %vm346, %v490, 0
    %v546 = vsel %vm346, %v491, 0
    %v549 = vsel %vm346, %v492, 0
    %551 = vmatpush.msra.mxu0 0.0
    %552 = vmatpush.msra.mxu0 0.0
    %553 = vmatpush.msra.mxu0 0.0
    %554 = vmatpush.msra.mxu0 0.0
    %555 = vmatpush.msra.mxu0 0.0
    %556 = vmatpush.msra.mxu0 0.0
    %557 = vmatpush.msra.mxu0 0.0
    %558 = vmatpush.msra.mxu0 0.0
    %559 = vmatpush.msra.mxu0 0.0
    %560 = vmatpush.msra.mxu0 0.0
    %561 = vmatpush.msra.mxu0 0.0
    %562 = vmatpush.msra.mxu0 0.0
    %563 = vmatpush.msra.mxu0 %v537
    %564 = vmatpush.msra.mxu0 %v534
    %565 = vmatpush.msra.mxu0 %v531
    %566 = vmatpush.msra.mxu0 %v528
    %567 = vmatmul.f32.gmra.mxu0 %v540
    %v568 = vpop.f32.mrf.mxu0
    %v569 = vadd.f32 0.0, %v568
    %570 = vmatmul.f32.gmra.mxu0 %v543
    %v571 = vpop.f32.mrf.mxu0
    %v572 = vadd.f32 0.0, %v571
    %573 = vmatmul.f32.gmra.mxu0 %v546
    %v574 = vpop.f32.mrf.mxu0
    %v575 = vadd.f32 0.0, %v574
    %576 = vmatmul.f32.gmra.mxu0 %v549
    %v577 = vpop.f32.mrf.mxu0
    %v578 = vadd.f32 0.0, %v577
    %579 = vdwg.mxu0
    %v580 = vadd.f32 %v484, %v569
    %v581 = vadd.f32 %v485, %v572
    %v582 = vadd.f32 %v486, %v575
    %v583 = vadd.f32 %v487, %v578
    %s584 = scalar_lea.vmem %s2, 96
    %v585 = vld [vmem:[%s584] sm:$0xff]
    %v586 = vld [vmem:[%s584 + $0x8] sm:$0xff]
    %v587 = vld [vmem:[%s584 + $0x10] sm:$0xff]
    %v588 = vld [vmem:[%s584 + $0x18] sm:$0xff]
    %s589 = scalar_lea.vmem [#allocation4], 384
    %v590 = vld [vmem:[%s589] sm:$0xff]
    %v591 = vld [vmem:[%s589 + $0x8] sm:$0xff]
    %v592 = vld [vmem:[%s589 + $0x10] sm:$0xff]
    %v593 = vld [vmem:[%s589 + $0x18] sm:$0xff]
    %v594 = vld [vmem:[%s589 + $0x20] sm:$0xff]
    %v595 = vld [vmem:[%s589 + $0x28] sm:$0xff]
    %v596 = vld [vmem:[%s589 + $0x30] sm:$0xff]
    %v597 = vld [vmem:[%s589 + $0x38] sm:$0xff]
    %v598 = vld [vmem:[%s589 + $0x40] sm:$0xff]
    %v599 = vld [vmem:[%s589 + $0x48] sm:$0xff]
    %v600 = vld [vmem:[%s589 + $0x50] sm:$0xff]
    %v601 = vld [vmem:[%s589 + $0x58] sm:$0xff]
    %v602 = vld [vmem:[%s589 + $0x60] sm:$0xff]
    %v603 = vld [vmem:[%s589 + $0x68] sm:$0xff]
    %v604 = vld [vmem:[%s589 + $0x70] sm:$0xff]
    %v605 = vld [vmem:[%s589 + $0x78] sm:$0xff]
    %606 = vmatpush.msra.mxu0 %v605
    %607 = vmatpush.msra.mxu0 %v604
    %608 = vmatpush.msra.mxu0 %v603
    %609 = vmatpush.msra.mxu0 %v602
    %610 = vmatpush.msra.mxu0 %v601
    %611 = vmatpush.msra.mxu0 %v600
    %612 = vmatpush.msra.mxu0 %v599
    %613 = vmatpush.msra.mxu0 %v598
    %614 = vmatpush.msra.mxu0 %v597
    %615 = vmatpush.msra.mxu0 %v596
    %616 = vmatpush.msra.mxu0 %v595
    %617 = vmatpush.msra.mxu0 %v594
    %618 = vmatpush.msra.mxu0 %v593
    %619 = vmatpush.msra.mxu0 %v592
    %620 = vmatpush.msra.mxu0 %v591
    %621 = vmatpush.msra.mxu0 %v590
    %622 = vmatmul.f32.gmra.mxu0 %v288
    %v623 = vpop.f32.mrf.mxu0
    %v624 = vadd.f32 0.0, %v623
    %625 = vmatmul.f32.gmra.mxu0 %v289
    %v626 = vpop.f32.mrf.mxu0
    %v627 = vadd.f32 0.0, %v626
    %628 = vmatmul.f32.gmra.mxu0 %v290
    %v629 = vpop.f32.mrf.mxu0
    %v630 = vadd.f32 0.0, %v629
    %631 = vmatmul.f32.gmra.mxu0 %v291
    %v632 = vpop.f32.mrf.mxu0
    %v633 = vadd.f32 0.0, %v632
    %634 = vdwg.mxu0
    %v636 = vsel %vm346, %v585, 0
    %v639 = vsel %vm346, %v586, 0
    %v642 = vsel %vm346, %v587, 0
    %v645 = vsel %vm346, %v588, 0
    %647 = vmatpush.msra.mxu0 0.0
    %648 = vmatpush.msra.mxu0 0.0
    %649 = vmatpush.msra.mxu0 0.0
    %650 = vmatpush.msra.mxu0 0.0
    %651 = vmatpush.msra.mxu0 0.0
    %652 = vmatpush.msra.mxu0 0.0
    %653 = vmatpush.msra.mxu0 0.0
    %654 = vmatpush.msra.mxu0 0.0
    %655 = vmatpush.msra.mxu0 0.0
    %656 = vmatpush.msra.mxu0 0.0
    %657 = vmatpush.msra.mxu0 0.0
    %658 = vmatpush.msra.mxu0 0.0
    %659 = vmatpush.msra.mxu0 %v633
    %660 = vmatpush.msra.mxu0 %v630
    %661 = vmatpush.msra.mxu0 %v627
    %662 = vmatpush.msra.mxu0 %v624
    %663 = vmatmul.f32.gmra.mxu0 %v636
    %v664 = vpop.f32.mrf.mxu0
    %v665 = vadd.f32 0.0, %v664
    %666 = vmatmul.f32.gmra.mxu0 %v639
    %v667 = vpop.f32.mrf.mxu0
    %v668 = vadd.f32 0.0, %v667
    %669 = vmatmul.f32.gmra.mxu0 %v642
    %v670 = vpop.f32.mrf.mxu0
    %v671 = vadd.f32 0.0, %v670
    %672 = vmatmul.f32.gmra.mxu0 %v645
    %v673 = vpop.f32.mrf.mxu0
    %v674 = vadd.f32 0.0, %v673
    %675 = vdwg.mxu0
    %v676 = vadd.f32 %v580, %v665
    %v677 = vadd.f32 %v581, %v668
    %v678 = vadd.f32 %v582, %v671
    %v679 = vadd.f32 %v583, %v674
    %s680 = scalar_lea.vmem %s2, 128
    %v681 = vld [vmem:[%s680] sm:$0xff]
    %v682 = vld [vmem:[%s680 + $0x8] sm:$0xff]
    %v683 = vld [vmem:[%s680 + $0x10] sm:$0xff]
    %v684 = vld [vmem:[%s680 + $0x18] sm:$0xff]
    %s685 = scalar_lea.vmem [#allocation4], 512
    %v686 = vld [vmem:[%s685] sm:$0xff]
    %v687 = vld [vmem:[%s685 + $0x8] sm:$0xff]
    %v688 = vld [vmem:[%s685 + $0x10] sm:$0xff]
    %v689 = vld [vmem:[%s685 + $0x18] sm:$0xff]
    %v690 = vld [vmem:[%s685 + $0x20] sm:$0xff]
    %v691 = vld [vmem:[%s685 + $0x28] sm:$0xff]
    %v692 = vld [vmem:[%s685 + $0x30] sm:$0xff]
    %v693 = vld [vmem:[%s685 + $0x38] sm:$0xff]
    %v694 = vld [vmem:[%s685 + $0x40] sm:$0xff]
    %v695 = vld [vmem:[%s685 + $0x48] sm:$0xff]
    %v696 = vld [vmem:[%s685 + $0x50] sm:$0xff]
    %v697 = vld [vmem:[%s685 + $0x58] sm:$0xff]
    %v698 = vld [vmem:[%s685 + $0x60] sm:$0xff]
    %v699 = vld [vmem:[%s685 + $0x68] sm:$0xff]
    %v700 = vld [vmem:[%s685 + $0x70] sm:$0xff]
    %v701 = vld [vmem:[%s685 + $0x78] sm:$0xff]
    %702 = vmatpush.msra.mxu0 %v701
    %703 = vmatpush.msra.mxu0 %v700
    %704 = vmatpush.msra.mxu0 %v699
    %705 = vmatpush.msra.mxu0 %v698
    %706 = vmatpush.msra.mxu0 %v697
    %707 = vmatpush.msra.mxu0 %v696
    %708 = vmatpush.msra.mxu0 %v695
    %709 = vmatpush.msra.mxu0 %v694
    %710 = vmatpush.msra.mxu0 %v693
    %711 = vmatpush.msra.mxu0 %v692
    %712 = vmatpush.msra.mxu0 %v691
    %713 = vmatpush.msra.mxu0 %v690
    %714 = vmatpush.msra.mxu0 %v689
    %715 = vmatpush.msra.mxu0 %v688
    %716 = vmatpush.msra.mxu0 %v687
    %717 = vmatpush.msra.mxu0 %v686
    %718 = vmatmul.f32.gmra.mxu0 %v288
    %v719 = vpop.f32.mrf.mxu0
    %v720 = vadd.f32 0.0, %v719
    %721 = vmatmul.f32.gmra.mxu0 %v289
    %v722 = vpop.f32.mrf.mxu0
    %v723 = vadd.f32 0.0, %v722
    %724 = vmatmul.f32.gmra.mxu0 %v290
    %v725 = vpop.f32.mrf.mxu0
    %v726 = vadd.f32 0.0, %v725
    %727 = vmatmul.f32.gmra.mxu0 %v291
    %v728 = vpop.f32.mrf.mxu0
    %v729 = vadd.f32 0.0, %v728
    %730 = vdwg.mxu0
    %v732 = vsel %vm346, %v681, 0
    %v735 = vsel %vm346, %v682, 0
    %v738 = vsel %vm346, %v683, 0
    %v741 = vsel %vm346, %v684, 0
    %743 = vmatpush.msra.mxu0 0.0
    %744 = vmatpush.msra.mxu0 0.0
    %745 = vmatpush.msra.mxu0 0.0
    %746 = vmatpush.msra.mxu0 0.0
    %747 = vmatpush.msra.mxu0 0.0
    %748 = vmatpush.msra.mxu0 0.0
    %749 = vmatpush.msra.mxu0 0.0
    %750 = vmatpush.msra.mxu0 0.0
    %751 = vmatpush.msra.mxu0 0.0
    %752 = vmatpush.msra.mxu0 0.0
    %753 = vmatpush.msra.mxu0 0.0
    %754 = vmatpush.msra.mxu0 0.0
    %755 = vmatpush.msra.mxu0 %v729
    %756 = vmatpush.msra.mxu0 %v726
    %757 = vmatpush.msra.mxu0 %v723
    %758 = vmatpush.msra.mxu0 %v720
    %759 = vmatmul.f32.gmra.mxu0 %v732
    %v760 = vpop.f32.mrf.mxu0
    %v761 = vadd.f32 0.0, %v760
    %762 = vmatmul.f32.gmra.mxu0 %v735
    %v763 = vpop.f32.mrf.mxu0
    %v764 = vadd.f32 0.0, %v763
    %765 = vmatmul.f32.gmra.mxu0 %v738
    %v766 = vpop.f32.mrf.mxu0
    %v767 = vadd.f32 0.0, %v766
    %768 = vmatmul.f32.gmra.mxu0 %v741
    %v769 = vpop.f32.mrf.mxu0
    %v770 = vadd.f32 0.0, %v769
    %771 = vdwg.mxu0
    %v772 = vadd.f32 %v676, %v761
    %v773 = vadd.f32 %v677, %v764
    %v774 = vadd.f32 %v678, %v767
    %v775 = vadd.f32 %v679, %v770
    %s776 = scalar_lea.vmem %s2, 160
    %v777 = vld [vmem:[%s776] sm:$0xff]
    %v778 = vld [vmem:[%s776 + $0x8] sm:$0xff]
    %v779 = vld [vmem:[%s776 + $0x10] sm:$0xff]
    %v780 = vld [vmem:[%s776 + $0x18] sm:$0xff]
    %s781 = scalar_lea.vmem [#allocation4], 640
    %v782 = vld [vmem:[%s781] sm:$0xff]
    %v783 = vld [vmem:[%s781 + $0x8] sm:$0xff]
    %v784 = vld [vmem:[%s781 + $0x10] sm:$0xff]
    %v785 = vld [vmem:[%s781 + $0x18] sm:$0xff]
    %v786 = vld [vmem:[%s781 + $0x20] sm:$0xff]
    %v787 = vld [vmem:[%s781 + $0x28] sm:$0xff]
    %v788 = vld [vmem:[%s781 + $0x30] sm:$0xff]
    %v789 = vld [vmem:[%s781 + $0x38] sm:$0xff]
    %v790 = vld [vmem:[%s781 + $0x40] sm:$0xff]
    %v791 = vld [vmem:[%s781 + $0x48] sm:$0xff]
    %v792 = vld [vmem:[%s781 + $0x50] sm:$0xff]
    %v793 = vld [vmem:[%s781 + $0x58] sm:$0xff]
    %v794 = vld [vmem:[%s781 + $0x60] sm:$0xff]
    %v795 = vld [vmem:[%s781 + $0x68] sm:$0xff]
    %v796 = vld [vmem:[%s781 + $0x70] sm:$0xff]
    %v797 = vld [vmem:[%s781 + $0x78] sm:$0xff]
    %798 = vmatpush.msra.mxu0 %v797
    %799 = vmatpush.msra.mxu0 %v796
    %800 = vmatpush.msra.mxu0 %v795
    %801 = vmatpush.msra.mxu0 %v794
    %802 = vmatpush.msra.mxu0 %v793
    %803 = vmatpush.msra.mxu0 %v792
    %804 = vmatpush.msra.mxu0 %v791
    %805 = vmatpush.msra.mxu0 %v790
    %806 = vmatpush.msra.mxu0 %v789
    %807 = vmatpush.msra.mxu0 %v788
    %808 = vmatpush.msra.mxu0 %v787
    %809 = vmatpush.msra.mxu0 %v786
    %810 = vmatpush.msra.mxu0 %v785
    %811 = vmatpush.msra.mxu0 %v784
    %812 = vmatpush.msra.mxu0 %v783
    %813 = vmatpush.msra.mxu0 %v782
    %814 = vmatmul.f32.gmra.mxu0 %v288
    %v815 = vpop.f32.mrf.mxu0
    %v816 = vadd.f32 0.0, %v815
    %817 = vmatmul.f32.gmra.mxu0 %v289
    %v818 = vpop.f32.mrf.mxu0
    %v819 = vadd.f32 0.0, %v818
    %820 = vmatmul.f32.gmra.mxu0 %v290
    %v821 = vpop.f32.mrf.mxu0
    %v822 = vadd.f32 0.0, %v821
    %823 = vmatmul.f32.gmra.mxu0 %v291
    %v824 = vpop.f32.mrf.mxu0
    %v825 = vadd.f32 0.0, %v824
    %826 = vdwg.mxu0
    %v828 = vsel %vm346, %v777, 0
    %v831 = vsel %vm346, %v778, 0
    %v834 = vsel %vm346, %v779, 0
    %v837 = vsel %vm346, %v780, 0
    %839 = vmatpush.msra.mxu0 0.0
    %840 = vmatpush.msra.mxu0 0.0
    %841 = vmatpush.msra.mxu0 0.0
    %842 = vmatpush.msra.mxu0 0.0
    %843 = vmatpush.msra.mxu0 0.0
    %844 = vmatpush.msra.mxu0 0.0
    %845 = vmatpush.msra.mxu0 0.0
    %846 = vmatpush.msra.mxu0 0.0
    %847 = vmatpush.msra.mxu0 0.0
    %848 = vmatpush.msra.mxu0 0.0
    %849 = vmatpush.msra.mxu0 0.0
    %850 = vmatpush.msra.mxu0 0.0
    %851 = vmatpush.msra.mxu0 %v825
    %852 = vmatpush.msra.mxu0 %v822
    %853 = vmatpush.msra.mxu0 %v819
    %854 = vmatpush.msra.mxu0 %v816
    %855 = vmatmul.f32.gmra.mxu0 %v828
    %v856 = vpop.f32.mrf.mxu0
    %v857 = vadd.f32 0.0, %v856
    %858 = vmatmul.f32.gmra.mxu0 %v831
    %v859 = vpop.f32.mrf.mxu0
    %v860 = vadd.f32 0.0, %v859
    %861 = vmatmul.f32.gmra.mxu0 %v834
    %v862 = vpop.f32.mrf.mxu0
    %v863 = vadd.f32 0.0, %v862
    %864 = vmatmul.f32.gmra.mxu0 %v837
    %v865 = vpop.f32.mrf.mxu0
    %v866 = vadd.f32 0.0, %v865
    %867 = vdwg.mxu0
    %v868 = vadd.f32 %v772, %v857
    %v869 = vadd.f32 %v773, %v860
    %v870 = vadd.f32 %v774, %v863
    %v871 = vadd.f32 %v775, %v866
    %s872 = scalar_lea.vmem %s2, 192
    %v873 = vld [vmem:[%s872] sm:$0xff]
    %v874 = vld [vmem:[%s872 + $0x8] sm:$0xff]
    %v875 = vld [vmem:[%s872 + $0x10] sm:$0xff]
    %v876 = vld [vmem:[%s872 + $0x18] sm:$0xff]
    %s877 = scalar_lea.vmem [#allocation4], 768
    %v878 = vld [vmem:[%s877] sm:$0xff]
    %v879 = vld [vmem:[%s877 + $0x8] sm:$0xff]
    %v880 = vld [vmem:[%s877 + $0x10] sm:$0xff]
    %v881 = vld [vmem:[%s877 + $0x18] sm:$0xff]
    %v882 = vld [vmem:[%s877 + $0x20] sm:$0xff]
    %v883 = vld [vmem:[%s877 + $0x28] sm:$0xff]
    %v884 = vld [vmem:[%s877 + $0x30] sm:$0xff]
    %v885 = vld [vmem:[%s877 + $0x38] sm:$0xff]
    %v886 = vld [vmem:[%s877 + $0x40] sm:$0xff]
    %v887 = vld [vmem:[%s877 + $0x48] sm:$0xff]
    %v888 = vld [vmem:[%s877 + $0x50] sm:$0xff]
    %v889 = vld [vmem:[%s877 + $0x58] sm:$0xff]
    %v890 = vld [vmem:[%s877 + $0x60] sm:$0xff]
    %v891 = vld [vmem:[%s877 + $0x68] sm:$0xff]
    %v892 = vld [vmem:[%s877 + $0x70] sm:$0xff]
    %v893 = vld [vmem:[%s877 + $0x78] sm:$0xff]
    %894 = vmatpush.msra.mxu0 %v893
    %895 = vmatpush.msra.mxu0 %v892
    %896 = vmatpush.msra.mxu0 %v891
    %897 = vmatpush.msra.mxu0 %v890
    %898 = vmatpush.msra.mxu0 %v889
    %899 = vmatpush.msra.mxu0 %v888
    %900 = vmatpush.msra.mxu0 %v887
    %901 = vmatpush.msra.mxu0 %v886
    %902 = vmatpush.msra.mxu0 %v885
    %903 = vmatpush.msra.mxu0 %v884
    %904 = vmatpush.msra.mxu0 %v883
    %905 = vmatpush.msra.mxu0 %v882
    %906 = vmatpush.msra.mxu0 %v881
    %907 = vmatpush.msra.mxu0 %v880
    %908 = vmatpush.msra.mxu0 %v879
    %909 = vmatpush.msra.mxu0 %v878
    %910 = vmatmul.f32.gmra.mxu0 %v288
    %v911 = vpop.f32.mrf.mxu0
    %v912 = vadd.f32 0.0, %v911
    %913 = vmatmul.f32.gmra.mxu0 %v289
    %v914 = vpop.f32.mrf.mxu0
    %v915 = vadd.f32 0.0, %v914
    %916 = vmatmul.f32.gmra.mxu0 %v290
    %v917 = vpop.f32.mrf.mxu0
    %v918 = vadd.f32 0.0, %v917
    %919 = vmatmul.f32.gmra.mxu0 %v291
    %v920 = vpop.f32.mrf.mxu0
    %v921 = vadd.f32 0.0, %v920
    %922 = vdwg.mxu0
    %v924 = vsel %vm346, %v873, 0
    %v927 = vsel %vm346, %v874, 0
    %v930 = vsel %vm346, %v875, 0
    %v933 = vsel %vm346, %v876, 0
    %935 = vmatpush.msra.mxu0 0.0
    %936 = vmatpush.msra.mxu0 0.0
    %937 = vmatpush.msra.mxu0 0.0
    %938 = vmatpush.msra.mxu0 0.0
    %939 = vmatpush.msra.mxu0 0.0
    %940 = vmatpush.msra.mxu0 0.0
    %941 = vmatpush.msra.mxu0 0.0
    %942 = vmatpush.msra.mxu0 0.0
    %943 = vmatpush.msra.mxu0 0.0
    %944 = vmatpush.msra.mxu0 0.0
    %945 = vmatpush.msra.mxu0 0.0
    %946 = vmatpush.msra.mxu0 0.0
    %947 = vmatpush.msra.mxu0 %v921
    %948 = vmatpush.msra.mxu0 %v918
    %949 = vmatpush.msra.mxu0 %v915
    %950 = vmatpush.msra.mxu0 %v912
    %951 = vmatmul.f32.gmra.mxu0 %v924
    %v952 = vpop.f32.mrf.mxu0
    %v953 = vadd.f32 0.0, %v952
    %954 = vmatmul.f32.gmra.mxu0 %v927
    %v955 = vpop.f32.mrf.mxu0
    %v956 = vadd.f32 0.0, %v955
    %957 = vmatmul.f32.gmra.mxu0 %v930
    %v958 = vpop.f32.mrf.mxu0
    %v959 = vadd.f32 0.0, %v958
    %960 = vmatmul.f32.gmra.mxu0 %v933
    %v961 = vpop.f32.mrf.mxu0
    %v962 = vadd.f32 0.0, %v961
    %963 = vdwg.mxu0
    %v964 = vadd.f32 %v868, %v953
    %v965 = vadd.f32 %v869, %v956
    %v966 = vadd.f32 %v870, %v959
    %v967 = vadd.f32 %v871, %v962
    %v968 = vld [vmem:[%s7] sm:$0x1]
    %v969 = vld [vmem:[%s8] sm:$0x1]
    %v970 = vadd.f32 %v964, %v965
    %v971 = vadd.f32 %v970, %v966
    %v972 = vadd.f32 %v971, %v967
    %v973 = vrot.slane %v972, 4
    %v974 = vadd.f32 %v972, %v973
    %v975 = vrot.slane %v974, 2
    %v976 = vadd.f32 %v974, %v975
    %v977 = vrot.slane %v976, 1
    %v978 = vadd.f32 %v976, %v977
    %v979 = vmul.f32 %v964, %v964
    %v980 = vmul.f32 %v965, %v965
    %v981 = vmul.f32 %v966, %v966
    %v982 = vmul.f32 %v967, %v967
    %v983 = vadd.f32 %v979, %v980
    %v984 = vadd.f32 %v983, %v981
    %v985 = vadd.f32 %v984, %v982
    %v986 = vrot.slane %v985, 4
    %v987 = vadd.f32 %v985, %v986
    %v988 = vrot.slane %v987, 2
    %v989 = vadd.f32 %v987, %v988
    %v990 = vrot.slane %v989, 1
    %v991 = vadd.f32 %v989, %v990
    %992 = vmatpush.msra.mxu0 %v195
    %993 = vmatpush.msra.mxu0 %v194
    %994 = vmatpush.msra.mxu0 %v193
    %995 = vmatpush.msra.mxu0 %v192
    %996 = vmatpush.msra.mxu0 %v191
    %997 = vmatpush.msra.mxu0 %v190
    %998 = vmatpush.msra.mxu0 %v189
    %999 = vmatpush.msra.mxu0 %v188
    %1000 = vmatpush.msra.mxu0 %v187
    %1001 = vmatpush.msra.mxu0 %v186
    %1002 = vmatpush.msra.mxu0 %v185
    %1003 = vmatpush.msra.mxu0 %v184
    %1004 = vmatpush.msra.mxu0 %v183
    %1005 = vmatpush.msra.mxu0 %v182
    %1006 = vmatpush.msra.mxu0 %v181
    %1007 = vmatpush.msra.mxu0 %v180
    %1008 = vmatmul.f32.gmra.mxu0 %v978
    %v1009 = vpop.f32.mrf.mxu0
    %v1010 = vadd.f32 0.0, %v1009
    %1011 = vdwg.mxu0
    %1012 = vmatpush.msra.mxu0 %v195
    %1013 = vmatpush.msra.mxu0 %v194
    %1014 = vmatpush.msra.mxu0 %v193
    %1015 = vmatpush.msra.mxu0 %v192
    %1016 = vmatpush.msra.mxu0 %v191
    %1017 = vmatpush.msra.mxu0 %v190
    %1018 = vmatpush.msra.mxu0 %v189
    %1019 = vmatpush.msra.mxu0 %v188
    %1020 = vmatpush.msra.mxu0 %v187
    %1021 = vmatpush.msra.mxu0 %v186
    %1022 = vmatpush.msra.mxu0 %v185
    %1023 = vmatpush.msra.mxu0 %v184
    %1024 = vmatpush.msra.mxu0 %v183
    %1025 = vmatpush.msra.mxu0 %v182
    %1026 = vmatpush.msra.mxu0 %v181
    %1027 = vmatpush.msra.mxu0 %v180
    %1028 = vmatmul.f32.gmra.mxu0 %v991
    %v1029 = vpop.f32.mrf.mxu0
    %v1030 = vadd.f32 0.0, %v1029
    %1031 = vdwg.mxu0
    %v1032 = vmul.f32 %v1010, %v1010
    %v1033 = vsub.f32 %v1030, %v1032
    %v1034 = vmax.f32 %v1033, 0.0
    %v1035 = vadd.f32 %v1034, 1e-05
    %v1036 = vrsqrt.pop %v1035
    %v1037 = vmul.f32 %v1036, %v1035
    %v1038 = vmul.f32 %v1037, %v1036
    %v1039 = vmul.f32 0.5, %v1038
    %v1040 = vsub.f32 1.5, %v1039
    %v1041 = vmul.f32 %v1036, %v1040
    %vm1042 = vweird.f32 %v1035
    %vm1043 = vweird.f32 %v1036
    %vm1044 = vmor %vm1042, %vm1043
    %v1045 = vsel %vm1044, %v1036, %v1041
    %v1046 = vperm.slane %v1010, 0
    %v1047 = vsub.f32 %v964, %v1046
    %v1048 = vsub.f32 %v965, %v1046
    %v1049 = vsub.f32 %v966, %v1046
    %v1050 = vsub.f32 %v967, %v1046
    %v1051 = vmul.f32 %v1045, %v968
    %v1052 = vperm.slane %v1051, 0
    %v1053 = vmul.f32 %v1047, %v1052
    %v1054 = vmul.f32 %v1048, %v1052
    %v1055 = vmul.f32 %v1049, %v1052
    %v1056 = vmul.f32 %v1050, %v1052
    %v1058 = vperm.slane %v969, 0
    %v1060 = vadd.f32 %v1053, %v1058
    %v1061 = vadd.f32 %v1054, %v1058
    %v1062 = vadd.f32 %v1055, %v1058
    %v1063 = vadd.f32 %v1056, %v1058
    %v1064 = vld [vmem:[#allocation6] sm:$0xff]
    %v1065 = vld [vmem:[#allocation6 + $0x8] sm:$0xff]
    %v1066 = vld [vmem:[#allocation6 + $0x10] sm:$0xff]
    %v1067 = vld [vmem:[#allocation6 + $0x18] sm:$0xff]
    %v1068 = vld [vmem:[#allocation6 + $0x20] sm:$0xff]
    %v1069 = vld [vmem:[#allocation6 + $0x28] sm:$0xff]
    %v1070 = vld [vmem:[#allocation6 + $0x30] sm:$0xff]
    %v1071 = vld [vmem:[#allocation6 + $0x38] sm:$0xff]
    %v1072 = vld [vmem:[#allocation6 + $0x40] sm:$0xff]
    %v1073 = vld [vmem:[#allocation6 + $0x48] sm:$0xff]
    %v1074 = vld [vmem:[#allocation6 + $0x50] sm:$0xff]
    %v1075 = vld [vmem:[#allocation6 + $0x58] sm:$0xff]
    %v1076 = vld [vmem:[#allocation6 + $0x60] sm:$0xff]
    %v1077 = vld [vmem:[#allocation6 + $0x68] sm:$0xff]
    %v1078 = vld [vmem:[#allocation6 + $0x70] sm:$0xff]
    %v1079 = vld [vmem:[#allocation6 + $0x78] sm:$0xff]
    %v1080 = vld [vmem:[#allocation6 + $0x80] sm:$0xff]
    %v1081 = vld [vmem:[#allocation6 + $0x88] sm:$0xff]
    %v1082 = vld [vmem:[#allocation6 + $0x90] sm:$0xff]
    %v1083 = vld [vmem:[#allocation6 + $0x98] sm:$0xff]
    %v1084 = vld [vmem:[#allocation6 + $0xa0] sm:$0xff]
    %v1085 = vld [vmem:[#allocation6 + $0xa8] sm:$0xff]
    %v1086 = vld [vmem:[#allocation6 + $0xb0] sm:$0xff]
    %v1087 = vld [vmem:[#allocation6 + $0xb8] sm:$0xff]
    %v1088 = vld [vmem:[#allocation6 + $0xc0] sm:$0xff]
    %v1089 = vld [vmem:[#allocation6 + $0xc8] sm:$0xff]
    %v1090 = vld [vmem:[#allocation6 + $0xd0] sm:$0xff]
    %v1091 = vld [vmem:[#allocation6 + $0xd8] sm:$0xff]
    %v1092 = vld [vmem:[#allocation6 + $0xe0] sm:$0xff]
    %v1093 = vld [vmem:[#allocation6 + $0xe8] sm:$0xff]
    %v1094 = vld [vmem:[#allocation6 + $0xf0] sm:$0xff]
    %v1095 = vld [vmem:[#allocation6 + $0xf8] sm:$0xff]
    %v1096 = vld [vmem:[#allocation6 + $0x100] sm:$0xff]
    %v1097 = vld [vmem:[#allocation6 + $0x108] sm:$0xff]
    %v1098 = vld [vmem:[#allocation6 + $0x110] sm:$0xff]
    %v1099 = vld [vmem:[#allocation6 + $0x118] sm:$0xff]
    %v1100 = vld [vmem:[#allocation6 + $0x120] sm:$0xff]
    %v1101 = vld [vmem:[#allocation6 + $0x128] sm:$0xff]
    %v1102 = vld [vmem:[#allocation6 + $0x130] sm:$0xff]
    %v1103 = vld [vmem:[#allocation6 + $0x138] sm:$0xff]
    %v1104 = vld [vmem:[#allocation6 + $0x140] sm:$0xff]
    %v1105 = vld [vmem:[#allocation6 + $0x148] sm:$0xff]
    %v1106 = vld [vmem:[#allocation6 + $0x150] sm:$0xff]
    %v1107 = vld [vmem:[#allocation6 + $0x158] sm:$0xff]
    %v1108 = vld [vmem:[#allocation6 + $0x160] sm:$0xff]
    %v1109 = vld [vmem:[#allocation6 + $0x168] sm:$0xff]
    %v1110 = vld [vmem:[#allocation6 + $0x170] sm:$0xff]
    %v1111 = vld [vmem:[#allocation6 + $0x178] sm:$0xff]
    %v1112 = vld [vmem:[#allocation6 + $0x180] sm:$0xff]
    %v1113 = vld [vmem:[#allocation6 + $0x188] sm:$0xff]
    %v1114 = vld [vmem:[#allocation6 + $0x190] sm:$0xff]
    %v1115 = vld [vmem:[#allocation6 + $0x198] sm:$0xff]
    %v1116 = vld [vmem:[#allocation6 + $0x1a0] sm:$0xff]
    %v1117 = vld [vmem:[#allocation6 + $0x1a8] sm:$0xff]
    %v1118 = vld [vmem:[#allocation6 + $0x1b0] sm:$0xff]
    %v1119 = vld [vmem:[#allocation6 + $0x1b8] sm:$0xff]
    %v1120 = vld [vmem:[#allocation6 + $0x1c0] sm:$0xff]
    %v1121 = vld [vmem:[#allocation6 + $0x1c8] sm:$0xff]
    %v1122 = vld [vmem:[#allocation6 + $0x1d0] sm:$0xff]
    %v1123 = vld [vmem:[#allocation6 + $0x1d8] sm:$0xff]
    %v1124 = vld [vmem:[#allocation6 + $0x1e0] sm:$0xff]
    %v1125 = vld [vmem:[#allocation6 + $0x1e8] sm:$0xff]
    %v1126 = vld [vmem:[#allocation6 + $0x1f0] sm:$0xff]
    %v1127 = vld [vmem:[#allocation6 + $0x1f8] sm:$0xff]
    %v1128 = vld [vmem:[%s10] sm:$0xf]
    %v1130 = vperm.slane %v1128, 0
    %v1131 = vperm.slane %v1128, 1
    %v1132 = vperm.slane %v1128, 2
    %v1133 = vperm.slane %v1128, 3
    %1138 = vmatpush.msra.mxu0 %v1124
    %1139 = vmatpush.msra.mxu0 %v1120
    %1140 = vmatpush.msra.mxu0 %v1116
    %1141 = vmatpush.msra.mxu0 %v1112
    %1142 = vmatpush.msra.mxu0 %v1108
    %1143 = vmatpush.msra.mxu0 %v1104
    %1144 = vmatpush.msra.mxu0 %v1100
    %1145 = vmatpush.msra.mxu0 %v1096
    %1146 = vmatpush.msra.mxu0 %v1092
    %1147 = vmatpush.msra.mxu0 %v1088
    %1148 = vmatpush.msra.mxu0 %v1084
    %1149 = vmatpush.msra.mxu0 %v1080
    %1150 = vmatpush.msra.mxu0 %v1076
    %1151 = vmatpush.msra.mxu0 %v1072
    %1152 = vmatpush.msra.mxu0 %v1068
    %1153 = vmatpush.msra.mxu0 %v1064
    %1154 = vmatmul.f32.gmra.mxu0 %v1060
    %v1155 = vpop.f32.mrf.mxu0
    %v1156 = vadd.f32 %v1130, %v1155
    %1157 = vmatmul.f32.gmra.mxu0 %v1061
    %v1158 = vpop.f32.mrf.mxu0
    %v1159 = vadd.f32 %v1130, %v1158
    %1160 = vmatmul.f32.gmra.mxu0 %v1062
    %v1161 = vpop.f32.mrf.mxu0
    %v1162 = vadd.f32 %v1130, %v1161
    %1163 = vmatmul.f32.gmra.mxu0 %v1063
    %v1164 = vpop.f32.mrf.mxu0
    %v1165 = vadd.f32 %v1130, %v1164
    %1166 = vdwg.mxu0
    %1167 = vmatpush.msra.mxu0 %v1125
    %1168 = vmatpush.msra.mxu0 %v1121
    %1169 = vmatpush.msra.mxu0 %v1117
    %1170 = vmatpush.msra.mxu0 %v1113
    %1171 = vmatpush.msra.mxu0 %v1109
    %1172 = vmatpush.msra.mxu0 %v1105
    %1173 = vmatpush.msra.mxu0 %v1101
    %1174 = vmatpush.msra.mxu0 %v1097
    %1175 = vmatpush.msra.mxu0 %v1093
    %1176 = vmatpush.msra.mxu0 %v1089
    %1177 = vmatpush.msra.mxu0 %v1085
    %1178 = vmatpush.msra.mxu0 %v1081
    %1179 = vmatpush.msra.mxu0 %v1077
    %1180 = vmatpush.msra.mxu0 %v1073
    %1181 = vmatpush.msra.mxu0 %v1069
    %1182 = vmatpush.msra.mxu0 %v1065
    %1183 = vmatmul.f32.gmra.mxu0 %v1060
    %v1184 = vpop.f32.mrf.mxu0
    %v1185 = vadd.f32 %v1131, %v1184
    %1186 = vmatmul.f32.gmra.mxu0 %v1061
    %v1187 = vpop.f32.mrf.mxu0
    %v1188 = vadd.f32 %v1131, %v1187
    %1189 = vmatmul.f32.gmra.mxu0 %v1062
    %v1190 = vpop.f32.mrf.mxu0
    %v1191 = vadd.f32 %v1131, %v1190
    %1192 = vmatmul.f32.gmra.mxu0 %v1063
    %v1193 = vpop.f32.mrf.mxu0
    %v1194 = vadd.f32 %v1131, %v1193
    %1195 = vdwg.mxu0
    %1196 = vmatpush.msra.mxu0 %v1126
    %1197 = vmatpush.msra.mxu0 %v1122
    %1198 = vmatpush.msra.mxu0 %v1118
    %1199 = vmatpush.msra.mxu0 %v1114
    %1200 = vmatpush.msra.mxu0 %v1110
    %1201 = vmatpush.msra.mxu0 %v1106
    %1202 = vmatpush.msra.mxu0 %v1102
    %1203 = vmatpush.msra.mxu0 %v1098
    %1204 = vmatpush.msra.mxu0 %v1094
    %1205 = vmatpush.msra.mxu0 %v1090
    %1206 = vmatpush.msra.mxu0 %v1086
    %1207 = vmatpush.msra.mxu0 %v1082
    %1208 = vmatpush.msra.mxu0 %v1078
    %1209 = vmatpush.msra.mxu0 %v1074
    %1210 = vmatpush.msra.mxu0 %v1070
    %1211 = vmatpush.msra.mxu0 %v1066
    %1212 = vmatmul.f32.gmra.mxu0 %v1060
    %v1213 = vpop.f32.mrf.mxu0
    %v1214 = vadd.f32 %v1132, %v1213
    %1215 = vmatmul.f32.gmra.mxu0 %v1061
    %v1216 = vpop.f32.mrf.mxu0
    %v1217 = vadd.f32 %v1132, %v1216
    %1218 = vmatmul.f32.gmra.mxu0 %v1062
    %v1219 = vpop.f32.mrf.mxu0
    %v1220 = vadd.f32 %v1132, %v1219
    %1221 = vmatmul.f32.gmra.mxu0 %v1063
    %v1222 = vpop.f32.mrf.mxu0
    %v1223 = vadd.f32 %v1132, %v1222
    %1224 = vdwg.mxu0
    %1225 = vmatpush.msra.mxu0 %v1127
    %1226 = vmatpush.msra.mxu0 %v1123
    %1227 = vmatpush.msra.mxu0 %v1119
    %1228 = vmatpush.msra.mxu0 %v1115
    %1229 = vmatpush.msra.mxu0 %v1111
    %1230 = vmatpush.msra.mxu0 %v1107
    %1231 = vmatpush.msra.mxu0 %v1103
    %1232 = vmatpush.msra.mxu0 %v1099
    %1233 = vmatpush.msra.mxu0 %v1095
    %1234 = vmatpush.msra.mxu0 %v1091
    %1235 = vmatpush.msra.mxu0 %v1087
    %1236 = vmatpush.msra.mxu0 %v1083
    %1237 = vmatpush.msra.mxu0 %v1079
    %1238 = vmatpush.msra.mxu0 %v1075
    %1239 = vmatpush.msra.mxu0 %v1071
    %1240 = vmatpush.msra.mxu0 %v1067
    %1241 = vmatmul.f32.gmra.mxu0 %v1060
    %v1242 = vpop.f32.mrf.mxu0
    %v1243 = vadd.f32 %v1133, %v1242
    %1244 = vmatmul.f32.gmra.mxu0 %v1061
    %v1245 = vpop.f32.mrf.mxu0
    %v1246 = vadd.f32 %v1133, %v1245
    %1247 = vmatmul.f32.gmra.mxu0 %v1062
    %v1248 = vpop.f32.mrf.mxu0
    %v1249 = vadd.f32 %v1133, %v1248
    %1250 = vmatmul.f32.gmra.mxu0 %v1063
    %v1251 = vpop.f32.mrf.mxu0
    %v1252 = vadd.f32 %v1133, %v1251
    %1253 = vdwg.mxu0
    %v1254 = vmax.f32 %v1156, 0.0
    %v1255 = vmax.f32 %v1185, 0.0
    %v1256 = vmax.f32 %v1159, 0.0
    %v1257 = vmax.f32 %v1188, 0.0
    %v1258 = vmax.f32 %v1162, 0.0
    %v1259 = vmax.f32 %v1191, 0.0
    %v1260 = vmax.f32 %v1165, 0.0
    %v1261 = vmax.f32 %v1194, 0.0
    %v1262 = vmin.f32 %v1254, 6.0
    %v1263 = vmin.f32 %v1255, 6.0
    %v1264 = vmin.f32 %v1256, 6.0
    %v1265 = vmin.f32 %v1257, 6.0
    %v1266 = vmin.f32 %v1258, 6.0
    %v1267 = vmin.f32 %v1259, 6.0
    %v1268 = vmin.f32 %v1260, 6.0
    %v1269 = vmin.f32 %v1261, 6.0
    %v1270 = vmul.f32 %v1262, %v1214
    %v1271 = vmul.f32 %v1263, %v1243
    %v1272 = vmul.f32 %v1264, %v1217
    %v1273 = vmul.f32 %v1265, %v1246
    %v1274 = vmul.f32 %v1266, %v1220
    %v1275 = vmul.f32 %v1267, %v1249
    %v1276 = vmul.f32 %v1268, %v1223
    %v1277 = vmul.f32 %v1269, %v1252
    %v1278 = vld [vmem:[%s11] sm:$0xff]
    %v1279 = vld [vmem:[%s11 + $0x8] sm:$0xff]
    %v1280 = vld [vmem:[%s11 + $0x10] sm:$0xff]
    %v1281 = vld [vmem:[%s11 + $0x18] sm:$0xff]
    %v1282 = vld [vmem:[%s11 + $0x20] sm:$0xff]
    %v1283 = vld [vmem:[%s11 + $0x28] sm:$0xff]
    %v1284 = vld [vmem:[%s11 + $0x30] sm:$0xff]
    %v1285 = vld [vmem:[%s11 + $0x38] sm:$0xff]
    %v1286 = vld [vmem:[%s11 + $0x40] sm:$0xff]
    %v1287 = vld [vmem:[%s11 + $0x48] sm:$0xff]
    %v1288 = vld [vmem:[%s11 + $0x50] sm:$0xff]
    %v1289 = vld [vmem:[%s11 + $0x58] sm:$0xff]
    %v1290 = vld [vmem:[%s11 + $0x60] sm:$0xff]
    %v1291 = vld [vmem:[%s11 + $0x68] sm:$0xff]
    %v1292 = vld [vmem:[%s11 + $0x70] sm:$0xff]
    %v1293 = vld [vmem:[%s11 + $0x78] sm:$0xff]
    %v1294 = vld [vmem:[%s11 + $0x80] sm:$0xff]
    %v1295 = vld [vmem:[%s11 + $0x88] sm:$0xff]
    %v1296 = vld [vmem:[%s11 + $0x90] sm:$0xff]
    %v1297 = vld [vmem:[%s11 + $0x98] sm:$0xff]
    %v1298 = vld [vmem:[%s11 + $0xa0] sm:$0xff]
    %v1299 = vld [vmem:[%s11 + $0xa8] sm:$0xff]
    %v1300 = vld [vmem:[%s11 + $0xb0] sm:$0xff]
    %v1301 = vld [vmem:[%s11 + $0xb8] sm:$0xff]
    %v1302 = vld [vmem:[%s11 + $0xc0] sm:$0xff]
    %v1303 = vld [vmem:[%s11 + $0xc8] sm:$0xff]
    %v1304 = vld [vmem:[%s11 + $0xd0] sm:$0xff]
    %v1305 = vld [vmem:[%s11 + $0xd8] sm:$0xff]
    %v1306 = vld [vmem:[%s11 + $0xe0] sm:$0xff]
    %v1307 = vld [vmem:[%s11 + $0xe8] sm:$0xff]
    %v1308 = vld [vmem:[%s11 + $0xf0] sm:$0xff]
    %v1309 = vld [vmem:[%s11 + $0xf8] sm:$0xff]
    %v1310 = vld [vmem:[%s12] sm:$0x1]
    %v1312 = vperm.slane %v1310, 0
    %1314 = vmatpush.msra.mxu0 %v1293
    %1315 = vmatpush.msra.mxu0 %v1292
    %1316 = vmatpush.msra.mxu0 %v1291
    %1317 = vmatpush.msra.mxu0 %v1290
    %1318 = vmatpush.msra.mxu0 %v1289
    %1319 = vmatpush.msra.mxu0 %v1288
    %1320 = vmatpush.msra.mxu0 %v1287
    %1321 = vmatpush.msra.mxu0 %v1286
    %1322 = vmatpush.msra.mxu0 %v1285
    %1323 = vmatpush.msra.mxu0 %v1284
    %1324 = vmatpush.msra.mxu0 %v1283
    %1325 = vmatpush.msra.mxu0 %v1282
    %1326 = vmatpush.msra.mxu0 %v1281
    %1327 = vmatpush.msra.mxu0 %v1280
    %1328 = vmatpush.msra.mxu0 %v1279
    %1329 = vmatpush.msra.mxu0 %v1278
    %1330 = vmatmul.f32.gmra.mxu0 %v1270
    %v1331 = vpop.f32.mrf.mxu0
    %v1332 = vadd.f32 %v1312, %v1331
    %1333 = vmatmul.f32.gmra.mxu0 %v1272
    %v1334 = vpop.f32.mrf.mxu0
    %v1335 = vadd.f32 %v1312, %v1334
    %1336 = vmatmul.f32.gmra.mxu0 %v1274
    %v1337 = vpop.f32.mrf.mxu0
    %v1338 = vadd.f32 %v1312, %v1337
    %1339 = vmatmul.f32.gmra.mxu0 %v1276
    %v1340 = vpop.f32.mrf.mxu0
    %v1341 = vadd.f32 %v1312, %v1340
    %1342 = vdwg.mxu0
    %1343 = vmatpush.msra.mxu0 %v1309
    %1344 = vmatpush.msra.mxu0 %v1308
    %1345 = vmatpush.msra.mxu0 %v1307
    %1346 = vmatpush.msra.mxu0 %v1306
    %1347 = vmatpush.msra.mxu0 %v1305
    %1348 = vmatpush.msra.mxu0 %v1304
    %1349 = vmatpush.msra.mxu0 %v1303
    %1350 = vmatpush.msra.mxu0 %v1302
    %1351 = vmatpush.msra.mxu0 %v1301
    %1352 = vmatpush.msra.mxu0 %v1300
    %1353 = vmatpush.msra.mxu0 %v1299
    %1354 = vmatpush.msra.mxu0 %v1298
    %1355 = vmatpush.msra.mxu0 %v1297
    %1356 = vmatpush.msra.mxu0 %v1296
    %1357 = vmatpush.msra.mxu0 %v1295
    %1358 = vmatpush.msra.mxu0 %v1294
    %1359 = vmatmul.f32.gmra.mxu0 %v1271
    %v1360 = vpop.f32.mrf.mxu0
    %v1361 = vadd.f32 %v1332, %v1360
    %1362 = vmatmul.f32.gmra.mxu0 %v1273
    %v1363 = vpop.f32.mrf.mxu0
    %v1364 = vadd.f32 %v1335, %v1363
    %1365 = vmatmul.f32.gmra.mxu0 %v1275
    %v1366 = vpop.f32.mrf.mxu0
    %v1367 = vadd.f32 %v1338, %v1366
    %1368 = vmatmul.f32.gmra.mxu0 %v1277
    %v1369 = vpop.f32.mrf.mxu0
    %v1370 = vadd.f32 %v1341, %v1369
    %1371 = vdwg.mxu0
    %v1372 = vld [vmem:[#allocation7] sm:$0x1]
    %v1373 = vld [vmem:[#allocation9] sm:$0x1]
    %v1374 = vadd.f32 %v1361, %v1364
    %v1375 = vadd.f32 %v1374, %v1367
    %v1376 = vadd.f32 %v1375, %v1370
    %v1377 = vrot.slane %v1376, 4
    %v1378 = vadd.f32 %v1376, %v1377
    %v1379 = vrot.slane %v1378, 2
    %v1380 = vadd.f32 %v1378, %v1379
    %v1381 = vrot.slane %v1380, 1
    %v1382 = vadd.f32 %v1380, %v1381
    %v1383 = vmul.f32 %v1361, %v1361
    %v1384 = vmul.f32 %v1364, %v1364
    %v1385 = vmul.f32 %v1367, %v1367
    %v1386 = vmul.f32 %v1370, %v1370
    %v1387 = vadd.f32 %v1383, %v1384
    %v1388 = vadd.f32 %v1387, %v1385
    %v1389 = vadd.f32 %v1388, %v1386
    %v1390 = vrot.slane %v1389, 4
    %v1391 = vadd.f32 %v1389, %v1390
    %v1392 = vrot.slane %v1391, 2
    %v1393 = vadd.f32 %v1391, %v1392
    %v1394 = vrot.slane %v1393, 1
    %v1395 = vadd.f32 %v1393, %v1394
    %1396 = vmatpush.msra.mxu0 %v195
    %1397 = vmatpush.msra.mxu0 %v194
    %1398 = vmatpush.msra.mxu0 %v193
    %1399 = vmatpush.msra.mxu0 %v192
    %1400 = vmatpush.msra.mxu0 %v191
    %1401 = vmatpush.msra.mxu0 %v190
    %1402 = vmatpush.msra.mxu0 %v189
    %1403 = vmatpush.msra.mxu0 %v188
    %1404 = vmatpush.msra.mxu0 %v187
    %1405 = vmatpush.msra.mxu0 %v186
    %1406 = vmatpush.msra.mxu0 %v185
    %1407 = vmatpush.msra.mxu0 %v184
    %1408 = vmatpush.msra.mxu0 %v183
    %1409 = vmatpush.msra.mxu0 %v182
    %1410 = vmatpush.msra.mxu0 %v181
    %1411 = vmatpush.msra.mxu0 %v180
    %1412 = vmatmul.f32.gmra.mxu0 %v1382
    %v1413 = vpop.f32.mrf.mxu0
    %v1414 = vadd.f32 0.0, %v1413
    %1415 = vdwg.mxu0
    %1416 = vmatpush.msra.mxu0 %v195
    %1417 = vmatpush.msra.mxu0 %v194
    %1418 = vmatpush.msra.mxu0 %v193
    %1419 = vmatpush.msra.mxu0 %v192
    %1420 = vmatpush.msra.mxu0 %v191
    %1421 = vmatpush.msra.mxu0 %v190
    %1422 = vmatpush.msra.mxu0 %v189
    %1423 = vmatpush.msra.mxu0 %v188
    %1424 = vmatpush.msra.mxu0 %v187
    %1425 = vmatpush.msra.mxu0 %v186
    %1426 = vmatpush.msra.mxu0 %v185
    %1427 = vmatpush.msra.mxu0 %v184
    %1428 = vmatpush.msra.mxu0 %v183
    %1429 = vmatpush.msra.mxu0 %v182
    %1430 = vmatpush.msra.mxu0 %v181
    %1431 = vmatpush.msra.mxu0 %v180
    %1432 = vmatmul.f32.gmra.mxu0 %v1395
    %v1433 = vpop.f32.mrf.mxu0
    %v1434 = vadd.f32 0.0, %v1433
    %1435 = vdwg.mxu0
    %v1436 = vmul.f32 %v1414, %v1414
    %v1437 = vsub.f32 %v1434, %v1436
    %v1438 = vmax.f32 %v1437, 0.0
    %v1439 = vadd.f32 %v1438, 1e-05
    %v1440 = vrsqrt.pop %v1439
    %v1441 = vmul.f32 %v1440, %v1439
    %v1442 = vmul.f32 %v1441, %v1440
    %v1443 = vmul.f32 0.5, %v1442
    %v1444 = vsub.f32 1.5, %v1443
    %v1445 = vmul.f32 %v1440, %v1444
    %vm1446 = vweird.f32 %v1439
    %vm1447 = vweird.f32 %v1440
    %vm1448 = vmor %vm1446, %vm1447
    %v1449 = vsel %vm1448, %v1440, %v1445
    %v1450 = vperm.slane %v1414, 0
    %v1451 = vsub.f32 %v1361, %v1450
    %v1452 = vsub.f32 %v1364, %v1450
    %v1453 = vsub.f32 %v1367, %v1450
    %v1454 = vsub.f32 %v1370, %v1450
    %v1455 = vmul.f32 %v1449, %v1372
    %v1456 = vperm.slane %v1455, 0
    %v1457 = vmul.f32 %v1451, %v1456
    %v1458 = vmul.f32 %v1452, %v1456
    %v1459 = vmul.f32 %v1453, %v1456
    %v1460 = vmul.f32 %v1454, %v1456
    %v1462 = vperm.slane %v1373, 0
    %v1464 = vadd.f32 %v1457, %v1462
    %v1465 = vadd.f32 %v1458, %v1462
    %v1466 = vadd.f32 %v1459, %v1462
    %v1467 = vadd.f32 %v1460, %v1462
    %v1468 = vld [vmem:[#allocation12] sm:$0x1]
    %v1470 = vperm.slane %v1468, 0
    %v1472 = vadd.f32 %v1470, 0.0
    %v1473 = vld [vmem:[#allocation10] sm:$0xff]
    %v1474 = vld [vmem:[#allocation10 + $0x8] sm:$0xff]
    %v1475 = vld [vmem:[#allocation10 + $0x10] sm:$0xff]
    %v1476 = vld [vmem:[#allocation10 + $0x18] sm:$0xff]
    %v1477 = vld [vmem:[#allocation10 + $0x20] sm:$0xff]
    %v1478 = vld [vmem:[#allocation10 + $0x28] sm:$0xff]
    %v1479 = vld [vmem:[#allocation10 + $0x30] sm:$0xff]
    %v1480 = vld [vmem:[#allocation10 + $0x38] sm:$0xff]
    %v1481 = vld [vmem:[#allocation10 + $0x40] sm:$0xff]
    %v1482 = vld [vmem:[#allocation10 + $0x48] sm:$0xff]
    %v1483 = vld [vmem:[#allocation10 + $0x50] sm:$0xff]
    %v1484 = vld [vmem:[#allocation10 + $0x58] sm:$0xff]
    %v1485 = vld [vmem:[#allocation10 + $0x60] sm:$0xff]
    %v1486 = vld [vmem:[#allocation10 + $0x68] sm:$0xff]
    %v1487 = vld [vmem:[#allocation10 + $0x70] sm:$0xff]
    %v1488 = vld [vmem:[#allocation10 + $0x78] sm:$0xff]
    %1489 = vmatpush.msra.mxu0 %v1488
    %1490 = vmatpush.msra.mxu0 %v1487
    %1491 = vmatpush.msra.mxu0 %v1486
    %1492 = vmatpush.msra.mxu0 %v1485
    %1493 = vmatpush.msra.mxu0 %v1484
    %1494 = vmatpush.msra.mxu0 %v1483
    %1495 = vmatpush.msra.mxu0 %v1482
    %1496 = vmatpush.msra.mxu0 %v1481
    %1497 = vmatpush.msra.mxu0 %v1480
    %1498 = vmatpush.msra.mxu0 %v1479
    %1499 = vmatpush.msra.mxu0 %v1478
    %1500 = vmatpush.msra.mxu0 %v1477
    %1501 = vmatpush.msra.mxu0 %v1476
    %1502 = vmatpush.msra.mxu0 %v1475
    %1503 = vmatpush.msra.mxu0 %v1474
    %1504 = vmatpush.msra.mxu0 %v1473
    %1505 = vmatmul.f32.gmra.mxu0 %v1464
    %v1506 = vpop.f32.mrf.mxu0
    %v1507 = vadd.f32 0.0, %v1506
    %1508 = vmatmul.f32.gmra.mxu0 %v1465
    %v1509 = vpop.f32.mrf.mxu0
    %v1510 = vadd.f32 0.0, %v1509
    %1511 = vmatmul.f32.gmra.mxu0 %v1466
    %v1512 = vpop.f32.mrf.mxu0
    %v1513 = vadd.f32 0.0, %v1512
    %1514 = vmatmul.f32.gmra.mxu0 %v1467
    %v1515 = vpop.f32.mrf.mxu0
    %v1516 = vadd.f32 0.0, %v1515
    %1517 = vdwg.mxu0
    %1518 = vmatpush.msra.mxu0 0.0
    %1519 = vmatpush.msra.mxu0 0.0
    %1520 = vmatpush.msra.mxu0 0.0
    %1521 = vmatpush.msra.mxu0 0.0
    %1522 = vmatpush.msra.mxu0 0.0
    %1523 = vmatpush.msra.mxu0 0.0
    %1524 = vmatpush.msra.mxu0 0.0
    %1525 = vmatpush.msra.mxu0 0.0
    %1526 = vmatpush.msra.mxu0 0.0
    %1527 = vmatpush.msra.mxu0 0.0
    %1528 = vmatpush.msra.mxu0 0.0
    %1529 = vmatpush.msra.mxu0 0.0
    %1530 = vmatpush.msra.mxu0 %v1516
    %1531 = vmatpush.msra.mxu0 %v1513
    %1532 = vmatpush.msra.mxu0 %v1510
    %1533 = vmatpush.msra.mxu0 %v1507
    %1534 = vmatmul.f32.gmra.mxu0 %v348
    %v1535 = vpop.f32.mrf.mxu0
    %v1536 = vadd.f32 0.0, %v1535
    %1537 = vmatmul.f32.gmra.mxu0 %v351
    %v1538 = vpop.f32.mrf.mxu0
    %v1539 = vadd.f32 0.0, %v1538
    %1540 = vmatmul.f32.gmra.mxu0 %v354
    %v1541 = vpop.f32.mrf.mxu0
    %v1542 = vadd.f32 0.0, %v1541
    %1543 = vmatmul.f32.gmra.mxu0 %v357
    %v1544 = vpop.f32.mrf.mxu0
    %v1545 = vadd.f32 0.0, %v1544
    %1546 = vdwg.mxu0
    %v1547 = vadd.f32 %v1472, %v1536
    %v1548 = vadd.f32 %v1472, %v1539
    %v1549 = vadd.f32 %v1472, %v1542
    %v1550 = vadd.f32 %v1472, %v1545
    %s1551 = scalar_lea.vmem [#allocation10], 128
    %v1552 = vld [vmem:[%s1551] sm:$0xff]
    %v1553 = vld [vmem:[%s1551 + $0x8] sm:$0xff]
    %v1554 = vld [vmem:[%s1551 + $0x10] sm:$0xff]
    %v1555 = vld [vmem:[%s1551 + $0x18] sm:$0xff]
    %v1556 = vld [vmem:[%s1551 + $0x20] sm:$0xff]
    %v1557 = vld [vmem:[%s1551 + $0x28] sm:$0xff]
    %v1558 = vld [vmem:[%s1551 + $0x30] sm:$0xff]
    %v1559 = vld [vmem:[%s1551 + $0x38] sm:$0xff]
    %v1560 = vld [vmem:[%s1551 + $0x40] sm:$0xff]
    %v1561 = vld [vmem:[%s1551 + $0x48] sm:$0xff]
    %v1562 = vld [vmem:[%s1551 + $0x50] sm:$0xff]
    %v1563 = vld [vmem:[%s1551 + $0x58] sm:$0xff]
    %v1564 = vld [vmem:[%s1551 + $0x60] sm:$0xff]
    %v1565 = vld [vmem:[%s1551 + $0x68] sm:$0xff]
    %v1566 = vld [vmem:[%s1551 + $0x70] sm:$0xff]
    %v1567 = vld [vmem:[%s1551 + $0x78] sm:$0xff]
    %1568 = vmatpush.msra.mxu0 %v1567
    %1569 = vmatpush.msra.mxu0 %v1566
    %1570 = vmatpush.msra.mxu0 %v1565
    %1571 = vmatpush.msra.mxu0 %v1564
    %1572 = vmatpush.msra.mxu0 %v1563
    %1573 = vmatpush.msra.mxu0 %v1562
    %1574 = vmatpush.msra.mxu0 %v1561
    %1575 = vmatpush.msra.mxu0 %v1560
    %1576 = vmatpush.msra.mxu0 %v1559
    %1577 = vmatpush.msra.mxu0 %v1558
    %1578 = vmatpush.msra.mxu0 %v1557
    %1579 = vmatpush.msra.mxu0 %v1556
    %1580 = vmatpush.msra.mxu0 %v1555
    %1581 = vmatpush.msra.mxu0 %v1554
    %1582 = vmatpush.msra.mxu0 %v1553
    %1583 = vmatpush.msra.mxu0 %v1552
    %1584 = vmatmul.f32.gmra.mxu0 %v1464
    %v1585 = vpop.f32.mrf.mxu0
    %v1586 = vadd.f32 0.0, %v1585
    %1587 = vmatmul.f32.gmra.mxu0 %v1465
    %v1588 = vpop.f32.mrf.mxu0
    %v1589 = vadd.f32 0.0, %v1588
    %1590 = vmatmul.f32.gmra.mxu0 %v1466
    %v1591 = vpop.f32.mrf.mxu0
    %v1592 = vadd.f32 0.0, %v1591
    %1593 = vmatmul.f32.gmra.mxu0 %v1467
    %v1594 = vpop.f32.mrf.mxu0
    %v1595 = vadd.f32 0.0, %v1594
    %1596 = vdwg.mxu0
    %1597 = vmatpush.msra.mxu0 0.0
    %1598 = vmatpush.msra.mxu0 0.0
    %1599 = vmatpush.msra.mxu0 0.0
    %1600 = vmatpush.msra.mxu0 0.0
    %1601 = vmatpush.msra.mxu0 0.0
    %1602 = vmatpush.msra.mxu0 0.0
    %1603 = vmatpush.msra.mxu0 0.0
    %1604 = vmatpush.msra.mxu0 0.0
    %1605 = vmatpush.msra.mxu0 0.0
    %1606 = vmatpush.msra.mxu0 0.0
    %1607 = vmatpush.msra.mxu0 0.0
    %1608 = vmatpush.msra.mxu0 0.0
    %1609 = vmatpush.msra.mxu0 %v1595
    %1610 = vmatpush.msra.mxu0 %v1592
    %1611 = vmatpush.msra.mxu0 %v1589
    %1612 = vmatpush.msra.mxu0 %v1586
    %1613 = vmatmul.f32.gmra.mxu0 %v444
    %v1614 = vpop.f32.mrf.mxu0
    %v1615 = vadd.f32 0.0, %v1614
    %1616 = vmatmul.f32.gmra.mxu0 %v447
    %v1617 = vpop.f32.mrf.mxu0
    %v1618 = vadd.f32 0.0, %v1617
    %1619 = vmatmul.f32.gmra.mxu0 %v450
    %v1620 = vpop.f32.mrf.mxu0
    %v1621 = vadd.f32 0.0, %v1620
    %1622 = vmatmul.f32.gmra.mxu0 %v453
    %v1623 = vpop.f32.mrf.mxu0
    %v1624 = vadd.f32 0.0, %v1623
    %1625 = vdwg.mxu0
    %v1626 = vadd.f32 %v1547, %v1615
    %v1627 = vadd.f32 %v1548, %v1618
    %v1628 = vadd.f32 %v1549, %v1621
    %v1629 = vadd.f32 %v1550, %v1624
    %s1630 = scalar_lea.vmem [#allocation10], 256
    %v1631 = vld [vmem:[%s1630] sm:$0xff]
    %v1632 = vld [vmem:[%s1630 + $0x8] sm:$0xff]
    %v1633 = vld [vmem:[%s1630 + $0x10] sm:$0xff]
    %v1634 = vld [vmem:[%s1630 + $0x18] sm:$0xff]
    %v1635 = vld [vmem:[%s1630 + $0x20] sm:$0xff]
    %v1636 = vld [vmem:[%s1630 + $0x28] sm:$0xff]
    %v1637 = vld [vmem:[%s1630 + $0x30] sm:$0xff]
    %v1638 = vld [vmem:[%s1630 + $0x38] sm:$0xff]
    %v1639 = vld [vmem:[%s1630 + $0x40] sm:$0xff]
    %v1640 = vld [vmem:[%s1630 + $0x48] sm:$0xff]
    %v1641 = vld [vmem:[%s1630 + $0x50] sm:$0xff]
    %v1642 = vld [vmem:[%s1630 + $0x58] sm:$0xff]
    %v1643 = vld [vmem:[%s1630 + $0x60] sm:$0xff]
    %v1644 = vld [vmem:[%s1630 + $0x68] sm:$0xff]
    %v1645 = vld [vmem:[%s1630 + $0x70] sm:$0xff]
    %v1646 = vld [vmem:[%s1630 + $0x78] sm:$0xff]
    %1647 = vmatpush.msra.mxu0 %v1646
    %1648 = vmatpush.msra.mxu0 %v1645
    %1649 = vmatpush.msra.mxu0 %v1644
    %1650 = vmatpush.msra.mxu0 %v1643
    %1651 = vmatpush.msra.mxu0 %v1642
    %1652 = vmatpush.msra.mxu0 %v1641
    %1653 = vmatpush.msra.mxu0 %v1640
    %1654 = vmatpush.msra.mxu0 %v1639
    %1655 = vmatpush.msra.mxu0 %v1638
    %1656 = vmatpush.msra.mxu0 %v1637
    %1657 = vmatpush.msra.mxu0 %v1636
    %1658 = vmatpush.msra.mxu0 %v1635
    %1659 = vmatpush.msra.mxu0 %v1634
    %1660 = vmatpush.msra.mxu0 %v1633
    %1661 = vmatpush.msra.mxu0 %v1632
    %1662 = vmatpush.msra.mxu0 %v1631
    %1663 = vmatmul.f32.gmra.mxu0 %v1464
    %v1664 = vpop.f32.mrf.mxu0
    %v1665 = vadd.f32 0.0, %v1664
    %1666 = vmatmul.f32.gmra.mxu0 %v1465
    %v1667 = vpop.f32.mrf.mxu0
    %v1668 = vadd.f32 0.0, %v1667
    %1669 = vmatmul.f32.gmra.mxu0 %v1466
    %v1670 = vpop.f32.mrf.mxu0
    %v1671 = vadd.f32 0.0, %v1670
    %1672 = vmatmul.f32.gmra.mxu0 %v1467
    %v1673 = vpop.f32.mrf.mxu0
    %v1674 = vadd.f32 0.0, %v1673
    %1675 = vdwg.mxu0
    %1676 = vmatpush.msra.mxu0 0.0
    %1677 = vmatpush.msra.mxu0 0.0
    %1678 = vmatpush.msra.mxu0 0.0
    %1679 = vmatpush.msra.mxu0 0.0
    %1680 = vmatpush.msra.mxu0 0.0
    %1681 = vmatpush.msra.mxu0 0.0
    %1682 = vmatpush.msra.mxu0 0.0
    %1683 = vmatpush.msra.mxu0 0.0
    %1684 = vmatpush.msra.mxu0 0.0
    %1685 = vmatpush.msra.mxu0 0.0
    %1686 = vmatpush.msra.mxu0 0.0
    %1687 = vmatpush.msra.mxu0 0.0
    %1688 = vmatpush.msra.mxu0 %v1674
    %1689 = vmatpush.msra.mxu0 %v1671
    %1690 = vmatpush.msra.mxu0 %v1668
    %1691 = vmatpush.msra.mxu0 %v1665
    %1692 = vmatmul.f32.gmra.mxu0 %v540
    %v1693 = vpop.f32.mrf.mxu0
    %v1694 = vadd.f32 0.0, %v1693
    %1695 = vmatmul.f32.gmra.mxu0 %v543
    %v1696 = vpop.f32.mrf.mxu0
    %v1697 = vadd.f32 0.0, %v1696
    %1698 = vmatmul.f32.gmra.mxu0 %v546
    %v1699 = vpop.f32.mrf.mxu0
    %v1700 = vadd.f32 0.0, %v1699
    %1701 = vmatmul.f32.gmra.mxu0 %v549
    %v1702 = vpop.f32.mrf.mxu0
    %v1703 = vadd.f32 0.0, %v1702
    %1704 = vdwg.mxu0
    %v1705 = vadd.f32 %v1626, %v1694
    %v1706 = vadd.f32 %v1627, %v1697
    %v1707 = vadd.f32 %v1628, %v1700
    %v1708 = vadd.f32 %v1629, %v1703
    %s1709 = scalar_lea.vmem [#allocation10], 384
    %v1710 = vld [vmem:[%s1709] sm:$0xff]
    %v1711 = vld [vmem:[%s1709 + $0x8] sm:$0xff]
    %v1712 = vld [vmem:[%s1709 + $0x10] sm:$0xff]
    %v1713 = vld [vmem:[%s1709 + $0x18] sm:$0xff]
    %v1714 = vld [vmem:[%s1709 + $0x20] sm:$0xff]
    %v1715 = vld [vmem:[%s1709 + $0x28] sm:$0xff]
    %v1716 = vld [vmem:[%s1709 + $0x30] sm:$0xff]
    %v1717 = vld [vmem:[%s1709 + $0x38] sm:$0xff]
    %v1718 = vld [vmem:[%s1709 + $0x40] sm:$0xff]
    %v1719 = vld [vmem:[%s1709 + $0x48] sm:$0xff]
    %v1720 = vld [vmem:[%s1709 + $0x50] sm:$0xff]
    %v1721 = vld [vmem:[%s1709 + $0x58] sm:$0xff]
    %v1722 = vld [vmem:[%s1709 + $0x60] sm:$0xff]
    %v1723 = vld [vmem:[%s1709 + $0x68] sm:$0xff]
    %v1724 = vld [vmem:[%s1709 + $0x70] sm:$0xff]
    %v1725 = vld [vmem:[%s1709 + $0x78] sm:$0xff]
    %1726 = vmatpush.msra.mxu0 %v1725
    %1727 = vmatpush.msra.mxu0 %v1724
    %1728 = vmatpush.msra.mxu0 %v1723
    %1729 = vmatpush.msra.mxu0 %v1722
    %1730 = vmatpush.msra.mxu0 %v1721
    %1731 = vmatpush.msra.mxu0 %v1720
    %1732 = vmatpush.msra.mxu0 %v1719
    %1733 = vmatpush.msra.mxu0 %v1718
    %1734 = vmatpush.msra.mxu0 %v1717
    %1735 = vmatpush.msra.mxu0 %v1716
    %1736 = vmatpush.msra.mxu0 %v1715
    %1737 = vmatpush.msra.mxu0 %v1714
    %1738 = vmatpush.msra.mxu0 %v1713
    %1739 = vmatpush.msra.mxu0 %v1712
    %1740 = vmatpush.msra.mxu0 %v1711
    %1741 = vmatpush.msra.mxu0 %v1710
    %1742 = vmatmul.f32.gmra.mxu0 %v1464
    %v1743 = vpop.f32.mrf.mxu0
    %v1744 = vadd.f32 0.0, %v1743
    %1745 = vmatmul.f32.gmra.mxu0 %v1465
    %v1746 = vpop.f32.mrf.mxu0
    %v1747 = vadd.f32 0.0, %v1746
    %1748 = vmatmul.f32.gmra.mxu0 %v1466
    %v1749 = vpop.f32.mrf.mxu0
    %v1750 = vadd.f32 0.0, %v1749
    %1751 = vmatmul.f32.gmra.mxu0 %v1467
    %v1752 = vpop.f32.mrf.mxu0
    %v1753 = vadd.f32 0.0, %v1752
    %1754 = vdwg.mxu0
    %1755 = vmatpush.msra.mxu0 0.0
    %1756 = vmatpush.msra.mxu0 0.0
    %1757 = vmatpush.msra.mxu0 0.0
    %1758 = vmatpush.msra.mxu0 0.0
    %1759 = vmatpush.msra.mxu0 0.0
    %1760 = vmatpush.msra.mxu0 0.0
    %1761 = vmatpush.msra.mxu0 0.0
    %1762 = vmatpush.msra.mxu0 0.0
    %1763 = vmatpush.msra.mxu0 0.0
    %1764 = vmatpush.msra.mxu0 0.0
    %1765 = vmatpush.msra.mxu0 0.0
    %1766 = vmatpush.msra.mxu0 0.0
    %1767 = vmatpush.msra.mxu0 %v1753
    %1768 = vmatpush.msra.mxu0 %v1750
    %1769 = vmatpush.msra.mxu0 %v1747
    %1770 = vmatpush.msra.mxu0 %v1744
    %1771 = vmatmul.f32.gmra.mxu0 %v636
    %v1772 = vpop.f32.mrf.mxu0
    %v1773 = vadd.f32 0.0, %v1772
    %1774 = vmatmul.f32.gmra.mxu0 %v639
    %v1775 = vpop.f32.mrf.mxu0
    %v1776 = vadd.f32 0.0, %v1775
    %1777 = vmatmul.f32.gmra.mxu0 %v642
    %v1778 = vpop.f32.mrf.mxu0
    %v1779 = vadd.f32 0.0, %v1778
    %1780 = vmatmul.f32.gmra.mxu0 %v645
    %v1781 = vpop.f32.mrf.mxu0
    %v1782 = vadd.f32 0.0, %v1781
    %1783 = vdwg.mxu0
    %v1784 = vadd.f32 %v1705, %v1773
    %v1785 = vadd.f32 %v1706, %v1776
    %v1786 = vadd.f32 %v1707, %v1779
    %v1787 = vadd.f32 %v1708, %v1782
    %s1788 = scalar_lea.vmem [#allocation10], 512
    %v1789 = vld [vmem:[%s1788] sm:$0xff]
    %v1790 = vld [vmem:[%s1788 + $0x8] sm:$0xff]
    %v1791 = vld [vmem:[%s1788 + $0x10] sm:$0xff]
    %v1792 = vld [vmem:[%s1788 + $0x18] sm:$0xff]
    %v1793 = vld [vmem:[%s1788 + $0x20] sm:$0xff]
    %v1794 = vld [vmem:[%s1788 + $0x28] sm:$0xff]
    %v1795 = vld [vmem:[%s1788 + $0x30] sm:$0xff]
    %v1796 = vld [vmem:[%s1788 + $0x38] sm:$0xff]
    %v1797 = vld [vmem:[%s1788 + $0x40] sm:$0xff]
    %v1798 = vld [vmem:[%s1788 + $0x48] sm:$0xff]
    %v1799 = vld [vmem:[%s1788 + $0x50] sm:$0xff]
    %v1800 = vld [vmem:[%s1788 + $0x58] sm:$0xff]
    %v1801 = vld [vmem:[%s1788 + $0x60] sm:$0xff]
    %v1802 = vld [vmem:[%s1788 + $0x68] sm:$0xff]
    %v1803 = vld [vmem:[%s1788 + $0x70] sm:$0xff]
    %v1804 = vld [vmem:[%s1788 + $0x78] sm:$0xff]
    %1805 = vmatpush.msra.mxu0 %v1804
    %1806 = vmatpush.msra.mxu0 %v1803
    %1807 = vmatpush.msra.mxu0 %v1802
    %1808 = vmatpush.msra.mxu0 %v1801
    %1809 = vmatpush.msra.mxu0 %v1800
    %1810 = vmatpush.msra.mxu0 %v1799
    %1811 = vmatpush.msra.mxu0 %v1798
    %1812 = vmatpush.msra.mxu0 %v1797
    %1813 = vmatpush.msra.mxu0 %v1796
    %1814 = vmatpush.msra.mxu0 %v1795
    %1815 = vmatpush.msra.mxu0 %v1794
    %1816 = vmatpush.msra.mxu0 %v1793
    %1817 = vmatpush.msra.mxu0 %v1792
    %1818 = vmatpush.msra.mxu0 %v1791
    %1819 = vmatpush.msra.mxu0 %v1790
    %1820 = vmatpush.msra.mxu0 %v1789
    %1821 = vmatmul.f32.gmra.mxu0 %v1464
    %v1822 = vpop.f32.mrf.mxu0
    %v1823 = vadd.f32 0.0, %v1822
    %1824 = vmatmul.f32.gmra.mxu0 %v1465
    %v1825 = vpop.f32.mrf.mxu0
    %v1826 = vadd.f32 0.0, %v1825
    %1827 = vmatmul.f32.gmra.mxu0 %v1466
    %v1828 = vpop.f32.mrf.mxu0
    %v1829 = vadd.f32 0.0, %v1828
    %1830 = vmatmul.f32.gmra.mxu0 %v1467
    %v1831 = vpop.f32.mrf.mxu0
    %v1832 = vadd.f32 0.0, %v1831
    %1833 = vdwg.mxu0
    %1834 = vmatpush.msra.mxu0 0.0
    %1835 = vmatpush.msra.mxu0 0.0
    %1836 = vmatpush.msra.mxu0 0.0
    %1837 = vmatpush.msra.mxu0 0.0
    %1838 = vmatpush.msra.mxu0 0.0
    %1839 = vmatpush.msra.mxu0 0.0
    %1840 = vmatpush.msra.mxu0 0.0
    %1841 = vmatpush.msra.mxu0 0.0
    %1842 = vmatpush.msra.mxu0 0.0
    %1843 = vmatpush.msra.mxu0 0.0
    %1844 = vmatpush.msra.mxu0 0.0
    %1845 = vmatpush.msra.mxu0 0.0
    %1846 = vmatpush.msra.mxu0 %v1832
    %1847 = vmatpush.msra.mxu0 %v1829
    %1848 = vmatpush.msra.mxu0 %v1826
    %1849 = vmatpush.msra.mxu0 %v1823
    %1850 = vmatmul.f32.gmra.mxu0 %v732
    %v1851 = vpop.f32.mrf.mxu0
    %v1852 = vadd.f32 0.0, %v1851
    %1853 = vmatmul.f32.gmra.mxu0 %v735
    %v1854 = vpop.f32.mrf.mxu0
    %v1855 = vadd.f32 0.0, %v1854
    %1856 = vmatmul.f32.gmra.mxu0 %v738
    %v1857 = vpop.f32.mrf.mxu0
    %v1858 = vadd.f32 0.0, %v1857
    %1859 = vmatmul.f32.gmra.mxu0 %v741
    %v1860 = vpop.f32.mrf.mxu0
    %v1861 = vadd.f32 0.0, %v1860
    %1862 = vdwg.mxu0
    %v1863 = vadd.f32 %v1784, %v1852
    %v1864 = vadd.f32 %v1785, %v1855
    %v1865 = vadd.f32 %v1786, %v1858
    %v1866 = vadd.f32 %v1787, %v1861
    %s1867 = scalar_lea.vmem [#allocation10], 640
    %v1868 = vld [vmem:[%s1867] sm:$0xff]
    %v1869 = vld [vmem:[%s1867 + $0x8] sm:$0xff]
    %v1870 = vld [vmem:[%s1867 + $0x10] sm:$0xff]
    %v1871 = vld [vmem:[%s1867 + $0x18] sm:$0xff]
    %v1872 = vld [vmem:[%s1867 + $0x20] sm:$0xff]
    %v1873 = vld [vmem:[%s1867 + $0x28] sm:$0xff]
    %v1874 = vld [vmem:[%s1867 + $0x30] sm:$0xff]
    %v1875 = vld [vmem:[%s1867 + $0x38] sm:$0xff]
    %v1876 = vld [vmem:[%s1867 + $0x40] sm:$0xff]
    %v1877 = vld [vmem:[%s1867 + $0x48] sm:$0xff]
    %v1878 = vld [vmem:[%s1867 + $0x50] sm:$0xff]
    %v1879 = vld [vmem:[%s1867 + $0x58] sm:$0xff]
    %v1880 = vld [vmem:[%s1867 + $0x60] sm:$0xff]
    %v1881 = vld [vmem:[%s1867 + $0x68] sm:$0xff]
    %v1882 = vld [vmem:[%s1867 + $0x70] sm:$0xff]
    %v1883 = vld [vmem:[%s1867 + $0x78] sm:$0xff]
    %1884 = vmatpush.msra.mxu0 %v1883
    %1885 = vmatpush.msra.mxu0 %v1882
    %1886 = vmatpush.msra.mxu0 %v1881
    %1887 = vmatpush.msra.mxu0 %v1880
    %1888 = vmatpush.msra.mxu0 %v1879
    %1889 = vmatpush.msra.mxu0 %v1878
    %1890 = vmatpush.msra.mxu0 %v1877
    %1891 = vmatpush.msra.mxu0 %v1876
    %1892 = vmatpush.msra.mxu0 %v1875
    %1893 = vmatpush.msra.mxu0 %v1874
    %1894 = vmatpush.msra.mxu0 %v1873
    %1895 = vmatpush.msra.mxu0 %v1872
    %1896 = vmatpush.msra.mxu0 %v1871
    %1897 = vmatpush.msra.mxu0 %v1870
    %1898 = vmatpush.msra.mxu0 %v1869
    %1899 = vmatpush.msra.mxu0 %v1868
    %1900 = vmatmul.f32.gmra.mxu0 %v1464
    %v1901 = vpop.f32.mrf.mxu0
    %v1902 = vadd.f32 0.0, %v1901
    %1903 = vmatmul.f32.gmra.mxu0 %v1465
    %v1904 = vpop.f32.mrf.mxu0
    %v1905 = vadd.f32 0.0, %v1904
    %1906 = vmatmul.f32.gmra.mxu0 %v1466
    %v1907 = vpop.f32.mrf.mxu0
    %v1908 = vadd.f32 0.0, %v1907
    %1909 = vmatmul.f32.gmra.mxu0 %v1467
    %v1910 = vpop.f32.mrf.mxu0
    %v1911 = vadd.f32 0.0, %v1910
    %1912 = vdwg.mxu0
    %1913 = vmatpush.msra.mxu0 0.0
    %1914 = vmatpush.msra.mxu0 0.0
    %1915 = vmatpush.msra.mxu0 0.0
    %1916 = vmatpush.msra.mxu0 0.0
    %1917 = vmatpush.msra.mxu0 0.0
    %1918 = vmatpush.msra.mxu0 0.0
    %1919 = vmatpush.msra.mxu0 0.0
    %1920 = vmatpush.msra.mxu0 0.0
    %1921 = vmatpush.msra.mxu0 0.0
    %1922 = vmatpush.msra.mxu0 0.0
    %1923 = vmatpush.msra.mxu0 0.0
    %1924 = vmatpush.msra.mxu0 0.0
    %1925 = vmatpush.msra.mxu0 %v1911
    %1926 = vmatpush.msra.mxu0 %v1908
    %1927 = vmatpush.msra.mxu0 %v1905
    %1928 = vmatpush.msra.mxu0 %v1902
    %1929 = vmatmul.f32.gmra.mxu0 %v828
    %v1930 = vpop.f32.mrf.mxu0
    %v1931 = vadd.f32 0.0, %v1930
    %1932 = vmatmul.f32.gmra.mxu0 %v831
    %v1933 = vpop.f32.mrf.mxu0
    %v1934 = vadd.f32 0.0, %v1933
    %1935 = vmatmul.f32.gmra.mxu0 %v834
    %v1936 = vpop.f32.mrf.mxu0
    %v1937 = vadd.f32 0.0, %v1936
    %1938 = vmatmul.f32.gmra.mxu0 %v837
    %v1939 = vpop.f32.mrf.mxu0
    %v1940 = vadd.f32 0.0, %v1939
    %1941 = vdwg.mxu0
    %v1942 = vadd.f32 %v1863, %v1931
    %v1943 = vadd.f32 %v1864, %v1934
    %v1944 = vadd.f32 %v1865, %v1937
    %v1945 = vadd.f32 %v1866, %v1940
    %s1946 = scalar_lea.vmem [#allocation10], 768
    %v1947 = vld [vmem:[%s1946] sm:$0xff]
    %v1948 = vld [vmem:[%s1946 + $0x8] sm:$0xff]
    %v1949 = vld [vmem:[%s1946 + $0x10] sm:$0xff]
    %v1950 = vld [vmem:[%s1946 + $0x18] sm:$0xff]
    %v1951 = vld [vmem:[%s1946 + $0x20] sm:$0xff]
    %v1952 = vld [vmem:[%s1946 + $0x28] sm:$0xff]
    %v1953 = vld [vmem:[%s1946 + $0x30] sm:$0xff]
    %v1954 = vld [vmem:[%s1946 + $0x38] sm:$0xff]
    %v1955 = vld [vmem:[%s1946 + $0x40] sm:$0xff]
    %v1956 = vld [vmem:[%s1946 + $0x48] sm:$0xff]
    %v1957 = vld [vmem:[%s1946 + $0x50] sm:$0xff]
    %v1958 = vld [vmem:[%s1946 + $0x58] sm:$0xff]
    %v1959 = vld [vmem:[%s1946 + $0x60] sm:$0xff]
    %v1960 = vld [vmem:[%s1946 + $0x68] sm:$0xff]
    %v1961 = vld [vmem:[%s1946 + $0x70] sm:$0xff]
    %v1962 = vld [vmem:[%s1946 + $0x78] sm:$0xff]
    %1963 = vmatpush.msra.mxu0 %v1962
    %1964 = vmatpush.msra.mxu0 %v1961
    %1965 = vmatpush.msra.mxu0 %v1960
    %1966 = vmatpush.msra.mxu0 %v1959
    %1967 = vmatpush.msra.mxu0 %v1958
    %1968 = vmatpush.msra.mxu0 %v1957
    %1969 = vmatpush.msra.mxu0 %v1956
    %1970 = vmatpush.msra.mxu0 %v1955
    %1971 = vmatpush.msra.mxu0 %v1954
    %1972 = vmatpush.msra.mxu0 %v1953
    %1973 = vmatpush.msra.mxu0 %v1952
    %1974 = vmatpush.msra.mxu0 %v1951
    %1975 = vmatpush.msra.mxu0 %v1950
    %1976 = vmatpush.msra.mxu0 %v1949
    %1977 = vmatpush.msra.mxu0 %v1948
    %1978 = vmatpush.msra.mxu0 %v1947
    %1979 = vmatmul.f32.gmra.mxu0 %v1464
    %v1980 = vpop.f32.mrf.mxu0
    %v1981 = vadd.f32 0.0, %v1980
    %1982 = vmatmul.f32.gmra.mxu0 %v1465
    %v1983 = vpop.f32.mrf.mxu0
    %v1984 = vadd.f32 0.0, %v1983
    %1985 = vmatmul.f32.gmra.mxu0 %v1466
    %v1986 = vpop.f32.mrf.mxu0
    %v1987 = vadd.f32 0.0, %v1986
    %1988 = vmatmul.f32.gmra.mxu0 %v1467
    %v1989 = vpop.f32.mrf.mxu0
    %v1990 = vadd.f32 0.0, %v1989
    %1991 = vdwg.mxu0
    %1992 = vmatpush.msra.mxu0 0.0
    %1993 = vmatpush.msra.mxu0 0.0
    %1994 = vmatpush.msra.mxu0 0.0
    %1995 = vmatpush.msra.mxu0 0.0
    %1996 = vmatpush.msra.mxu0 0.0
    %1997 = vmatpush.msra.mxu0 0.0
    %1998 = vmatpush.msra.mxu0 0.0
    %1999 = vmatpush.msra.mxu0 0.0
    %2000 = vmatpush.msra.mxu0 0.0
    %2001 = vmatpush.msra.mxu0 0.0
    %2002 = vmatpush.msra.mxu0 0.0
    %2003 = vmatpush.msra.mxu0 0.0
    %2004 = vmatpush.msra.mxu0 %v1990
    %2005 = vmatpush.msra.mxu0 %v1987
    %2006 = vmatpush.msra.mxu0 %v1984
    %2007 = vmatpush.msra.mxu0 %v1981
    %2008 = vmatmul.f32.gmra.mxu0 %v924
    %v2009 = vpop.f32.mrf.mxu0
    %v2010 = vadd.f32 0.0, %v2009
    %2011 = vmatmul.f32.gmra.mxu0 %v927
    %v2012 = vpop.f32.mrf.mxu0
    %v2013 = vadd.f32 0.0, %v2012
    %2014 = vmatmul.f32.gmra.mxu0 %v930
    %v2015 = vpop.f32.mrf.mxu0
    %v2016 = vadd.f32 0.0, %v2015
    %2017 = vmatmul.f32.gmra.mxu0 %v933
    %v2018 = vpop.f32.mrf.mxu0
    %v2019 = vadd.f32 0.0, %v2018
    %2020 = vdwg.mxu0
    %v2021 = vadd.f32 %v1942, %v2010
    %v2022 = vadd.f32 %v1943, %v2013
    %v2023 = vadd.f32 %v1944, %v2016
    %v2024 = vadd.f32 %v1945, %v2019
    %v2025 = vld [vmem:[#allocation13] sm:$0x1]
    %v2026 = vadd.f32 %v288, %v2021
    %v2027 = vadd.f32 %v289, %v2022
    %v2028 = vadd.f32 %v290, %v2023
    %v2029 = vadd.f32 %v291, %v2024
    %v2031 = vperm.slane %v2025, 0
    %v2033 = vmul.f32 %v2031, %v2026
    %v2034 = vmul.f32 %v2031, %v2027
    %v2035 = vmul.f32 %v2031, %v2028
    %v2036 = vmul.f32 %v2031, %v2029
    %v2037 = vadd.f32 %v176, %v2033
    %v2038 = vadd.f32 %v177, %v2034
    %v2039 = vadd.f32 %v178, %v2035
    %v2040 = vadd.f32 %v179, %v2036
    %2041 = vst [vmem:[%s18] sm:$0xff] %v2037
    %2042 = vst [vmem:[%s18 + $0x8] sm:$0xff] %v2038
    %2043 = vst [vmem:[%s18 + $0x10] sm:$0xff] %v2039
    %2044 = vst [vmem:[%s18 + $0x18] sm:$0xff] %v2040
    // Predicated region
    $region106: #{metanext_up_stage0_forward.4} parent=1 // pred_check
      _
    $region107: #{metanext_up_stage0_forward.4} parent=1 // pred_check_branch
      %2046 = sbr.rel (0) target = $region109
    $region108: #{metanext_up_stage0_forward.4} parent=1 // pred_region
      _
    $region109: #{metanext_up_stage0_forward.4} parent=1 // pred_fallthru
      _
    // Predicated region
    $region110: #{metanext_up_stage0_forward.4} parent=1 // pred_check
      _
    $region111: #{metanext_up_stage0_forward.4} parent=1 // pred_check_branch
      %2048 = sbr.rel (0) target = $region113
    $region112: #{metanext_up_stage0_forward.4} parent=1 // pred_region
      _
    $region113: #{metanext_up_stage0_forward.4} parent=1 // pred_fallthru
      _
    %2049 = vsyncpa [#allocation3], 1
    %2050 = vsyncpa [#allocation5], 1
    %2051 = vsyncpa [#allocation8], 1
    %2052 = vsyncpa [#allocation11], 1
    %2053 = vsyncpa [#allocation14], 1

</llo_original>
